<compile_context>
chip_gen: v6e
topology: v6e:2x2x1
jax: 0.10.0
libtpu: 0.0.40
codegen_flags: <defaults>
</compile_context>

<pallas_src>
import functools

import jax
import jax.numpy as jnp
from jax import lax
from jax.experimental import pallas as pl
from jax.experimental.pallas import tpu as pltpu

LN_EPS = 1e-5  # torch.nn.LayerNorm default


def _layernorm(x, w, b):
    mu = jnp.mean(x, axis=-1, keepdims=True)
    var = jnp.mean((x - mu) ** 2, axis=-1, keepdims=True)
    return (x - mu) * lax.rsqrt(var + LN_EPS) * w + b


def encoder_kernel(x_ref, len_ref,
                   ln1w_ref, ln1b_ref,
                   wqkv_ref, bqkv_ref,
                   wo_ref, bo_ref,
                   ln2w_ref, ln2b_ref,
                   w1_ref, b1_ref, w2_ref, b2_ref,
                   o_ref, *, n_head):
    Bt, S, D = x_ref.shape
    R = Bt * S
    dh = D // n_head
    BH = Bt * n_head

    x = x_ref[...].reshape(R, D)                                   # (R, D) f32

    # --- key-padding bias: one vectorized compare against blocked lengths ------
    key_ids = lax.broadcasted_iota(jnp.int32, (1, 1, S), 2)
    key_bias = jnp.where(key_ids < len_ref[...], 0.0, -1e30).astype(jnp.float32)  # (Bt,1,S)
    # hoisted head-broadcast (head-major to match the stacked batch below)
    bias_bh = jnp.concatenate([key_bias] * n_head, axis=0)                         # (BH,1,S)

    # --- Pre-LN 1 + fused QKV projection (bf16 operands, f32 accumulation) -----
    # attention scale is already folded into the q columns of wqkv/bqkv
    xn = _layernorm(x, ln1w_ref[...], ln1b_ref[...])
    qkv = jnp.dot(xn.astype(jnp.bfloat16), wqkv_ref[...],
                  preferred_element_type=jnp.float32) + bqkv_ref[...]              # (R, 3D)

    def stack_heads(t2):
        # (R, D) -> (BH, S, dh): heads stacked along the (cheap) leading axis,
        # head-major, so all heads run in a single batched MXU einsum below.
        t3 = t2.reshape(Bt, S, D)
        return jnp.concatenate(
            [t3[:, :, h * dh:(h + 1) * dh] for h in range(n_head)], axis=0
        ).astype(jnp.bfloat16)

    qs = stack_heads(qkv[:, :D])
    ks = stack_heads(qkv[:, D:2 * D])
    vs = stack_heads(qkv[:, 2 * D:])

    # --- multi-head self-attention: one batched einsum pair over Bt*n_head -----
    # TODO(synk): for S >~ 1k, flash-tile the key axis (online softmax) instead
    # of materializing the (BH, S, S) score/exp temps (mandatory on v7x 64 MiB).
    s = jnp.einsum('bqd,bkd->bqk', qs, ks,
                   preferred_element_type=jnp.float32)                             # (BH,S,S)
    s = s + bias_bh
    m = jnp.max(s, axis=-1, keepdims=True)
    # TODO(synk): on v6e/v7x at long S compute the exponent in bf16 (bf16 EUP);
    # keep f32 on v5e (no bf16 EUP).
    e = jnp.exp(s - m)
    inv = pl.reciprocal(jnp.sum(e, axis=-1, keepdims=True), approx=True)
    p = (e * inv).astype(jnp.bfloat16)
    ctx = jnp.einsum('bqk,bkd->bqd', p, vs,
                     preferred_element_type=jnp.float32)                           # (BH,S,dh)

    # single lane-dim concat back to a dense (R, D) slab for the output proj
    ctx = jnp.concatenate(
        [ctx[h * Bt:(h + 1) * Bt] for h in range(n_head)], axis=-1
    ).reshape(R, D)

    attn = jnp.dot(ctx.astype(jnp.bfloat16), wo_ref[...],
                   preferred_element_type=jnp.float32) + bo_ref[...]
    # attn_dropout / dropout1 / dropout2 are identity (inference mode).
    x = x + attn

    # --- Pre-LN 2 + feed-forward ------------------------------------------------
    xn2 = _layernorm(x, ln2w_ref[...], ln2b_ref[...])
    h1 = jnp.maximum(
        jnp.dot(xn2.astype(jnp.bfloat16), w1_ref[...],
                preferred_element_type=jnp.float32) + b1_ref[...], 0.0)
    # TODO(synk): for D>=1024 / F>=4096-class models on v7x, tile the FFN over F
    # (HBM-resident w1/w2 + inner pltpu.emit_pipeline) to bound weight VMEM.
    ff = jnp.dot(h1.astype(jnp.bfloat16), w2_ref[...],
                 preferred_element_type=jnp.float32) + b2_ref[...]

    o_ref[...] = (x + ff).reshape(Bt, S, D).astype(o_ref.dtype)


def _chip_vmem_bytes():
    try:
        return int(pltpu.get_tpu_info().vmem_capacity_bytes)
    except Exception:
        return 64 << 20          # conservative (v7x-sized) if query unavailable


def _pick_block_b(B, S, D, F_dim, n_head, chip_vmem):
    """Largest divisor of B that (a) fits the generation-dependent activation
    budget, (b) fills the MXU M dim, and (c) leaves >=2 grid steps so the
    'parallel' batch axis can shard across both v7x TensorCores."""
    if chip_vmem >= (100 << 20):          # v5e / v6e: 128 MiB VMEM
        act_budget, row_target = 14 << 20, 512
    else:                                 # v7x: 64 MiB VMEM
        act_budget, row_target = 6 << 20, 256
    bt_cap = max(1, B // 2) if B >= 2 else B
    best = 1
    for bt in range(1, bt_cap + 1):
        if B % bt:
            continue
        act = bt * S * (6 * D + F_dim) * 4 + 3 * bt * n_head * S * S * 4
        if act > act_budget:
            break
        best = bt
        if bt * S >= row_target:
            break
    return best


def _vmem_limit_bytes(Bt, S, D, F_dim, n_head, chip_vmem, single_buffer_weights):
    bf16, f32 = 2, 4
    weights = (4 * D * D + 2 * D * F_dim) * bf16           # wqkv + wo + w1 + w2
    biases = (3 * D + D + F_dim + 5 * D) * f32             # bqkv, bo, b1, b2, ln1/2
    wb = (1 if single_buffer_weights else 2) * (weights + biases)
    io = 2 * (2 * Bt * S * D * f32)                        # x + out blocks, double-buffered
    temps = Bt * S * (6 * D + F_dim) * f32 + 3 * Bt * n_head * S * S * f32
    need = int((wb + io + temps) * 1.5) + (4 << 20)        # headroom for spills/relayouts
    cap = chip_vmem - (8 << 20)                            # stay below physical VMEM
    return max(min(need, cap), min(32 << 20, cap))


def preln_transformer_encoder(x, inp_len, params, *, n_head):
    B, S, D = x.shape
    F_dim = params["w1"].shape[1]
    dh = D // n_head
    scale = jnp.float32(1.0 / (dh ** 0.5))

    # Fuse q/k/v into one (D, 3D) projection; fold the attention scale into q.
    wqkv = jnp.concatenate(
        [params["wq"] * scale, params["wk"], params["wv"]], axis=1
    ).astype(jnp.bfloat16)
    bqkv = jnp.concatenate(
        [params["bq"] * scale, params["bk"], params["bv"]], axis=1
    ).astype(jnp.float32)
    wo = params["wo"].astype(jnp.bfloat16)
    w1 = params["w1"].astype(jnp.bfloat16)
    w2 = params["w2"].astype(jnp.bfloat16)
    # (B,1,1) int32 lengths: blocked along batch, single in-kernel compare.
    lens3 = inp_len.astype(jnp.int32).reshape(B, 1, 1)
    # NOTE: x / output stay f32 here; carrying them in bf16 is an option when
    # the surrounding model already runs bf16 activations.

    chip_vmem = _chip_vmem_bytes()
    Bt = _pick_block_b(B, S, D, F_dim, n_head, chip_vmem)
    grid = (B // Bt,)

    kernel = functools.partial(encoder_kernel, n_head=n_head)

    def call(single_buffer_weights):
        blk = lambda b: (b, 0, 0)

        def wspec(shape):
            rep = lambda b: (0,) * len(shape)
            if single_buffer_weights:
                # constant block index across the grid -> one resident copy
                return pl.BlockSpec(shape, rep, pipeline_mode=pl.Buffered(1))
            return pl.BlockSpec(shape, rep)

        in_specs = [
            pl.BlockSpec((Bt, S, D), blk),                       # x
            pl.BlockSpec((Bt, 1, 1), blk),                       # per-example lengths
            wspec((1, D)), wspec((1, D)),                        # ln1 w,b
            wspec((D, 3 * D)), wspec((1, 3 * D)),                # wqkv, bqkv
            wspec((D, D)), wspec((1, D)),                        # wo, bo
            wspec((1, D)), wspec((1, D)),                        # ln2 w,b
            wspec((D, F_dim)), wspec((1, F_dim)),                # l1
            wspec((F_dim, D)), wspec((1, D)),                    # l2
        ]

        return pl.pallas_call(
            kernel,
            out_shape=jax.ShapeDtypeStruct((B, S, D), x.dtype),
            grid_spec=pltpu.PrefetchScalarGridSpec(
                num_scalar_prefetch=0,
                grid=grid,
                in_specs=in_specs,
                out_specs=pl.BlockSpec((Bt, S, D), blk),
            ),
            compiler_params=pltpu.CompilerParams(
                dimension_semantics=("parallel",),
                vmem_limit_bytes=_vmem_limit_bytes(
                    Bt, S, D, F_dim, n_head, chip_vmem, single_buffer_weights),
            ),
        )(x, lens3,
          params["ln1_w"], params["ln1_b"],
          wqkv, bqkv, wo, params["bo"],
          params["ln2_w"], params["ln2_b"],
          w1, params["b1"], w2, params["b2"])

    try:
        return call(single_buffer_weights=True)
    except Exception:
        # Fallback for jax builds where Buffered(1) single-buffering is not
        # supported by the auto-pipeliner; semantics are identical.
        return call(single_buffer_weights=False)


# ---------------------------------------------------------------------------
# Pure-JAX f32 reference (mirrors the PyTorch forward, eval mode).
def _reference(x, inp_len, params, n_head):
    B, S, D = x.shape
    dh = D // n_head

    def ln(t, w, b):
        mu = t.mean(-1, keepdims=True)
        var = ((t - mu) ** 2).mean(-1, keepdims=True)
        return (t - mu) / jnp.sqrt(var + LN_EPS) * w + b

    xn = ln(x, params["ln1_w"], params["ln1_b"])
    q = xn @ params["wq"] + params["bq"]
    k = xn @ params["wk"] + params["bk"]
    v = xn @ params["wv"] + params["bv"]
    q = q.reshape(B, S, n_head, dh).transpose(0, 2, 1, 3) / jnp.sqrt(dh)
    k = k.reshape(B, S, n_head, dh).transpose(0, 2, 1, 3)
    v = v.reshape(B, S, n_head, dh).transpose(0, 2, 1, 3)
    s = jnp.einsum("bhqd,bhkd->bhqk", q, k)
    bias = jnp.where(jnp.arange(S)[None, :] < inp_len[:, None], 0.0, -1e30)
    s = s + bias[:, None, None, :]
    p = jax.nn.softmax(s, axis=-1)
    a = jnp.einsum("bhqk,bhkd->bhqd", p, v).transpose(0, 2, 1, 3).reshape(B, S, D)
    a = a @ params["wo"] + params["bo"]
    x = x + a
    xn2 = ln(x, params["ln2_w"], params["ln2_b"])
    h1 = jax.nn.relu(xn2 @ params["w1"] + params["b1"])
    return x + (h1 @ params["w2"] + params["b2"])


if __name__ == "__main__":
    B, S, D, H, F_dim = 2, 8, 32, 4, 64

    key = jax.random.PRNGKey(0)
    ks = jax.random.split(key, 8)

    def uni(k, shape, bound):
        return jax.random.uniform(k, shape, jnp.float32, -bound, bound)

    xav = (6.0 / (2.0 * D)) ** 0.5       # xavier-ish for in_proj
    kai_d = (6.0 / D) ** 0.5             # kaiming-uniform fan_in = D
    kai_f = (6.0 / F_dim) ** 0.5         # kaiming-uniform fan_in = F

    params = {
        "ln1_w": jnp.ones((1, D), jnp.float32),
        "ln1_b": jnp.zeros((1, D), jnp.float32),
        "wq": uni(ks[0], (D, D), xav), "bq": jnp.zeros((1, D), jnp.float32),
        "wk": uni(ks[1], (D, D), xav), "bk": jnp.zeros((1, D), jnp.float32),
        "wv": uni(ks[2], (D, D), xav), "bv": jnp.zeros((1, D), jnp.float32),
        "wo": uni(ks[3], (D, D), kai_d), "bo": jnp.zeros((1, D), jnp.float32),
        "ln2_w": jnp.ones((1, D), jnp.float32),
        "ln2_b": jnp.zeros((1, D), jnp.float32),
        "w1": uni(ks[4], (D, F_dim), kai_d), "b1": jnp.zeros((1, F_dim), jnp.float32),
        "w2": uni(ks[5], (F_dim, D), kai_f), "b2": jnp.zeros((1, D), jnp.float32),
    }

    x = jax.random.normal(ks[6], (B, S, D), jnp.float32)
    inp_len = jnp.array([S, 5], dtype=jnp.int32)   # per-example valid lengths

    out = preln_transformer_encoder(x, inp_len, params, n_head=H)
    jax.block_until_ready(out)

    ref = _reference(x, inp_len, params, H)
    # bf16 matmul operands + approx reciprocal -> compare with a loose tolerance
    err = float(jnp.max(jnp.abs(out - ref) / (jnp.abs(ref) + 1.0)))
    assert err < 5e-2, f"mismatch vs reference: max rel err {err}"

    print("KERNEL_OK")
</pallas_src>

<mosaic_0001>
module attributes {stable_mosaic.version = 11 : i64} {
  func.func @encoder_kernel(%arg0: i32, %arg1: memref<1x8x32xf32, #tpu.memory_space<vmem>>, %arg2: memref<1x1x1xi32, #tpu.memory_space<vmem>>, %arg3: memref<1x32xf32, #tpu.memory_space<vmem>>, %arg4: memref<1x32xf32, #tpu.memory_space<vmem>>, %arg5: memref<32x96xbf16, #tpu.memory_space<vmem>>, %arg6: memref<1x96xf32, #tpu.memory_space<vmem>>, %arg7: memref<32x32xbf16, #tpu.memory_space<vmem>>, %arg8: memref<1x32xf32, #tpu.memory_space<vmem>>, %arg9: memref<1x32xf32, #tpu.memory_space<vmem>>, %arg10: memref<1x32xf32, #tpu.memory_space<vmem>>, %arg11: memref<32x64xbf16, #tpu.memory_space<vmem>>, %arg12: memref<1x64xf32, #tpu.memory_space<vmem>>, %arg13: memref<64x32xbf16, #tpu.memory_space<vmem>>, %arg14: memref<1x32xf32, #tpu.memory_space<vmem>>, %arg15: memref<1x8x32xf32, #tpu.memory_space<vmem>>) attributes {dimension_semantics = [#tpu.dimension_semantics<parallel>], iteration_bounds = array<i64: 2>, scalar_prefetch = 0 : i64, scratch_operands = 0 : i64, tpu.core_type = #tpu.core_type<tc>, window_params = [{transform_indices = @transform_0, window_bounds = array<i64: 1, 8, 32>}, {transform_indices = @transform_1, window_bounds = array<i64: 1, 1, 1>}, {pipeline_mode = #tpu.pipeline_mode<synchronous>, transform_indices = @transform_2, window_bounds = array<i64: 1, 32>}, {pipeline_mode = #tpu.pipeline_mode<synchronous>, transform_indices = @transform_3, window_bounds = array<i64: 1, 32>}, {pipeline_mode = #tpu.pipeline_mode<synchronous>, transform_indices = @transform_4, window_bounds = array<i64: 32, 96>}, {pipeline_mode = #tpu.pipeline_mode<synchronous>, transform_indices = @transform_5, window_bounds = array<i64: 1, 96>}, {pipeline_mode = #tpu.pipeline_mode<synchronous>, transform_indices = @transform_6, window_bounds = array<i64: 32, 32>}, {pipeline_mode = #tpu.pipeline_mode<synchronous>, transform_indices = @transform_7, window_bounds = array<i64: 1, 32>}, {pipeline_mode = #tpu.pipeline_mode<synchronous>, transform_indices = @transform_8, window_bounds = array<i64: 1, 32>}, {pipeline_mode = #tpu.pipeline_mode<synchronous>, transform_indices = @transform_9, window_bounds = array<i64: 1, 32>}, {pipeline_mode = #tpu.pipeline_mode<synchronous>, transform_indices = @transform_10, window_bounds = array<i64: 32, 64>}, {pipeline_mode = #tpu.pipeline_mode<synchronous>, transform_indices = @transform_11, window_bounds = array<i64: 1, 64>}, {pipeline_mode = #tpu.pipeline_mode<synchronous>, transform_indices = @transform_12, window_bounds = array<i64: 64, 32>}, {pipeline_mode = #tpu.pipeline_mode<synchronous>, transform_indices = @transform_13, window_bounds = array<i64: 1, 32>}, {transform_indices = @transform_14, window_bounds = array<i64: 1, 8, 32>}]} {
    %c0 = arith.constant 0 : index
    %c0_0 = arith.constant 0 : index
    %c0_1 = arith.constant 0 : index
    %0 = vector.load %arg1[%c0, %c0_0, %c0_1] : memref<1x8x32xf32, #tpu.memory_space<vmem>>, vector<1x8x32xf32>
    %1 = vector.shape_cast %0 : vector<1x8x32xf32> to vector<8x32xf32>
    %2 = tpu.iota {dimensions = array<i32: 2>} : vector<1x1x8xi32>
    %c0_2 = arith.constant 0 : index
    %c0_3 = arith.constant 0 : index
    %c0_4 = arith.constant 0 : index
    %3 = vector.load %arg2[%c0_2, %c0_3, %c0_4] : memref<1x1x1xi32, #tpu.memory_space<vmem>>, vector<1x1x1xi32>
    %4 = vector.broadcast %3 : vector<1x1x1xi32> to vector<1x1x8xi32>
    %5 = arith.cmpi slt, %2, %4 : vector<1x1x8xi32>
    %cst = arith.constant 0.000000e+00 : f32
    %cst_5 = arith.constant -1.000000e+30 : f32
    %6 = vector.broadcast %cst : f32 to vector<1x1x8xf32>
    %7 = vector.broadcast %cst_5 : f32 to vector<1x1x8xf32>
    %8 = arith.select %5, %6, %7 : vector<1x1x8xi1>, vector<1x1x8xf32>
    %9 = tpu.concatenate %8, %8, %8, %8 in 0 : vector<1x1x8xf32>, vector<1x1x8xf32>, vector<1x1x8xf32>, vector<1x1x8xf32> -> vector<4x1x8xf32>
    %c0_6 = arith.constant 0 : index
    %c0_7 = arith.constant 0 : index
    %10 = vector.load %arg3[%c0_6, %c0_7] : memref<1x32xf32, #tpu.memory_space<vmem>>, vector<1x32xf32>
    %c0_8 = arith.constant 0 : index
    %c0_9 = arith.constant 0 : index
    %11 = vector.load %arg4[%c0_8, %c0_9] : memref<1x32xf32, #tpu.memory_space<vmem>>, vector<1x32xf32>
    %cst_10 = arith.constant dense<0.000000e+00> : vector<8xf32>
    %12 = vector.multi_reduction <add>, %1, %cst_10 [1] : vector<8x32xf32> to vector<8xf32>
    %13 = vector.shape_cast %12 : vector<8xf32> to vector<8x1xf32>
    %cst_11 = arith.constant 3.200000e+01 : f32
    %14 = vector.broadcast %cst_11 : f32 to vector<8x1xf32>
    %15 = arith.divf %13, %14 : vector<8x1xf32>
    %16 = vector.broadcast %15 : vector<8x1xf32> to vector<8x32xf32>
    %17 = arith.subf %1, %16 : vector<8x32xf32>
    %18 = arith.mulf %17, %17 : vector<8x32xf32>
    %cst_12 = arith.constant dense<0.000000e+00> : vector<8xf32>
    %19 = vector.multi_reduction <add>, %18, %cst_12 [1] : vector<8x32xf32> to vector<8xf32>
    %20 = vector.shape_cast %19 : vector<8xf32> to vector<8x1xf32>
    %cst_13 = arith.constant 3.200000e+01 : f32
    %21 = vector.broadcast %cst_13 : f32 to vector<8x1xf32>
    %22 = arith.divf %20, %21 : vector<8x1xf32>
    %23 = vector.broadcast %15 : vector<8x1xf32> to vector<8x32xf32>
    %24 = arith.subf %1, %23 : vector<8x32xf32>
    %cst_14 = arith.constant 9.99999974E-6 : f32
    %25 = vector.broadcast %cst_14 : f32 to vector<8x1xf32>
    %26 = arith.addf %22, %25 : vector<8x1xf32>
    %27 = math.rsqrt %26 : vector<8x1xf32>
    %28 = vector.broadcast %27 : vector<8x1xf32> to vector<8x32xf32>
    %29 = arith.mulf %24, %28 : vector<8x32xf32>
    %30 = vector.broadcast %10 : vector<1x32xf32> to vector<8x32xf32>
    %31 = arith.mulf %29, %30 : vector<8x32xf32>
    %32 = vector.broadcast %11 : vector<1x32xf32> to vector<8x32xf32>
    %33 = arith.addf %31, %32 : vector<8x32xf32>
    %34 = arith.truncf %33 : vector<8x32xf32> to vector<8x32xbf16>
    %c0_15 = arith.constant 0 : index
    %c0_16 = arith.constant 0 : index
    %35 = vector.load %arg5[%c0_15, %c0_16] : memref<32x96xbf16, #tpu.memory_space<vmem>>, vector<32x96xbf16>
    %cst_17 = arith.constant dense<0.000000e+00> : vector<8x96xf32>
    %36 = tpu.matmul %34, %35, %cst_17 {dimension_numbers = #tpu.dot_dimension_numbers<[1], [0], [0], [1], [0, 0, 1, 1], [], []>} : vector<8x32xbf16>, vector<32x96xbf16>, vector<8x96xf32> -> vector<8x96xf32>
    %c0_18 = arith.constant 0 : index
    %c0_19 = arith.constant 0 : index
    %37 = vector.load %arg6[%c0_18, %c0_19] : memref<1x96xf32, #tpu.memory_space<vmem>>, vector<1x96xf32>
    %38 = vector.broadcast %37 : vector<1x96xf32> to vector<8x96xf32>
    %39 = arith.addf %36, %38 : vector<8x96xf32>
    %40 = vector.extract_strided_slice %39 {offsets = [0, 0], sizes = [8, 32], strides = [1, 1]} : vector<8x96xf32> to vector<8x32xf32>
    %41 = vector.shape_cast %40 : vector<8x32xf32> to vector<1x8x32xf32>
    %42 = vector.extract_strided_slice %41 {offsets = [0, 0, 0], sizes = [1, 8, 8], strides = [1, 1, 1]} : vector<1x8x32xf32> to vector<1x8x8xf32>
    %43 = vector.extract_strided_slice %41 {offsets = [0, 0, 8], sizes = [1, 8, 8], strides = [1, 1, 1]} : vector<1x8x32xf32> to vector<1x8x8xf32>
    %44 = vector.extract_strided_slice %41 {offsets = [0, 0, 16], sizes = [1, 8, 8], strides = [1, 1, 1]} : vector<1x8x32xf32> to vector<1x8x8xf32>
    %45 = vector.extract_strided_slice %41 {offsets = [0, 0, 24], sizes = [1, 8, 8], strides = [1, 1, 1]} : vector<1x8x32xf32> to vector<1x8x8xf32>
    %46 = tpu.concatenate %42, %43, %44, %45 in 0 : vector<1x8x8xf32>, vector<1x8x8xf32>, vector<1x8x8xf32>, vector<1x8x8xf32> -> vector<4x8x8xf32>
    %47 = arith.truncf %46 : vector<4x8x8xf32> to vector<4x8x8xbf16>
    %48 = vector.extract_strided_slice %39 {offsets = [0, 32], sizes = [8, 32], strides = [1, 1]} : vector<8x96xf32> to vector<8x32xf32>
    %49 = vector.shape_cast %48 : vector<8x32xf32> to vector<1x8x32xf32>
    %50 = vector.extract_strided_slice %49 {offsets = [0, 0, 0], sizes = [1, 8, 8], strides = [1, 1, 1]} : vector<1x8x32xf32> to vector<1x8x8xf32>
    %51 = vector.extract_strided_slice %49 {offsets = [0, 0, 8], sizes = [1, 8, 8], strides = [1, 1, 1]} : vector<1x8x32xf32> to vector<1x8x8xf32>
    %52 = vector.extract_strided_slice %49 {offsets = [0, 0, 16], sizes = [1, 8, 8], strides = [1, 1, 1]} : vector<1x8x32xf32> to vector<1x8x8xf32>
    %53 = vector.extract_strided_slice %49 {offsets = [0, 0, 24], sizes = [1, 8, 8], strides = [1, 1, 1]} : vector<1x8x32xf32> to vector<1x8x8xf32>
    %54 = tpu.concatenate %50, %51, %52, %53 in 0 : vector<1x8x8xf32>, vector<1x8x8xf32>, vector<1x8x8xf32>, vector<1x8x8xf32> -> vector<4x8x8xf32>
    %55 = arith.truncf %54 : vector<4x8x8xf32> to vector<4x8x8xbf16>
    %56 = vector.extract_strided_slice %39 {offsets = [0, 64], sizes = [8, 32], strides = [1, 1]} : vector<8x96xf32> to vector<8x32xf32>
    %57 = vector.shape_cast %56 : vector<8x32xf32> to vector<1x8x32xf32>
    %58 = vector.extract_strided_slice %57 {offsets = [0, 0, 0], sizes = [1, 8, 8], strides = [1, 1, 1]} : vector<1x8x32xf32> to vector<1x8x8xf32>
    %59 = vector.extract_strided_slice %57 {offsets = [0, 0, 8], sizes = [1, 8, 8], strides = [1, 1, 1]} : vector<1x8x32xf32> to vector<1x8x8xf32>
    %60 = vector.extract_strided_slice %57 {offsets = [0, 0, 16], sizes = [1, 8, 8], strides = [1, 1, 1]} : vector<1x8x32xf32> to vector<1x8x8xf32>
    %61 = vector.extract_strided_slice %57 {offsets = [0, 0, 24], sizes = [1, 8, 8], strides = [1, 1, 1]} : vector<1x8x32xf32> to vector<1x8x8xf32>
    %62 = tpu.concatenate %58, %59, %60, %61 in 0 : vector<1x8x8xf32>, vector<1x8x8xf32>, vector<1x8x8xf32>, vector<1x8x8xf32> -> vector<4x8x8xf32>
    %63 = arith.truncf %62 : vector<4x8x8xf32> to vector<4x8x8xbf16>
    "tpu.trace_start"() <{level = 10 : i32, message = "bqd,bkd->bqk"}> : () -> ()
    %cst_20 = arith.constant dense<0.000000e+00> : vector<4x8x8xf32>
    %64 = tpu.matmul %47, %55, %cst_20 {dimension_numbers = #tpu.dot_dimension_numbers<[2], [2], [1], [1], [0, 0, 0, 1, 1, 1], [0], [0]>} : vector<4x8x8xbf16>, vector<4x8x8xbf16>, vector<4x8x8xf32> -> vector<4x8x8xf32>
    "tpu.trace_stop"() : () -> ()
    %65 = vector.broadcast %9 : vector<4x1x8xf32> to vector<4x8x8xf32>
    %66 = arith.addf %64, %65 : vector<4x8x8xf32>
    %cst_21 = arith.constant dense<0xFF800000> : vector<4x8xf32>
    %67 = vector.multi_reduction <maximumf>, %66, %cst_21 [2] : vector<4x8x8xf32> to vector<4x8xf32>
    %68 = vector.shape_cast %67 : vector<4x8xf32> to vector<4x8x1xf32>
    %69 = vector.broadcast %68 : vector<4x8x1xf32> to vector<4x8x8xf32>
    %70 = arith.subf %66, %69 : vector<4x8x8xf32>
    %71 = math.exp %70 : vector<4x8x8xf32>
    %cst_22 = arith.constant dense<0.000000e+00> : vector<4x8xf32>
    %72 = vector.multi_reduction <add>, %71, %cst_22 [2] : vector<4x8x8xf32> to vector<4x8xf32>
    %73 = vector.shape_cast %72 : vector<4x8xf32> to vector<4x8x1xf32>
    %74 = tpu.reciprocal %73 {approx = true} : vector<4x8x1xf32> -> vector<4x8x1xf32>
    %75 = vector.broadcast %74 : vector<4x8x1xf32> to vector<4x8x8xf32>
    %76 = arith.mulf %71, %75 : vector<4x8x8xf32>
    %77 = arith.truncf %76 : vector<4x8x8xf32> to vector<4x8x8xbf16>
    "tpu.trace_start"() <{level = 10 : i32, message = "bqk,bkd->bqd"}> : () -> ()
    %cst_23 = arith.constant dense<0.000000e+00> : vector<4x8x8xf32>
    %78 = tpu.matmul %77, %63, %cst_23 {dimension_numbers = #tpu.dot_dimension_numbers<[2], [1], [1], [2], [0, 0, 0, 1, 1, 2], [0], [0]>} : vector<4x8x8xbf16>, vector<4x8x8xbf16>, vector<4x8x8xf32> -> vector<4x8x8xf32>
    "tpu.trace_stop"() : () -> ()
    %79 = vector.extract_strided_slice %78 {offsets = [0, 0, 0], sizes = [1, 8, 8], strides = [1, 1, 1]} : vector<4x8x8xf32> to vector<1x8x8xf32>
    %80 = vector.extract_strided_slice %78 {offsets = [1, 0, 0], sizes = [1, 8, 8], strides = [1, 1, 1]} : vector<4x8x8xf32> to vector<1x8x8xf32>
    %81 = vector.extract_strided_slice %78 {offsets = [2, 0, 0], sizes = [1, 8, 8], strides = [1, 1, 1]} : vector<4x8x8xf32> to vector<1x8x8xf32>
    %82 = vector.extract_strided_slice %78 {offsets = [3, 0, 0], sizes = [1, 8, 8], strides = [1, 1, 1]} : vector<4x8x8xf32> to vector<1x8x8xf32>
    %83 = tpu.concatenate %79, %80, %81, %82 in 2 : vector<1x8x8xf32>, vector<1x8x8xf32>, vector<1x8x8xf32>, vector<1x8x8xf32> -> vector<1x8x32xf32>
    %84 = vector.shape_cast %83 : vector<1x8x32xf32> to vector<8x32xf32>
    %85 = arith.truncf %84 : vector<8x32xf32> to vector<8x32xbf16>
    %c0_24 = arith.constant 0 : index
    %c0_25 = arith.constant 0 : index
    %86 = vector.load %arg7[%c0_24, %c0_25] : memref<32x32xbf16, #tpu.memory_space<vmem>>, vector<32x32xbf16>
    %cst_26 = arith.constant dense<0.000000e+00> : vector<8x32xf32>
    %87 = tpu.matmul %85, %86, %cst_26 {dimension_numbers = #tpu.dot_dimension_numbers<[1], [0], [0], [1], [0, 0, 1, 1], [], []>} : vector<8x32xbf16>, vector<32x32xbf16>, vector<8x32xf32> -> vector<8x32xf32>
    %c0_27 = arith.constant 0 : index
    %c0_28 = arith.constant 0 : index
    %88 = vector.load %arg8[%c0_27, %c0_28] : memref<1x32xf32, #tpu.memory_space<vmem>>, vector<1x32xf32>
    %89 = vector.broadcast %88 : vector<1x32xf32> to vector<8x32xf32>
    %90 = arith.addf %87, %89 : vector<8x32xf32>
    %91 = arith.addf %1, %90 : vector<8x32xf32>
    %c0_29 = arith.constant 0 : index
    %c0_30 = arith.constant 0 : index
    %92 = vector.load %arg9[%c0_29, %c0_30] : memref<1x32xf32, #tpu.memory_space<vmem>>, vector<1x32xf32>
    %c0_31 = arith.constant 0 : index
    %c0_32 = arith.constant 0 : index
    %93 = vector.load %arg10[%c0_31, %c0_32] : memref<1x32xf32, #tpu.memory_space<vmem>>, vector<1x32xf32>
    %cst_33 = arith.constant dense<0.000000e+00> : vector<8xf32>
    %94 = vector.multi_reduction <add>, %91, %cst_33 [1] : vector<8x32xf32> to vector<8xf32>
    %95 = vector.shape_cast %94 : vector<8xf32> to vector<8x1xf32>
    %cst_34 = arith.constant 3.200000e+01 : f32
    %96 = vector.broadcast %cst_34 : f32 to vector<8x1xf32>
    %97 = arith.divf %95, %96 : vector<8x1xf32>
    %98 = vector.broadcast %97 : vector<8x1xf32> to vector<8x32xf32>
    %99 = arith.subf %91, %98 : vector<8x32xf32>
    %100 = arith.mulf %99, %99 : vector<8x32xf32>
    %cst_35 = arith.constant dense<0.000000e+00> : vector<8xf32>
    %101 = vector.multi_reduction <add>, %100, %cst_35 [1] : vector<8x32xf32> to vector<8xf32>
    %102 = vector.shape_cast %101 : vector<8xf32> to vector<8x1xf32>
    %cst_36 = arith.constant 3.200000e+01 : f32
    %103 = vector.broadcast %cst_36 : f32 to vector<8x1xf32>
    %104 = arith.divf %102, %103 : vector<8x1xf32>
    %105 = vector.broadcast %97 : vector<8x1xf32> to vector<8x32xf32>
    %106 = arith.subf %91, %105 : vector<8x32xf32>
    %cst_37 = arith.constant 9.99999974E-6 : f32
    %107 = vector.broadcast %cst_37 : f32 to vector<8x1xf32>
    %108 = arith.addf %104, %107 : vector<8x1xf32>
    %109 = math.rsqrt %108 : vector<8x1xf32>
    %110 = vector.broadcast %109 : vector<8x1xf32> to vector<8x32xf32>
    %111 = arith.mulf %106, %110 : vector<8x32xf32>
    %112 = vector.broadcast %92 : vector<1x32xf32> to vector<8x32xf32>
    %113 = arith.mulf %111, %112 : vector<8x32xf32>
    %114 = vector.broadcast %93 : vector<1x32xf32> to vector<8x32xf32>
    %115 = arith.addf %113, %114 : vector<8x32xf32>
    %116 = arith.truncf %115 : vector<8x32xf32> to vector<8x32xbf16>
    %c0_38 = arith.constant 0 : index
    %c0_39 = arith.constant 0 : index
    %117 = vector.load %arg11[%c0_38, %c0_39] : memref<32x64xbf16, #tpu.memory_space<vmem>>, vector<32x64xbf16>
    %cst_40 = arith.constant dense<0.000000e+00> : vector<8x64xf32>
    %118 = tpu.matmul %116, %117, %cst_40 {dimension_numbers = #tpu.dot_dimension_numbers<[1], [0], [0], [1], [0, 0, 1, 1], [], []>} : vector<8x32xbf16>, vector<32x64xbf16>, vector<8x64xf32> -> vector<8x64xf32>
    %c0_41 = arith.constant 0 : index
    %c0_42 = arith.constant 0 : index
    %119 = vector.load %arg12[%c0_41, %c0_42] : memref<1x64xf32, #tpu.memory_space<vmem>>, vector<1x64xf32>
    %120 = vector.broadcast %119 : vector<1x64xf32> to vector<8x64xf32>
    %121 = arith.addf %118, %120 : vector<8x64xf32>
    %cst_43 = arith.constant 0.000000e+00 : f32
    %122 = vector.broadcast %cst_43 : f32 to vector<8x64xf32>
    %123 = arith.maximumf %121, %122 : vector<8x64xf32>
    %124 = arith.truncf %123 : vector<8x64xf32> to vector<8x64xbf16>
    %c0_44 = arith.constant 0 : index
    %c0_45 = arith.constant 0 : index
    %125 = vector.load %arg13[%c0_44, %c0_45] : memref<64x32xbf16, #tpu.memory_space<vmem>>, vector<64x32xbf16>
    %cst_46 = arith.constant dense<0.000000e+00> : vector<8x32xf32>
    %126 = tpu.matmul %124, %125, %cst_46 {dimension_numbers = #tpu.dot_dimension_numbers<[1], [0], [0], [1], [0, 0, 1, 1], [], []>} : vector<8x64xbf16>, vector<64x32xbf16>, vector<8x32xf32> -> vector<8x32xf32>
    %c0_47 = arith.constant 0 : index
    %c0_48 = arith.constant 0 : index
    %127 = vector.load %arg14[%c0_47, %c0_48] : memref<1x32xf32, #tpu.memory_space<vmem>>, vector<1x32xf32>
    %128 = vector.broadcast %127 : vector<1x32xf32> to vector<8x32xf32>
    %129 = arith.addf %126, %128 : vector<8x32xf32>
    %130 = arith.addf %91, %129 : vector<8x32xf32>
    %131 = vector.shape_cast %130 : vector<8x32xf32> to vector<1x8x32xf32>
    %c0_49 = arith.constant 0 : index
    %c0_50 = arith.constant 0 : index
    %c0_51 = arith.constant 0 : index
    %132 = vector.load %arg15[%c0_49, %c0_50, %c0_51] : memref<1x8x32xf32, #tpu.memory_space<vmem>>, vector<1x8x32xf32>
    tpu.vector_store %arg15[%c0_49, %c0_50, %c0_51], %131 {strides = array<i32>} : memref<1x8x32xf32, #tpu.memory_space<vmem>>, vector<1x8x32xf32>,
    return
  }
  func.func @transform_0(%arg0: i32) -> (i32, i32, i32) {
    %c0_i32 = arith.constant 0 : i32
    %c0_i32_0 = arith.constant 0 : i32
    %c0_i32_1 = arith.constant 0 : i32
    return %arg0, %c0_i32, %c0_i32_0 : i32, i32, i32
  }
  func.func @transform_1(%arg0: i32) -> (i32, i32, i32) {
    %c0_i32 = arith.constant 0 : i32
    %c0_i32_0 = arith.constant 0 : i32
    %c0_i32_1 = arith.constant 0 : i32
    return %arg0, %c0_i32, %c0_i32_0 : i32, i32, i32
  }
  func.func @transform_2(%arg0: i32) -> (i32, i32) {
    %c0_i32 = arith.constant 0 : i32
    %c0_i32_0 = arith.constant 0 : i32
    %c0_i32_1 = arith.constant 0 : i32
    return %c0_i32, %c0_i32_0 : i32, i32
  }
  func.func @transform_3(%arg0: i32) -> (i32, i32) {
    %c0_i32 = arith.constant 0 : i32
    %c0_i32_0 = arith.constant 0 : i32
    %c0_i32_1 = arith.constant 0 : i32
    return %c0_i32, %c0_i32_0 : i32, i32
  }
  func.func @transform_4(%arg0: i32) -> (i32, i32) {
    %c0_i32 = arith.constant 0 : i32
    %c0_i32_0 = arith.constant 0 : i32
    %c0_i32_1 = arith.constant 0 : i32
    return %c0_i32, %c0_i32_0 : i32, i32
  }
  func.func @transform_5(%arg0: i32) -> (i32, i32) {
    %c0_i32 = arith.constant 0 : i32
    %c0_i32_0 = arith.constant 0 : i32
    %c0_i32_1 = arith.constant 0 : i32
    return %c0_i32, %c0_i32_0 : i32, i32
  }
  func.func @transform_6(%arg0: i32) -> (i32, i32) {
    %c0_i32 = arith.constant 0 : i32
    %c0_i32_0 = arith.constant 0 : i32
    %c0_i32_1 = arith.constant 0 : i32
    return %c0_i32, %c0_i32_0 : i32, i32
  }
  func.func @transform_7(%arg0: i32) -> (i32, i32) {
    %c0_i32 = arith.constant 0 : i32
    %c0_i32_0 = arith.constant 0 : i32
    %c0_i32_1 = arith.constant 0 : i32
    return %c0_i32, %c0_i32_0 : i32, i32
  }
  func.func @transform_8(%arg0: i32) -> (i32, i32) {
    %c0_i32 = arith.constant 0 : i32
    %c0_i32_0 = arith.constant 0 : i32
    %c0_i32_1 = arith.constant 0 : i32
    return %c0_i32, %c0_i32_0 : i32, i32
  }
  func.func @transform_9(%arg0: i32) -> (i32, i32) {
    %c0_i32 = arith.constant 0 : i32
    %c0_i32_0 = arith.constant 0 : i32
    %c0_i32_1 = arith.constant 0 : i32
    return %c0_i32, %c0_i32_0 : i32, i32
  }
  func.func @transform_10(%arg0: i32) -> (i32, i32) {
    %c0_i32 = arith.constant 0 : i32
    %c0_i32_0 = arith.constant 0 : i32
    %c0_i32_1 = arith.constant 0 : i32
    return %c0_i32, %c0_i32_0 : i32, i32
  }
  func.func @transform_11(%arg0: i32) -> (i32, i32) {
    %c0_i32 = arith.constant 0 : i32
    %c0_i32_0 = arith.constant 0 : i32
    %c0_i32_1 = arith.constant 0 : i32
    return %c0_i32, %c0_i32_0 : i32, i32
  }
  func.func @transform_12(%arg0: i32) -> (i32, i32) {
    %c0_i32 = arith.constant 0 : i32
    %c0_i32_0 = arith.constant 0 : i32
    %c0_i32_1 = arith.constant 0 : i32
    return %c0_i32, %c0_i32_0 : i32, i32
  }
  func.func @transform_13(%arg0: i32) -> (i32, i32) {
    %c0_i32 = arith.constant 0 : i32
    %c0_i32_0 = arith.constant 0 : i32
    %c0_i32_1 = arith.constant 0 : i32
    return %c0_i32, %c0_i32_0 : i32, i32
  }
  func.func @transform_14(%arg0: i32) -> (i32, i32, i32) {
    %c0_i32 = arith.constant 0 : i32
    %c0_i32_0 = arith.constant 0 : i32
    %c0_i32_1 = arith.constant 0 : i32
    return %arg0, %c0_i32, %c0_i32_0 : i32, i32, i32
  }
}

module attributes {stable_mosaic.version = 11 : i64} {
  func.func @encoder_kernel(%arg0: i32, %arg1: memref<1x8x32xf32, #tpu.memory_space<vmem>>, %arg2: memref<1x1x1xi32, #tpu.memory_space<vmem>>, %arg3: memref<1x32xf32, #tpu.memory_space<vmem>>, %arg4: memref<1x32xf32, #tpu.memory_space<vmem>>, %arg5: memref<32x96xbf16, #tpu.memory_space<vmem>>, %arg6: memref<1x96xf32, #tpu.memory_space<vmem>>, %arg7: memref<32x32xbf16, #tpu.memory_space<vmem>>, %arg8: memref<1x32xf32, #tpu.memory_space<vmem>>, %arg9: memref<1x32xf32, #tpu.memory_space<vmem>>, %arg10: memref<1x32xf32, #tpu.memory_space<vmem>>, %arg11: memref<32x64xbf16, #tpu.memory_space<vmem>>, %arg12: memref<1x64xf32, #tpu.memory_space<vmem>>, %arg13: memref<64x32xbf16, #tpu.memory_space<vmem>>, %arg14: memref<1x32xf32, #tpu.memory_space<vmem>>, %arg15: memref<1x8x32xf32, #tpu.memory_space<vmem>>) attributes {dimension_semantics = [#tpu.dimension_semantics<parallel>], iteration_bounds = array<i64: 2>, scalar_prefetch = 0 : i64, scratch_operands = 0 : i64, tpu.core_type = #tpu.core_type<tc>, window_params = [{transform_indices = @transform_0, window_bounds = array<i64: 1, 8, 32>}, {transform_indices = @transform_1, window_bounds = array<i64: 1, 1, 1>}, {pipeline_mode = #tpu.pipeline_mode<synchronous>, transform_indices = @transform_2, window_bounds = array<i64: 1, 32>}, {pipeline_mode = #tpu.pipeline_mode<synchronous>, transform_indices = @transform_3, window_bounds = array<i64: 1, 32>}, {pipeline_mode = #tpu.pipeline_mode<synchronous>, transform_indices = @transform_4, window_bounds = array<i64: 32, 96>}, {pipeline_mode = #tpu.pipeline_mode<synchronous>, transform_indices = @transform_5, window_bounds = array<i64: 1, 96>}, {pipeline_mode = #tpu.pipeline_mode<synchronous>, transform_indices = @transform_6, window_bounds = array<i64: 32, 32>}, {pipeline_mode = #tpu.pipeline_mode<synchronous>, transform_indices = @transform_7, window_bounds = array<i64: 1, 32>}, {pipeline_mode = #tpu.pipeline_mode<synchronous>, transform_indices = @transform_8, window_bounds = array<i64: 1, 32>}, {pipeline_mode = #tpu.pipeline_mode<synchronous>, transform_indices = @transform_9, window_bounds = array<i64: 1, 32>}, {pipeline_mode = #tpu.pipeline_mode<synchronous>, transform_indices = @transform_10, window_bounds = array<i64: 32, 64>}, {pipeline_mode = #tpu.pipeline_mode<synchronous>, transform_indices = @transform_11, window_bounds = array<i64: 1, 64>}, {pipeline_mode = #tpu.pipeline_mode<synchronous>, transform_indices = @transform_12, window_bounds = array<i64: 64, 32>}, {pipeline_mode = #tpu.pipeline_mode<synchronous>, transform_indices = @transform_13, window_bounds = array<i64: 1, 32>}, {transform_indices = @transform_14, window_bounds = array<i64: 1, 8, 32>}]} {
    %c0 = arith.constant 0 : index
    %c0_0 = arith.constant 0 : index
    %c0_1 = arith.constant 0 : index
    %0 = vector.load %arg1[%c0, %c0_0, %c0_1] : memref<1x8x32xf32, #tpu.memory_space<vmem>>, vector<1x8x32xf32>
    %1 = vector.shape_cast %0 : vector<1x8x32xf32> to vector<8x32xf32>
    %2 = tpu.iota {dimensions = array<i32: 2>} : vector<1x1x8xi32>
    %c0_2 = arith.constant 0 : index
    %c0_3 = arith.constant 0 : index
    %c0_4 = arith.constant 0 : index
    %3 = vector.load %arg2[%c0_2, %c0_3, %c0_4] : memref<1x1x1xi32, #tpu.memory_space<vmem>>, vector<1x1x1xi32>
    %4 = vector.broadcast %3 : vector<1x1x1xi32> to vector<1x1x8xi32>
    %5 = arith.cmpi slt, %2, %4 : vector<1x1x8xi32>
    %cst = arith.constant 0.000000e+00 : f32
    %cst_5 = arith.constant -1.000000e+30 : f32
    %6 = vector.broadcast %cst : f32 to vector<1x1x8xf32>
    %7 = vector.broadcast %cst_5 : f32 to vector<1x1x8xf32>
    %8 = arith.select %5, %6, %7 : vector<1x1x8xi1>, vector<1x1x8xf32>
    %9 = tpu.concatenate %8, %8, %8, %8 in 0 : vector<1x1x8xf32>, vector<1x1x8xf32>, vector<1x1x8xf32>, vector<1x1x8xf32> -> vector<4x1x8xf32>
    %c0_6 = arith.constant 0 : index
    %c0_7 = arith.constant 0 : index
    %10 = vector.load %arg3[%c0_6, %c0_7] : memref<1x32xf32, #tpu.memory_space<vmem>>, vector<1x32xf32>
    %c0_8 = arith.constant 0 : index
    %c0_9 = arith.constant 0 : index
    %11 = vector.load %arg4[%c0_8, %c0_9] : memref<1x32xf32, #tpu.memory_space<vmem>>, vector<1x32xf32>
    %cst_10 = arith.constant dense<0.000000e+00> : vector<8xf32>
    %12 = vector.multi_reduction <add>, %1, %cst_10 [1] : vector<8x32xf32> to vector<8xf32>
    %13 = vector.shape_cast %12 : vector<8xf32> to vector<8x1xf32>
    %cst_11 = arith.constant 3.200000e+01 : f32
    %14 = vector.broadcast %cst_11 : f32 to vector<8x1xf32>
    %15 = arith.divf %13, %14 : vector<8x1xf32>
    %16 = vector.broadcast %15 : vector<8x1xf32> to vector<8x32xf32>
    %17 = arith.subf %1, %16 : vector<8x32xf32>
    %18 = arith.mulf %17, %17 : vector<8x32xf32>
    %cst_12 = arith.constant dense<0.000000e+00> : vector<8xf32>
    %19 = vector.multi_reduction <add>, %18, %cst_12 [1] : vector<8x32xf32> to vector<8xf32>
    %20 = vector.shape_cast %19 : vector<8xf32> to vector<8x1xf32>
    %cst_13 = arith.constant 3.200000e+01 : f32
    %21 = vector.broadcast %cst_13 : f32 to vector<8x1xf32>
    %22 = arith.divf %20, %21 : vector<8x1xf32>
    %23 = vector.broadcast %15 : vector<8x1xf32> to vector<8x32xf32>
    %24 = arith.subf %1, %23 : vector<8x32xf32>
    %cst_14 = arith.constant 9.99999974E-6 : f32
    %25 = vector.broadcast %cst_14 : f32 to vector<8x1xf32>
    %26 = arith.addf %22, %25 : vector<8x1xf32>
    %27 = math.rsqrt %26 : vector<8x1xf32>
    %28 = vector.broadcast %27 : vector<8x1xf32> to vector<8x32xf32>
    %29 = arith.mulf %24, %28 : vector<8x32xf32>
    %30 = vector.broadcast %10 : vector<1x32xf32> to vector<8x32xf32>
    %31 = arith.mulf %29, %30 : vector<8x32xf32>
    %32 = vector.broadcast %11 : vector<1x32xf32> to vector<8x32xf32>
    %33 = arith.addf %31, %32 : vector<8x32xf32>
    %34 = arith.truncf %33 : vector<8x32xf32> to vector<8x32xbf16>
    %c0_15 = arith.constant 0 : index
    %c0_16 = arith.constant 0 : index
    %35 = vector.load %arg5[%c0_15, %c0_16] : memref<32x96xbf16, #tpu.memory_space<vmem>>, vector<32x96xbf16>
    %cst_17 = arith.constant dense<0.000000e+00> : vector<8x96xf32>
    %36 = tpu.matmul %34, %35, %cst_17 {dimension_numbers = #tpu.dot_dimension_numbers<[1], [0], [0], [1], [0, 0, 1, 1], [], []>} : vector<8x32xbf16>, vector<32x96xbf16>, vector<8x96xf32> -> vector<8x96xf32>
    %c0_18 = arith.constant 0 : index
    %c0_19 = arith.constant 0 : index
    %37 = vector.load %arg6[%c0_18, %c0_19] : memref<1x96xf32, #tpu.memory_space<vmem>>, vector<1x96xf32>
    %38 = vector.broadcast %37 : vector<1x96xf32> to vector<8x96xf32>
    %39 = arith.addf %36, %38 : vector<8x96xf32>
    %40 = vector.extract_strided_slice %39 {offsets = [0, 0], sizes = [8, 32], strides = [1, 1]} : vector<8x96xf32> to vector<8x32xf32>
    %41 = vector.shape_cast %40 : vector<8x32xf32> to vector<1x8x32xf32>
    %42 = vector.extract_strided_slice %41 {offsets = [0, 0, 0], sizes = [1, 8, 8], strides = [1, 1, 1]} : vector<1x8x32xf32> to vector<1x8x8xf32>
    %43 = vector.extract_strided_slice %41 {offsets = [0, 0, 8], sizes = [1, 8, 8], strides = [1, 1, 1]} : vector<1x8x32xf32> to vector<1x8x8xf32>
    %44 = vector.extract_strided_slice %41 {offsets = [0, 0, 16], sizes = [1, 8, 8], strides = [1, 1, 1]} : vector<1x8x32xf32> to vector<1x8x8xf32>
    %45 = vector.extract_strided_slice %41 {offsets = [0, 0, 24], sizes = [1, 8, 8], strides = [1, 1, 1]} : vector<1x8x32xf32> to vector<1x8x8xf32>
    %46 = tpu.concatenate %42, %43, %44, %45 in 0 : vector<1x8x8xf32>, vector<1x8x8xf32>, vector<1x8x8xf32>, vector<1x8x8xf32> -> vector<4x8x8xf32>
    %47 = arith.truncf %46 : vector<4x8x8xf32> to vector<4x8x8xbf16>
    %48 = vector.extract_strided_slice %39 {offsets = [0, 32], sizes = [8, 32], strides = [1, 1]} : vector<8x96xf32> to vector<8x32xf32>
    %49 = vector.shape_cast %48 : vector<8x32xf32> to vector<1x8x32xf32>
    %50 = vector.extract_strided_slice %49 {offsets = [0, 0, 0], sizes = [1, 8, 8], strides = [1, 1, 1]} : vector<1x8x32xf32> to vector<1x8x8xf32>
    %51 = vector.extract_strided_slice %49 {offsets = [0, 0, 8], sizes = [1, 8, 8], strides = [1, 1, 1]} : vector<1x8x32xf32> to vector<1x8x8xf32>
    %52 = vector.extract_strided_slice %49 {offsets = [0, 0, 16], sizes = [1, 8, 8], strides = [1, 1, 1]} : vector<1x8x32xf32> to vector<1x8x8xf32>
    %53 = vector.extract_strided_slice %49 {offsets = [0, 0, 24], sizes = [1, 8, 8], strides = [1, 1, 1]} : vector<1x8x32xf32> to vector<1x8x8xf32>
    %54 = tpu.concatenate %50, %51, %52, %53 in 0 : vector<1x8x8xf32>, vector<1x8x8xf32>, vector<1x8x8xf32>, vector<1x8x8xf32> -> vector<4x8x8xf32>
    %55 = arith.truncf %54 : vector<4x8x8xf32> to vector<4x8x8xbf16>
    %56 = vector.extract_strided_slice %39 {offsets = [0, 64], sizes = [8, 32], strides = [1, 1]} : vector<8x96xf32> to vector<8x32xf32>
    %57 = vector.shape_cast %56 : vector<8x32xf32> to vector<1x8x32xf32>
    %58 = vector.extract_strided_slice %57 {offsets = [0, 0, 0], sizes = [1, 8, 8], strides = [1, 1, 1]} : vector<1x8x32xf32> to vector<1x8x8xf32>
    %59 = vector.extract_strided_slice %57 {offsets = [0, 0, 8], sizes = [1, 8, 8], strides = [1, 1, 1]} : vector<1x8x32xf32> to vector<1x8x8xf32>
    %60 = vector.extract_strided_slice %57 {offsets = [0, 0, 16], sizes = [1, 8, 8], strides = [1, 1, 1]} : vector<1x8x32xf32> to vector<1x8x8xf32>
    %61 = vector.extract_strided_slice %57 {offsets = [0, 0, 24], sizes = [1, 8, 8], strides = [1, 1, 1]} : vector<1x8x32xf32> to vector<1x8x8xf32>
    %62 = tpu.concatenate %58, %59, %60, %61 in 0 : vector<1x8x8xf32>, vector<1x8x8xf32>, vector<1x8x8xf32>, vector<1x8x8xf32> -> vector<4x8x8xf32>
    %63 = arith.truncf %62 : vector<4x8x8xf32> to vector<4x8x8xbf16>
    "tpu.trace_start"() <{level = 10 : i32, message = "bqd,bkd->bqk"}> : () -> ()
    %cst_20 = arith.constant dense<0.000000e+00> : vector<4x8x8xf32>
    %64 = tpu.matmul %47, %55, %cst_20 {dimension_numbers = #tpu.dot_dimension_numbers<[2], [2], [1], [1], [0, 0, 0, 1, 1, 1], [0], [0]>} : vector<4x8x8xbf16>, vector<4x8x8xbf16>, vector<4x8x8xf32> -> vector<4x8x8xf32>
    "tpu.trace_stop"() : () -> ()
    %65 = vector.broadcast %9 : vector<4x1x8xf32> to vector<4x8x8xf32>
    %66 = arith.addf %64, %65 : vector<4x8x8xf32>
    %cst_21 = arith.constant dense<0xFF800000> : vector<4x8xf32>
    %67 = vector.multi_reduction <maximumf>, %66, %cst_21 [2] : vector<4x8x8xf32> to vector<4x8xf32>
    %68 = vector.shape_cast %67 : vector<4x8xf32> to vector<4x8x1xf32>
    %69 = vector.broadcast %68 : vector<4x8x1xf32> to vector<4x8x8xf32>
    %70 = arith.subf %66, %69 : vector<4x8x8xf32>
    %71 = math.exp %70 : vector<4x8x8xf32>
    %cst_22 = arith.constant dense<0.000000e+00> : vector<4x8xf32>
    %72 = vector.multi_reduction <add>, %71, %cst_22 [2] : vector<4x8x8xf32> to vector<4x8xf32>
    %73 = vector.shape_cast %72 : vector<4x8xf32> to vector<4x8x1xf32>
    %74 = tpu.reciprocal %73 {approx = true} : vector<4x8x1xf32> -> vector<4x8x1xf32>
    %75 = vector.broadcast %74 : vector<4x8x1xf32> to vector<4x8x8xf32>
    %76 = arith.mulf %71, %75 : vector<4x8x8xf32>
    %77 = arith.truncf %76 : vector<4x8x8xf32> to vector<4x8x8xbf16>
    "tpu.trace_start"() <{level = 10 : i32, message = "bqk,bkd->bqd"}> : () -> ()
    %cst_23 = arith.constant dense<0.000000e+00> : vector<4x8x8xf32>
    %78 = tpu.matmul %77, %63, %cst_23 {dimension_numbers = #tpu.dot_dimension_numbers<[2], [1], [1], [2], [0, 0, 0, 1, 1, 2], [0], [0]>} : vector<4x8x8xbf16>, vector<4x8x8xbf16>, vector<4x8x8xf32> -> vector<4x8x8xf32>
    "tpu.trace_stop"() : () -> ()
    %79 = vector.extract_strided_slice %78 {offsets = [0, 0, 0], sizes = [1, 8, 8], strides = [1, 1, 1]} : vector<4x8x8xf32> to vector<1x8x8xf32>
    %80 = vector.extract_strided_slice %78 {offsets = [1, 0, 0], sizes = [1, 8, 8], strides = [1, 1, 1]} : vector<4x8x8xf32> to vector<1x8x8xf32>
    %81 = vector.extract_strided_slice %78 {offsets = [2, 0, 0], sizes = [1, 8, 8], strides = [1, 1, 1]} : vector<4x8x8xf32> to vector<1x8x8xf32>
    %82 = vector.extract_strided_slice %78 {offsets = [3, 0, 0], sizes = [1, 8, 8], strides = [1, 1, 1]} : vector<4x8x8xf32> to vector<1x8x8xf32>
    %83 = tpu.concatenate %79, %80, %81, %82 in 2 : vector<1x8x8xf32>, vector<1x8x8xf32>, vector<1x8x8xf32>, vector<1x8x8xf32> -> vector<1x8x32xf32>
    %84 = vector.shape_cast %83 : vector<1x8x32xf32> to vector<8x32xf32>
    %85 = arith.truncf %84 : vector<8x32xf32> to vector<8x32xbf16>
    %c0_24 = arith.constant 0 : index
    %c0_25 = arith.constant 0 : index
    %86 = vector.load %arg7[%c0_24, %c0_25] : memref<32x32xbf16, #tpu.memory_space<vmem>>, vector<32x32xbf16>
    %cst_26 = arith.constant dense<0.000000e+00> : vector<8x32xf32>
    %87 = tpu.matmul %85, %86, %cst_26 {dimension_numbers = #tpu.dot_dimension_numbers<[1], [0], [0], [1], [0, 0, 1, 1], [], []>} : vector<8x32xbf16>, vector<32x32xbf16>, vector<8x32xf32> -> vector<8x32xf32>
    %c0_27 = arith.constant 0 : index
    %c0_28 = arith.constant 0 : index
    %88 = vector.load %arg8[%c0_27, %c0_28] : memref<1x32xf32, #tpu.memory_space<vmem>>, vector<1x32xf32>
    %89 = vector.broadcast %88 : vector<1x32xf32> to vector<8x32xf32>
    %90 = arith.addf %87, %89 : vector<8x32xf32>
    %91 = arith.addf %1, %90 : vector<8x32xf32>
    %c0_29 = arith.constant 0 : index
    %c0_30 = arith.constant 0 : index
    %92 = vector.load %arg9[%c0_29, %c0_30] : memref<1x32xf32, #tpu.memory_space<vmem>>, vector<1x32xf32>
    %c0_31 = arith.constant 0 : index
    %c0_32 = arith.constant 0 : index
    %93 = vector.load %arg10[%c0_31, %c0_32] : memref<1x32xf32, #tpu.memory_space<vmem>>, vector<1x32xf32>
    %cst_33 = arith.constant dense<0.000000e+00> : vector<8xf32>
    %94 = vector.multi_reduction <add>, %91, %cst_33 [1] : vector<8x32xf32> to vector<8xf32>
    %95 = vector.shape_cast %94 : vector<8xf32> to vector<8x1xf32>
    %cst_34 = arith.constant 3.200000e+01 : f32
    %96 = vector.broadcast %cst_34 : f32 to vector<8x1xf32>
    %97 = arith.divf %95, %96 : vector<8x1xf32>
    %98 = vector.broadcast %97 : vector<8x1xf32> to vector<8x32xf32>
    %99 = arith.subf %91, %98 : vector<8x32xf32>
    %100 = arith.mulf %99, %99 : vector<8x32xf32>
    %cst_35 = arith.constant dense<0.000000e+00> : vector<8xf32>
    %101 = vector.multi_reduction <add>, %100, %cst_35 [1] : vector<8x32xf32> to vector<8xf32>
    %102 = vector.shape_cast %101 : vector<8xf32> to vector<8x1xf32>
    %cst_36 = arith.constant 3.200000e+01 : f32
    %103 = vector.broadcast %cst_36 : f32 to vector<8x1xf32>
    %104 = arith.divf %102, %103 : vector<8x1xf32>
    %105 = vector.broadcast %97 : vector<8x1xf32> to vector<8x32xf32>
    %106 = arith.subf %91, %105 : vector<8x32xf32>
    %cst_37 = arith.constant 9.99999974E-6 : f32
    %107 = vector.broadcast %cst_37 : f32 to vector<8x1xf32>
    %108 = arith.addf %104, %107 : vector<8x1xf32>
    %109 = math.rsqrt %108 : vector<8x1xf32>
    %110 = vector.broadcast %109 : vector<8x1xf32> to vector<8x32xf32>
    %111 = arith.mulf %106, %110 : vector<8x32xf32>
    %112 = vector.broadcast %92 : vector<1x32xf32> to vector<8x32xf32>
    %113 = arith.mulf %111, %112 : vector<8x32xf32>
    %114 = vector.broadcast %93 : vector<1x32xf32> to vector<8x32xf32>
    %115 = arith.addf %113, %114 : vector<8x32xf32>
    %116 = arith.truncf %115 : vector<8x32xf32> to vector<8x32xbf16>
    %c0_38 = arith.constant 0 : index
    %c0_39 = arith.constant 0 : index
    %117 = vector.load %arg11[%c0_38, %c0_39] : memref<32x64xbf16, #tpu.memory_space<vmem>>, vector<32x64xbf16>
    %cst_40 = arith.constant dense<0.000000e+00> : vector<8x64xf32>
    %118 = tpu.matmul %116, %117, %cst_40 {dimension_numbers = #tpu.dot_dimension_numbers<[1], [0], [0], [1], [0, 0, 1, 1], [], []>} : vector<8x32xbf16>, vector<32x64xbf16>, vector<8x64xf32> -> vector<8x64xf32>
    %c0_41 = arith.constant 0 : index
    %c0_42 = arith.constant 0 : index
    %119 = vector.load %arg12[%c0_41, %c0_42] : memref<1x64xf32, #tpu.memory_space<vmem>>, vector<1x64xf32>
    %120 = vector.broadcast %119 : vector<1x64xf32> to vector<8x64xf32>
    %121 = arith.addf %118, %120 : vector<8x64xf32>
    %cst_43 = arith.constant 0.000000e+00 : f32
    %122 = vector.broadcast %cst_43 : f32 to vector<8x64xf32>
    %123 = arith.maximumf %121, %122 : vector<8x64xf32>
    %124 = arith.truncf %123 : vector<8x64xf32> to vector<8x64xbf16>
    %c0_44 = arith.constant 0 : index
    %c0_45 = arith.constant 0 : index
    %125 = vector.load %arg13[%c0_44, %c0_45] : memref<64x32xbf16, #tpu.memory_space<vmem>>, vector<64x32xbf16>
    %cst_46 = arith.constant dense<0.000000e+00> : vector<8x32xf32>
    %126 = tpu.matmul %124, %125, %cst_46 {dimension_numbers = #tpu.dot_dimension_numbers<[1], [0], [0], [1], [0, 0, 1, 1], [], []>} : vector<8x64xbf16>, vector<64x32xbf16>, vector<8x32xf32> -> vector<8x32xf32>
    %c0_47 = arith.constant 0 : index
    %c0_48 = arith.constant 0 : index
    %127 = vector.load %arg14[%c0_47, %c0_48] : memref<1x32xf32, #tpu.memory_space<vmem>>, vector<1x32xf32>
    %128 = vector.broadcast %127 : vector<1x32xf32> to vector<8x32xf32>
    %129 = arith.addf %126, %128 : vector<8x32xf32>
    %130 = arith.addf %91, %129 : vector<8x32xf32>
    %131 = vector.shape_cast %130 : vector<8x32xf32> to vector<1x8x32xf32>
    %c0_49 = arith.constant 0 : index
    %c0_50 = arith.constant 0 : index
    %c0_51 = arith.constant 0 : index
    %132 = vector.load %arg15[%c0_49, %c0_50, %c0_51] : memref<1x8x32xf32, #tpu.memory_space<vmem>>, vector<1x8x32xf32>
    tpu.vector_store %arg15[%c0_49, %c0_50, %c0_51], %131 {strides = array<i32>} : memref<1x8x32xf32, #tpu.memory_space<vmem>>, vector<1x8x32xf32>,
    return
  }
  func.func @transform_0(%arg0: i32) -> (i32, i32, i32) {
    %c0_i32 = arith.constant 0 : i32
    %c0_i32_0 = arith.constant 0 : i32
    %c0_i32_1 = arith.constant 0 : i32
    return %arg0, %c0_i32, %c0_i32_0 : i32, i32, i32
  }
  func.func @transform_1(%arg0: i32) -> (i32, i32, i32) {
    %c0_i32 = arith.constant 0 : i32
    %c0_i32_0 = arith.constant 0 : i32
    %c0_i32_1 = arith.constant 0 : i32
    return %arg0, %c0_i32, %c0_i32_0 : i32, i32, i32
  }
  func.func @transform_2(%arg0: i32) -> (i32, i32) {
    %c0_i32 = arith.constant 0 : i32
    %c0_i32_0 = arith.constant 0 : i32
    %c0_i32_1 = arith.constant 0 : i32
    return %c0_i32, %c0_i32_0 : i32, i32
  }
  func.func @transform_3(%arg0: i32) -> (i32, i32) {
    %c0_i32 = arith.constant 0 : i32
    %c0_i32_0 = arith.constant 0 : i32
    %c0_i32_1 = arith.constant 0 : i32
    return %c0_i32, %c0_i32_0 : i32, i32
  }
  func.func @transform_4(%arg0: i32) -> (i32, i32) {
    %c0_i32 = arith.constant 0 : i32
    %c0_i32_0 = arith.constant 0 : i32
    %c0_i32_1 = arith.constant 0 : i32
    return %c0_i32, %c0_i32_0 : i32, i32
  }
  func.func @transform_5(%arg0: i32) -> (i32, i32) {
    %c0_i32 = arith.constant 0 : i32
    %c0_i32_0 = arith.constant 0 : i32
    %c0_i32_1 = arith.constant 0 : i32
    return %c0_i32, %c0_i32_0 : i32, i32
  }
  func.func @transform_6(%arg0: i32) -> (i32, i32) {
    %c0_i32 = arith.constant 0 : i32
    %c0_i32_0 = arith.constant 0 : i32
    %c0_i32_1 = arith.constant 0 : i32
    return %c0_i32, %c0_i32_0 : i32, i32
  }
  func.func @transform_7(%arg0: i32) -> (i32, i32) {
    %c0_i32 = arith.constant 0 : i32
    %c0_i32_0 = arith.constant 0 : i32
    %c0_i32_1 = arith.constant 0 : i32
    return %c0_i32, %c0_i32_0 : i32, i32
  }
  func.func @transform_8(%arg0: i32) -> (i32, i32) {
    %c0_i32 = arith.constant 0 : i32
    %c0_i32_0 = arith.constant 0 : i32
    %c0_i32_1 = arith.constant 0 : i32
    return %c0_i32, %c0_i32_0 : i32, i32
  }
  func.func @transform_9(%arg0: i32) -> (i32, i32) {
    %c0_i32 = arith.constant 0 : i32
    %c0_i32_0 = arith.constant 0 : i32
    %c0_i32_1 = arith.constant 0 : i32
    return %c0_i32, %c0_i32_0 : i32, i32
  }
  func.func @transform_10(%arg0: i32) -> (i32, i32) {
    %c0_i32 = arith.constant 0 : i32
    %c0_i32_0 = arith.constant 0 : i32
    %c0_i32_1 = arith.constant 0 : i32
    return %c0_i32, %c0_i32_0 : i32, i32
  }
  func.func @transform_11(%arg0: i32) -> (i32, i32) {
    %c0_i32 = arith.constant 0 : i32
    %c0_i32_0 = arith.constant 0 : i32
    %c0_i32_1 = arith.constant 0 : i32
    return %c0_i32, %c0_i32_0 : i32, i32
  }
  func.func @transform_12(%arg0: i32) -> (i32, i32) {
    %c0_i32 = arith.constant 0 : i32
    %c0_i32_0 = arith.constant 0 : i32
    %c0_i32_1 = arith.constant 0 : i32
    return %c0_i32, %c0_i32_0 : i32, i32
  }
  func.func @transform_13(%arg0: i32) -> (i32, i32) {
    %c0_i32 = arith.constant 0 : i32
    %c0_i32_0 = arith.constant 0 : i32
    %c0_i32_1 = arith.constant 0 : i32
    return %c0_i32, %c0_i32_0 : i32, i32
  }
  func.func @transform_14(%arg0: i32) -> (i32, i32, i32) {
    %c0_i32 = arith.constant 0 : i32
    %c0_i32_0 = arith.constant 0 : i32
    %c0_i32_1 = arith.constant 0 : i32
    return %arg0, %c0_i32, %c0_i32_0 : i32, i32, i32
  }
}

</mosaic_0001>

<llo_original>
// kernel: tpu_custom_call.1
$region0: #{tpu_custom_call.1}
  #allocation0 [shape = 'u32[]', space=smem, size = 0x4, offset = 0x4, fixed_abs, tag = 'smem constant byte address 0x4 - core index']
  #allocation1 [shape = 'u32[144,128]{1,0:T(1,128)}', space=vmem, size = 0x12000, scoped, tag = 'internal scratch']
  %s0 = inlined_call_operand.vmem [shape: f32[2,8,32], index: 0, kind: input, shape index: {}]
  %s1 = inlined_call_operand.vmem [shape: s32[2,1,1], index: 1, kind: input, shape index: {}]
  %s2 = inlined_call_operand.vmem [shape: f32[1,32], index: 2, kind: input, shape index: {}]
  %s3 = inlined_call_operand.hbm [shape: f32[1,32], index: 3, kind: input, shape index: {}]
  %s4 = inlined_call_operand.vmem [shape: bf16[32,96], index: 4, kind: input, shape index: {}]
  %s5 = inlined_call_operand.hbm [shape: f32[1,96], index: 5, kind: input, shape index: {}]
  %s6 = inlined_call_operand.vmem [shape: bf16[32,32], index: 6, kind: input, shape index: {}]
  %s7 = inlined_call_operand.hbm [shape: f32[1,32], index: 7, kind: input, shape index: {}]
  %s8 = inlined_call_operand.hbm [shape: f32[1,32], index: 8, kind: input, shape index: {}]
  %s9 = inlined_call_operand.vmem [shape: f32[1,32], index: 9, kind: input, shape index: {}]
  %s10 = inlined_call_operand.vmem [shape: bf16[32,64], index: 10, kind: input, shape index: {}]
  %s11 = inlined_call_operand.vmem [shape: f32[1,64], index: 11, kind: input, shape index: {}]
  %s12 = inlined_call_operand.vmem [shape: bf16[64,32], index: 12, kind: input, shape index: {}]
  %s13 = inlined_call_operand.vmem [shape: f32[1,32], index: 13, kind: input, shape index: {}]
  %s14 = inlined_call_operand.hbm [shape: f32[2,8,32], index: 14, kind: output, shape index: {}]
  %s15 = sld [smem:[#allocation0]]
  $region105: #{tpu_custom_call.1} parent=0
    _
  %s17 = ssub.s32 1, %s15
  %s18 = scalar_select 0, %s17, %s15
  $region1: #{tpu_custom_call.1} parent=0
    #allocation2 [shape = 'u8[512]{0}', space=vmem, size = 0x400, scoped, tag = 'input window, operand 3, single buffered']
    #allocation3 [shape = 's32[2]{0}', space=sflag, size = 0x8, scoped, tag = 'scoped memory for tpu_custom_call.1']
    #allocation4 [shape = 's32[2]{0}', space=sflag, size = 0x8, scoped, tag = 'scoped memory for tpu_custom_call.1']
    #allocation5 [shape = 'u8[512]{0}', space=vmem, size = 0x400, scoped, tag = 'input window, operand 5, single buffered']
    #allocation6 [shape = 's32[1]{0}', space=sflag, size = 0x4, scoped, tag = 'scoped memory for tpu_custom_call.1']
    #allocation7 [shape = 'u8[512]{0}', space=vmem, size = 0x400, scoped, tag = 'input window, operand 7, single buffered']
    #allocation8 [shape = 'u8[512]{0}', space=vmem, size = 0x400, scoped, tag = 'input window, operand 8, single buffered']
    #allocation9 [shape = 's32[1]{0}', space=sflag, size = 0x4, scoped, tag = 'scoped memory for tpu_custom_call.1']
    #allocation10 [shape = 'u8[8192]{0}', space=vmem, size = 0x2000, scoped, tag = 'output window, operand 0']
    %19 = vsyncpa [#allocation3], 0
    %20 = vsyncpa [#allocation6], 0
    %21 = vsyncpa [#allocation9], 0
    %22 = vsyncpa [#allocation4], 0
    %s23 = scalar_lea.sflag [#allocation4], 1
    %24 = vsyncpa %s23, 0
    loop: start=0, step=1, limit=4
    $region2: #{tpu_custom_call.1} parent=1 // loop_pre_header
      _
    $region3: #{tpu_custom_call.1} parent=1 // loop_header
      %s26 = sphi 0, %s30
      %p27 = scmp.ge.s32.totalorder %s26, 4
      %s36 = sphi 0, %s38
      %s39 = sphi 0, %s36
      %s40 = sphi 0, %s39
      %s56 = sphi 0, %s40
      %s62 = sphi 0, %s64
      %s65 = sphi 0, %s62
      %s66 = sphi 0, %s65
      %s82 = sphi 0, %s66
      %s86 = sphi 0, %s86
      %s88 = sphi 0, %s86
      %s89 = sphi 0, %s88
      %s103 = sphi 0, %s89
      %s107 = sphi 0, %s107
      %s109 = sphi 0, %s107
      %s110 = sphi 0, %s109
      %s124 = sphi 0, %s110
      %s128 = sphi 0, %s128
      %s130 = sphi 0, %s128
      %s131 = sphi 0, %s130
      %s145 = sphi 0, %s131
      %s149 = sphi 0, %s149
      %s151 = sphi 0, %s149
      %s152 = sphi 0, %s151
      %s166 = sphi 0, %s152
      %s170 = sphi 0, %s170
      %s172 = sphi 0, %s170
      %s173 = sphi 0, %s172
      %s187 = sphi 0, %s173
      %s191 = sphi 0, %s191
      %s193 = sphi 0, %s191
      %s194 = sphi 0, %s193
      %s208 = sphi 0, %s194
      %s212 = sphi 0, %s212
      %s214 = sphi 0, %s212
      %s215 = sphi 0, %s214
      %s229 = sphi 0, %s215
      %s233 = sphi 0, %s233
      %s235 = sphi 0, %s233
      %s236 = sphi 0, %s235
      %s250 = sphi 0, %s236
      %s254 = sphi 0, %s254
      %s256 = sphi 0, %s254
      %s257 = sphi 0, %s256
      %s271 = sphi 0, %s257
      %s275 = sphi 0, %s275
      %s277 = sphi 0, %s275
      %s278 = sphi 0, %s277
      %s292 = sphi 0, %s278
      %s296 = sphi 0, %s296
      %s298 = sphi 0, %s296
      %s299 = sphi 0, %s298
      %s313 = sphi 0, %s299
      %s317 = sphi 0, %s317
      %s319 = sphi 0, %s317
      %s320 = sphi 0, %s319
      %s334 = sphi 0, %s320
      %s340 = sphi 0, %s342
      %s343 = sphi 0, %s340
      %s344 = sphi 0, %s343
      %s360 = sphi 0, %s344
    $region4: #{tpu_custom_call.1} parent=1 // loop_header_branch
      %29 = sbr.rel (%p27) target = $region8
    $region5: #{tpu_custom_call.1} parent=1 // loop_body
      %s31 = ssub.s32 %s26, 1
      %s32 = ssub.s32 %s26, 2
      %s33 = sadd.s32 %s26, 1
      %s34 = ssub.s32 %s26, %s33
      %p35 = scmp.eq.s32.totalorder %s34, 0
      %s37 = sadd.s32 %s36, 1
      %s38 = scalar_select %p35, %s36, %s37
      %p41 = pneg %p35
      %p42 = scmp.eq.s32.totalorder %s26, 1
      %p43 = por %p41, %p42
      %p44 = scmp.ne.s32.totalorder %s36, %s39
      %p45 = scmp.eq.s32.totalorder %s26, 0
      %p46 = por %p44, %p45
      %p47 = scmp.ne.s32.totalorder %s36, %s39
      %p48 = scmp.eq.s32.totalorder %s31, 1
      %p49 = por %p47, %p48
      %p50 = scmp.ne.s32.totalorder %s39, %s40
      %p51 = scmp.eq.s32.totalorder %s31, 0
      %p52 = por %p50, %p51
      %p53 = scmp.ne.s32.totalorder %s39, %s40
      %p54 = scmp.eq.s32.totalorder %s32, 1
      %p55 = por %p53, %p54
      %p57 = scmp.ne.s32.totalorder %s40, %s56
      %p58 = scmp.eq.s32.totalorder %s32, 0
      %p59 = por %p57, %p58
      %s60 = ssub.s32 %s26, %s33
      %p61 = scmp.eq.s32.totalorder %s60, 0
      %s63 = sadd.s32 %s62, 1
      %s64 = scalar_select %p61, %s62, %s63
      %p67 = pneg %p61
      %p68 = scmp.eq.s32.totalorder %s26, 1
      %p69 = por %p67, %p68
      %p70 = scmp.ne.s32.totalorder %s62, %s65
      %p71 = scmp.eq.s32.totalorder %s26, 0
      %p72 = por %p70, %p71
      %p73 = scmp.ne.s32.totalorder %s62, %s65
      %p74 = scmp.eq.s32.totalorder %s31, 1
      %p75 = por %p73, %p74
      %p76 = scmp.ne.s32.totalorder %s65, %s66
      %p77 = scmp.eq.s32.totalorder %s31, 0
      %p78 = por %p76, %p77
      %p79 = scmp.ne.s32.totalorder %s65, %s66
      %p80 = scmp.eq.s32.totalorder %s32, 1
      %p81 = por %p79, %p80
      %p83 = scmp.ne.s32.totalorder %s66, %s82
      %p84 = scmp.eq.s32.totalorder %s32, 0
      %p85 = por %p83, %p84
      %s87 = sadd.s32 %s86, 1
      %p90 = scmp.eq.s32.totalorder %s26, 1
      %p91 = scmp.ne.s32.totalorder %s86, %s88
      %p92 = scmp.eq.s32.totalorder %s26, 0
      %p93 = por %p91, %p92
      %p94 = scmp.ne.s32.totalorder %s86, %s88
      %p95 = scmp.eq.s32.totalorder %s31, 1
      %p96 = por %p94, %p95
      %p97 = scmp.ne.s32.totalorder %s88, %s89
      %p98 = scmp.eq.s32.totalorder %s31, 0
      %p99 = por %p97, %p98
      %p100 = scmp.ne.s32.totalorder %s88, %s89
      %p101 = scmp.eq.s32.totalorder %s32, 1
      %p102 = por %p100, %p101
      %p104 = scmp.ne.s32.totalorder %s89, %s103
      %p105 = scmp.eq.s32.totalorder %s32, 0
      %p106 = por %p104, %p105
      %s108 = sadd.s32 %s107, 1
      %p111 = scmp.eq.s32.totalorder %s26, 1
      %p112 = scmp.ne.s32.totalorder %s107, %s109
      %p113 = scmp.eq.s32.totalorder %s26, 0
      %p114 = por %p112, %p113
      %p115 = scmp.ne.s32.totalorder %s107, %s109
      %p116 = scmp.eq.s32.totalorder %s31, 1
      %p117 = por %p115, %p116
      %p118 = scmp.ne.s32.totalorder %s109, %s110
      %p119 = scmp.eq.s32.totalorder %s31, 0
      %p120 = por %p118, %p119
      %p121 = scmp.ne.s32.totalorder %s109, %s110
      %p122 = scmp.eq.s32.totalorder %s32, 1
      %p123 = por %p121, %p122
      %p125 = scmp.ne.s32.totalorder %s110, %s124
      %p126 = scmp.eq.s32.totalorder %s32, 0
      %p127 = por %p125, %p126
      %s129 = sadd.s32 %s128, 1
      %p132 = scmp.eq.s32.totalorder %s26, 1
      %p133 = scmp.ne.s32.totalorder %s128, %s130
      %p134 = scmp.eq.s32.totalorder %s26, 0
      %p135 = por %p133, %p134
      %p136 = scmp.ne.s32.totalorder %s128, %s130
      %p137 = scmp.eq.s32.totalorder %s31, 1
      %p138 = por %p136, %p137
      %p139 = scmp.ne.s32.totalorder %s130, %s131
      %p140 = scmp.eq.s32.totalorder %s31, 0
      %p141 = por %p139, %p140
      %p142 = scmp.ne.s32.totalorder %s130, %s131
      %p143 = scmp.eq.s32.totalorder %s32, 1
      %p144 = por %p142, %p143
      %p146 = scmp.ne.s32.totalorder %s131, %s145
      %p147 = scmp.eq.s32.totalorder %s32, 0
      %p148 = por %p146, %p147
      %s150 = sadd.s32 %s149, 1
      %p153 = scmp.eq.s32.totalorder %s26, 1
      %p154 = scmp.ne.s32.totalorder %s149, %s151
      %p155 = scmp.eq.s32.totalorder %s26, 0
      %p156 = por %p154, %p155
      %p157 = scmp.ne.s32.totalorder %s149, %s151
      %p158 = scmp.eq.s32.totalorder %s31, 1
      %p159 = por %p157, %p158
      %p160 = scmp.ne.s32.totalorder %s151, %s152
      %p161 = scmp.eq.s32.totalorder %s31, 0
      %p162 = por %p160, %p161
      %p163 = scmp.ne.s32.totalorder %s151, %s152
      %p164 = scmp.eq.s32.totalorder %s32, 1
      %p165 = por %p163, %p164
      %p167 = scmp.ne.s32.totalorder %s152, %s166
      %p168 = scmp.eq.s32.totalorder %s32, 0
      %p169 = por %p167, %p168
      %s171 = sadd.s32 %s170, 1
      %p174 = scmp.eq.s32.totalorder %s26, 1
      %p175 = scmp.ne.s32.totalorder %s170, %s172
      %p176 = scmp.eq.s32.totalorder %s26, 0
      %p177 = por %p175, %p176
      %p178 = scmp.ne.s32.totalorder %s170, %s172
      %p179 = scmp.eq.s32.totalorder %s31, 1
      %p180 = por %p178, %p179
      %p181 = scmp.ne.s32.totalorder %s172, %s173
      %p182 = scmp.eq.s32.totalorder %s31, 0
      %p183 = por %p181, %p182
      %p184 = scmp.ne.s32.totalorder %s172, %s173
      %p185 = scmp.eq.s32.totalorder %s32, 1
      %p186 = por %p184, %p185
      %p188 = scmp.ne.s32.totalorder %s173, %s187
      %p189 = scmp.eq.s32.totalorder %s32, 0
      %p190 = por %p188, %p189
      %s192 = sadd.s32 %s191, 1
      %p195 = scmp.eq.s32.totalorder %s26, 1
      %p196 = scmp.ne.s32.totalorder %s191, %s193
      %p197 = scmp.eq.s32.totalorder %s26, 0
      %p198 = por %p196, %p197
      %p199 = scmp.ne.s32.totalorder %s191, %s193
      %p200 = scmp.eq.s32.totalorder %s31, 1
      %p201 = por %p199, %p200
      %p202 = scmp.ne.s32.totalorder %s193, %s194
      %p203 = scmp.eq.s32.totalorder %s31, 0
      %p204 = por %p202, %p203
      %p205 = scmp.ne.s32.totalorder %s193, %s194
      %p206 = scmp.eq.s32.totalorder %s32, 1
      %p207 = por %p205, %p206
      %p209 = scmp.ne.s32.totalorder %s194, %s208
      %p210 = scmp.eq.s32.totalorder %s32, 0
      %p211 = por %p209, %p210
      %s213 = sadd.s32 %s212, 1
      %p216 = scmp.eq.s32.totalorder %s26, 1
      %p217 = scmp.ne.s32.totalorder %s212, %s214
      %p218 = scmp.eq.s32.totalorder %s26, 0
      %p219 = por %p217, %p218
      %p220 = scmp.ne.s32.totalorder %s212, %s214
      %p221 = scmp.eq.s32.totalorder %s31, 1
      %p222 = por %p220, %p221
      %p223 = scmp.ne.s32.totalorder %s214, %s215
      %p224 = scmp.eq.s32.totalorder %s31, 0
      %p225 = por %p223, %p224
      %p226 = scmp.ne.s32.totalorder %s214, %s215
      %p227 = scmp.eq.s32.totalorder %s32, 1
      %p228 = por %p226, %p227
      %p230 = scmp.ne.s32.totalorder %s215, %s229
      %p231 = scmp.eq.s32.totalorder %s32, 0
      %p232 = por %p230, %p231
      %s234 = sadd.s32 %s233, 1
      %p237 = scmp.eq.s32.totalorder %s26, 1
      %p238 = scmp.ne.s32.totalorder %s233, %s235
      %p239 = scmp.eq.s32.totalorder %s26, 0
      %p240 = por %p238, %p239
      %p241 = scmp.ne.s32.totalorder %s233, %s235
      %p242 = scmp.eq.s32.totalorder %s31, 1
      %p243 = por %p241, %p242
      %p244 = scmp.ne.s32.totalorder %s235, %s236
      %p245 = scmp.eq.s32.totalorder %s31, 0
      %p246 = por %p244, %p245
      %p247 = scmp.ne.s32.totalorder %s235, %s236
      %p248 = scmp.eq.s32.totalorder %s32, 1
      %p249 = por %p247, %p248
      %p251 = scmp.ne.s32.totalorder %s236, %s250
      %p252 = scmp.eq.s32.totalorder %s32, 0
      %p253 = por %p251, %p252
      %s255 = sadd.s32 %s254, 1
      %p258 = scmp.eq.s32.totalorder %s26, 1
      %p259 = scmp.ne.s32.totalorder %s254, %s256
      %p260 = scmp.eq.s32.totalorder %s26, 0
      %p261 = por %p259, %p260
      %p262 = scmp.ne.s32.totalorder %s254, %s256
      %p263 = scmp.eq.s32.totalorder %s31, 1
      %p264 = por %p262, %p263
      %p265 = scmp.ne.s32.totalorder %s256, %s257
      %p266 = scmp.eq.s32.totalorder %s31, 0
      %p267 = por %p265, %p266
      %p268 = scmp.ne.s32.totalorder %s256, %s257
      %p269 = scmp.eq.s32.totalorder %s32, 1
      %p270 = por %p268, %p269
      %p272 = scmp.ne.s32.totalorder %s257, %s271
      %p273 = scmp.eq.s32.totalorder %s32, 0
      %p274 = por %p272, %p273
      %s276 = sadd.s32 %s275, 1
      %p279 = scmp.eq.s32.totalorder %s26, 1
      %p280 = scmp.ne.s32.totalorder %s275, %s277
      %p281 = scmp.eq.s32.totalorder %s26, 0
      %p282 = por %p280, %p281
      %p283 = scmp.ne.s32.totalorder %s275, %s277
      %p284 = scmp.eq.s32.totalorder %s31, 1
      %p285 = por %p283, %p284
      %p286 = scmp.ne.s32.totalorder %s277, %s278
      %p287 = scmp.eq.s32.totalorder %s31, 0
      %p288 = por %p286, %p287
      %p289 = scmp.ne.s32.totalorder %s277, %s278
      %p290 = scmp.eq.s32.totalorder %s32, 1
      %p291 = por %p289, %p290
      %p293 = scmp.ne.s32.totalorder %s278, %s292
      %p294 = scmp.eq.s32.totalorder %s32, 0
      %p295 = por %p293, %p294
      %s297 = sadd.s32 %s296, 1
      %p300 = scmp.eq.s32.totalorder %s26, 1
      %p301 = scmp.ne.s32.totalorder %s296, %s298
      %p302 = scmp.eq.s32.totalorder %s26, 0
      %p303 = por %p301, %p302
      %p304 = scmp.ne.s32.totalorder %s296, %s298
      %p305 = scmp.eq.s32.totalorder %s31, 1
      %p306 = por %p304, %p305
      %p307 = scmp.ne.s32.totalorder %s298, %s299
      %p308 = scmp.eq.s32.totalorder %s31, 0
      %p309 = por %p307, %p308
      %p310 = scmp.ne.s32.totalorder %s298, %s299
      %p311 = scmp.eq.s32.totalorder %s32, 1
      %p312 = por %p310, %p311
      %p314 = scmp.ne.s32.totalorder %s299, %s313
      %p315 = scmp.eq.s32.totalorder %s32, 0
      %p316 = por %p314, %p315
      %s318 = sadd.s32 %s317, 1
      %p321 = scmp.eq.s32.totalorder %s26, 1
      %p322 = scmp.ne.s32.totalorder %s317, %s319
      %p323 = scmp.eq.s32.totalorder %s26, 0
      %p324 = por %p322, %p323
      %p325 = scmp.ne.s32.totalorder %s317, %s319
      %p326 = scmp.eq.s32.totalorder %s31, 1
      %p327 = por %p325, %p326
      %p328 = scmp.ne.s32.totalorder %s319, %s320
      %p329 = scmp.eq.s32.totalorder %s31, 0
      %p330 = por %p328, %p329
      %p331 = scmp.ne.s32.totalorder %s319, %s320
      %p332 = scmp.eq.s32.totalorder %s32, 1
      %p333 = por %p331, %p332
      %p335 = scmp.ne.s32.totalorder %s320, %s334
      %p336 = scmp.eq.s32.totalorder %s32, 0
      %p337 = por %p335, %p336
      %s338 = ssub.s32 %s26, %s33
      %p339 = scmp.eq.s32.totalorder %s338, 0
      %s341 = sadd.s32 %s340, 1
      %s342 = scalar_select %p339, %s340, %s341
      %p345 = pneg %p339
      %p346 = scmp.eq.s32.totalorder %s26, 1
      %p347 = por %p345, %p346
      %p348 = scmp.ne.s32.totalorder %s340, %s343
      %p349 = scmp.eq.s32.totalorder %s26, 0
      %p350 = por %p348, %p349
      %p351 = scmp.ne.s32.totalorder %s340, %s343
      %p352 = scmp.eq.s32.totalorder %s31, 1
      %p353 = por %p351, %p352
      %p354 = scmp.ne.s32.totalorder %s343, %s344
      %p355 = scmp.eq.s32.totalorder %s31, 0
      %p356 = por %p354, %p355
      %p357 = scmp.ne.s32.totalorder %s343, %s344
      %p358 = scmp.eq.s32.totalorder %s32, 1
      %p359 = por %p357, %p358
      %p361 = scmp.ne.s32.totalorder %s344, %s360
      %p362 = scmp.eq.s32.totalorder %s32, 0
      %p363 = por %p361, %p362
      %p364 = scmp.le.s32.totalorder 1, %s26
      %p365 = scmp.lt.s32.totalorder %s26, 3
      %p366 = pnand %p364, %p365
      %p367 = pneg %p366
      // Predicated region
      $region9: #{tpu_custom_call.1} parent=5 // pred_check
        _
      $region10: #{tpu_custom_call.1} parent=5 // pred_check_branch
        %369 = sbr.rel (%p366) target = $region12
      $region11: #{tpu_custom_call.1} parent=5 // pred_region
        %s370 = ssub.s32 %s26, 1
        // Predicated region
        $region13: #{tpu_custom_call.1} parent=11 // pred_check
          %p371 = pneg %p99
        $region14: #{tpu_custom_call.1} parent=11 // pred_check_branch
          %373 = sbr.rel (%p371) target = $region16
        $region15: #{tpu_custom_call.1} parent=11 // pred_region
          _
        $region16: #{tpu_custom_call.1} parent=11 // pred_fallthru
          _
        // Predicated region
        $region17: #{tpu_custom_call.1} parent=11 // pred_check
          %p374 = pneg %p120
        $region18: #{tpu_custom_call.1} parent=11 // pred_check_branch
          %376 = sbr.rel (%p374) target = $region20
        $region19: #{tpu_custom_call.1} parent=11 // pred_region
          %s378 = ssub.s32 16, 16
          %379 = vsyncadd [#allocation3], %s378
          %s381 = sshll.u32 [#allocation2], 4
          %s382 = int_to_ptr.vmem [resolvable:$true] %s381
          %384 = dma.hbm_to_vmem [thread:$0]  %s3, 16, %s382, [#allocation3]
        $region20: #{tpu_custom_call.1} parent=11 // pred_fallthru
          _
        // Predicated region
        $region21: #{tpu_custom_call.1} parent=11 // pred_check
          %p385 = pneg %p141
        $region22: #{tpu_custom_call.1} parent=11 // pred_check_branch
          %387 = sbr.rel (%p385) target = $region24
        $region23: #{tpu_custom_call.1} parent=11 // pred_region
          _
        $region24: #{tpu_custom_call.1} parent=11 // pred_fallthru
          _
        // Predicated region
        $region25: #{tpu_custom_call.1} parent=11 // pred_check
          %p388 = pneg %p162
        $region26: #{tpu_custom_call.1} parent=11 // pred_check_branch
          %390 = sbr.rel (%p388) target = $region28
        $region27: #{tpu_custom_call.1} parent=11 // pred_region
          %s392 = ssub.s32 16, 16
          %393 = vsyncadd [#allocation6], %s392
          %s395 = sshll.u32 [#allocation5], 4
          %s396 = int_to_ptr.vmem [resolvable:$true] %s395
          %398 = dma.hbm_to_vmem [thread:$0]  %s5, 16, %s396, [#allocation6]
        $region28: #{tpu_custom_call.1} parent=11 // pred_fallthru
          _
        // Predicated region
        $region29: #{tpu_custom_call.1} parent=11 // pred_check
          %p399 = pneg %p183
        $region30: #{tpu_custom_call.1} parent=11 // pred_check_branch
          %401 = sbr.rel (%p399) target = $region32
        $region31: #{tpu_custom_call.1} parent=11 // pred_region
          _
        $region32: #{tpu_custom_call.1} parent=11 // pred_fallthru
          _
        // Predicated region
        $region33: #{tpu_custom_call.1} parent=11 // pred_check
          %p402 = pneg %p204
        $region34: #{tpu_custom_call.1} parent=11 // pred_check_branch
          %404 = sbr.rel (%p402) target = $region36
        $region35: #{tpu_custom_call.1} parent=11 // pred_region
          %s406 = ssub.s32 16, 16
          %407 = vsyncadd [#allocation6], %s406
          %s409 = sshll.u32 [#allocation7], 4
          %s410 = int_to_ptr.vmem [resolvable:$true] %s409
          %412 = dma.hbm_to_vmem [thread:$0]  %s7, 16, %s410, [#allocation6]
        $region36: #{tpu_custom_call.1} parent=11 // pred_fallthru
          _
        // Predicated region
        $region37: #{tpu_custom_call.1} parent=11 // pred_check
          %p413 = pneg %p225
        $region38: #{tpu_custom_call.1} parent=11 // pred_check_branch
          %415 = sbr.rel (%p413) target = $region40
        $region39: #{tpu_custom_call.1} parent=11 // pred_region
          %s417 = ssub.s32 16, 16
          %418 = vsyncadd [#allocation9], %s417
          %s420 = sshll.u32 [#allocation8], 4
          %s421 = int_to_ptr.vmem [resolvable:$true] %s420
          %423 = dma.hbm_to_vmem [thread:$0]  %s8, 16, %s421, [#allocation9]
        $region40: #{tpu_custom_call.1} parent=11 // pred_fallthru
          _
        // Predicated region
        $region41: #{tpu_custom_call.1} parent=11 // pred_check
          %p424 = pneg %p246
        $region42: #{tpu_custom_call.1} parent=11 // pred_check_branch
          %426 = sbr.rel (%p424) target = $region44
        $region43: #{tpu_custom_call.1} parent=11 // pred_region
          _
        $region44: #{tpu_custom_call.1} parent=11 // pred_fallthru
          _
        // Predicated region
        $region45: #{tpu_custom_call.1} parent=11 // pred_check
          %p427 = pneg %p267
        $region46: #{tpu_custom_call.1} parent=11 // pred_check_branch
          %429 = sbr.rel (%p427) target = $region48
        $region47: #{tpu_custom_call.1} parent=11 // pred_region
          _
        $region48: #{tpu_custom_call.1} parent=11 // pred_fallthru
          _
        // Predicated region
        $region49: #{tpu_custom_call.1} parent=11 // pred_check
          %p430 = pneg %p288
        $region50: #{tpu_custom_call.1} parent=11 // pred_check_branch
          %432 = sbr.rel (%p430) target = $region52
        $region51: #{tpu_custom_call.1} parent=11 // pred_region
          _
        $region52: #{tpu_custom_call.1} parent=11 // pred_fallthru
          _
        // Predicated region
        $region53: #{tpu_custom_call.1} parent=11 // pred_check
          %p433 = pneg %p309
        $region54: #{tpu_custom_call.1} parent=11 // pred_check_branch
          %435 = sbr.rel (%p433) target = $region56
        $region55: #{tpu_custom_call.1} parent=11 // pred_region
          _
        $region56: #{tpu_custom_call.1} parent=11 // pred_fallthru
          _
        // Predicated region
        $region57: #{tpu_custom_call.1} parent=11 // pred_check
          %p436 = pneg %p330
        $region58: #{tpu_custom_call.1} parent=11 // pred_check_branch
          %438 = sbr.rel (%p436) target = $region60
        $region59: #{tpu_custom_call.1} parent=11 // pred_region
          _
        $region60: #{tpu_custom_call.1} parent=11 // pred_fallthru
          _
      $region12: #{tpu_custom_call.1} parent=5 // pred_fallthru
        _
      %p439 = scmp.lt.s32.totalorder %s26, 2
      // Predicated region
      $region61: #{tpu_custom_call.1} parent=5 // pred_check
        %p440 = pneg %p439
      $region62: #{tpu_custom_call.1} parent=5 // pred_check_branch
        %442 = sbr.rel (%p440) target = $region64
      $region63: #{tpu_custom_call.1} parent=5 // pred_region
        // Predicated region
        $region65: #{tpu_custom_call.1} parent=63 // pred_check
          %p443 = pneg %p46
        $region66: #{tpu_custom_call.1} parent=63 // pred_check_branch
          %445 = sbr.rel (%p443) target = $region68
        $region67: #{tpu_custom_call.1} parent=63 // pred_region
          %p446 = scmp.lt.s32.totalorder %s26, 1
          %s447 = scalar_select %p446, %s26, 1
          %s448 = smul.addr %s447, 8
          %s449 = scalar_lea.vmem %s0, %s448
        $region68: #{tpu_custom_call.1} parent=63 // pred_fallthru
          _
        // Predicated region
        $region69: #{tpu_custom_call.1} parent=63 // pred_check
          %p450 = pneg %p72
        $region70: #{tpu_custom_call.1} parent=63 // pred_check_branch
          %452 = sbr.rel (%p450) target = $region72
        $region71: #{tpu_custom_call.1} parent=63 // pred_region
          %p453 = scmp.lt.s32.totalorder %s26, 1
          %s454 = scalar_select %p453, %s26, 1
          %s455 = scalar_lea.vmem %s1, %s454
        $region72: #{tpu_custom_call.1} parent=63 // pred_fallthru
          _
      $region64: #{tpu_custom_call.1} parent=5 // pred_fallthru
        _
      %p456 = scmp.le.s32.totalorder 1, %s26
      %p457 = scmp.lt.s32.totalorder %s26, 3
      %p458 = pnand %p456, %p457
      %p459 = pneg %p458
      // Predicated region
      $region73: #{tpu_custom_call.1} parent=5 // pred_check
        _
      $region74: #{tpu_custom_call.1} parent=5 // pred_check_branch
        %461 = sbr.rel (%p458) target = $region76
      $region75: #{tpu_custom_call.1} parent=5 // pred_region
        %s462 = ssub.s32 %s26, 1
        // Predicated region
        $region77: #{tpu_custom_call.1} parent=75 // pred_check
          %p463 = pneg %p120
        $region78: #{tpu_custom_call.1} parent=75 // pred_check_branch
          %465 = sbr.rel (%p463) target = $region80
        $region79: #{tpu_custom_call.1} parent=75 // pred_region
          %466 = dma.done [#allocation3], 16
        $region80: #{tpu_custom_call.1} parent=75 // pred_fallthru
          _
        // Predicated region
        $region81: #{tpu_custom_call.1} parent=75 // pred_check
          %p467 = pneg %p162
        $region82: #{tpu_custom_call.1} parent=75 // pred_check_branch
          %469 = sbr.rel (%p467) target = $region84
        $region83: #{tpu_custom_call.1} parent=75 // pred_region
          %470 = dma.done [#allocation6], 16
        $region84: #{tpu_custom_call.1} parent=75 // pred_fallthru
          _
        // Predicated region
        $region85: #{tpu_custom_call.1} parent=75 // pred_check
          %p471 = pneg %p204
        $region86: #{tpu_custom_call.1} parent=75 // pred_check_branch
          %473 = sbr.rel (%p471) target = $region88
        $region87: #{tpu_custom_call.1} parent=75 // pred_region
          %474 = dma.done [#allocation6], 16
        $region88: #{tpu_custom_call.1} parent=75 // pred_fallthru
          _
        // Predicated region
        $region89: #{tpu_custom_call.1} parent=75 // pred_check
          %p475 = pneg %p225
        $region90: #{tpu_custom_call.1} parent=75 // pred_check_branch
          %477 = sbr.rel (%p475) target = $region92
        $region91: #{tpu_custom_call.1} parent=75 // pred_region
          %478 = dma.done [#allocation9], 16
        $region92: #{tpu_custom_call.1} parent=75 // pred_fallthru
          _
        %p479 = scmp.lt.s32.totalorder %s31, 1
        %s480 = scalar_select %p479, %s31, 1
        %s481 = smul.addr %s480, 8
        %s482 = scalar_lea.vmem %s0, %s481
        %p483 = pneg %p52
        %p484 = pneg %p49
        %p485 = scmp.lt.s32.totalorder %s31, 1
        %s486 = scalar_select %p485, %s31, 1
        %s487 = scalar_lea.vmem %s1, %s486
        %p488 = pneg %p78
        %p489 = pneg %p75
        %p490 = pneg %p99
        %p491 = pneg %p96
        %p492 = pneg %p120
        %p493 = pneg %p117
        %p494 = pneg %p141
        %p495 = pneg %p138
        %p496 = pneg %p162
        %p497 = pneg %p159
        %p498 = pneg %p183
        %p499 = pneg %p180
        %p500 = pneg %p204
        %p501 = pneg %p201
        %p502 = pneg %p225
        %p503 = pneg %p222
        %p504 = pneg %p246
        %p505 = pneg %p243
        %p506 = pneg %p267
        %p507 = pneg %p264
        %p508 = pneg %p288
        %p509 = pneg %p285
        %p510 = pneg %p309
        %p511 = pneg %p306
        %p512 = pneg %p330
        %p513 = pneg %p327
        %p514 = pneg %p356
        %p515 = pneg %p353
        %s516 = sand.u32 %s343, 1
        %s517 = scalar_lea.sflag [#allocation4], %s516
        %s518 = sand.u32 %s343, 1
        %s519 = smul.addr %s518, 8
        %s520 = scalar_lea.vmem [#allocation10], %s519
        %p521 = scmp.lt.s32.totalorder %s31, 1
        %s522 = scalar_select %p521, %s31, 1
        %s523 = smul.addr %s522, 8
        %s524 = scalar_lea.vmem %s0, %s523
        %p525 = scmp.lt.s32.totalorder %s31, 1
        %s526 = scalar_select %p525, %s31, 1
        %s527 = scalar_lea.vmem %s1, %s526
        %v529 = vld [vmem:[%s524] sm:$0xff]
        %v530 = vlaneseq
        %v531 = vand.u32 %v530, 127
        %v532 = vld [vmem:[%s527] sm:$0x1]
        %533 = vset.pattern.permute.xlu0 0
        %534 = vperm.xlu0 %533, %v532
        %v535 = vpop.permute.xlu0 %534
        %v536 = vlaneseq
        %v537 = vshrl.u32 %v536, 7
        %v538 = vsub.s32 0, %v537
        %v539 = vrot.slane %v535, %v538
        %vm540 = vcmp.lt.s32.totalorder %v531, %v539
        %v541 = vsel %vm540, 0.0, -1e+30
        %v542 = vld [vmem:[%s2] sm:$0x1]
        %v543 = vld [vmem:[#allocation2] sm:$0x1]
        %vm544 = vcmask 261120
        %v545 = vsel %vm544, %v529, 0.0
        %546 = vadd.xlane.f32.xlu0 %v545
        %v547 = vpop.xlane.xlu0 %546
        %v548 = vrcp.pop 32.0
        %v549 = vmul.f32 %v547, %v548
        %v550 = vsub.f32 %v529, %v549
        %v551 = vmul.f32 %v550, %v550
        %v552 = vsel %vm544, %v551, 0.0
        %553 = vadd.xlane.f32.xlu0 %v552
        %v554 = vpop.xlane.xlu0 %553
        %v555 = vmul.f32 %v554, %v548
        %v556 = vadd.f32 %v555, 1e-05
        %v557 = vrsqrt.pop %v556
        %v558 = vmul.f32 %v550, %v557
        %v560 = vlaneseq
        %v561 = vshrl.u32 %v560, 7
        %v562 = vsub.s32 0, %v561
        %v563 = vrot.slane %v542, %v562
        %v565 = vmul.f32 %v558, %v563
        %v567 = vlaneseq
        %v568 = vshrl.u32 %v567, 7
        %v569 = vsub.s32 0, %v568
        %v570 = vrot.slane %v543, %v569
        %v572 = vadd.f32 %v565, %v570
        %v573 = vpack.c.bf16 %v572, %v572
        %v574 = vld [vmem:[%s4] sm:$0xf]
        %v575 = vld [vmem:[%s4 + $0x4] sm:$0xf]
        %v576 = vld [vmem:[%s4 + $0x8] sm:$0xf]
        %v577 = vld [vmem:[%s4 + $0xc] sm:$0xf]
        %v578 = vld [vmem:[#allocation5] sm:$0x1]
        %v580 = vlaneseq
        %v581 = vshrl.u32 %v580, 7
        %v582 = vsub.s32 0, %v581
        %v583 = vrot.slane %v578, %v582
        %v589 = vunpack.c.l.b16 %v574
        %v590 = vunpack.c.l.b16 %v575
        %v591 = vunpack.c.l.b16 %v576
        %v592 = vunpack.c.l.b16 %v577
        %v593 = vpack.c.b16 %v590, %v589
        %v594 = vpack.c.b16 %v592, %v591
        %v598 = vsel %vm544, %v573, 0
        %600 = vmatprep.subr.bf16.mxu0 0
        %601 = vmatpush1.bf16.msra.mxu0 0
        %602 = vmatprep.subr.bf16.mxu0 0
        %603 = vmatpush1.bf16.msra.mxu0 0
        %604 = vmatprep.subr.bf16.mxu0 0
        %605 = vmatpush1.bf16.msra.mxu0 0
        %606 = vmatprep.subr.bf16.mxu0 0
        %607 = vmatpush1.bf16.msra.mxu0 0
        %608 = vmatprep.subr.bf16.mxu0 0
        %609 = vmatpush1.bf16.msra.mxu0 0
        %610 = vmatprep.subr.bf16.mxu0 0
        %611 = vmatpush1.bf16.msra.mxu0 0
        %612 = vmatprep.subr.bf16.mxu0 0
        %613 = vmatpush1.bf16.msra.mxu0 %v594
        %614 = vmatprep.subr.bf16.mxu0 0
        %615 = vmatpush1.bf16.msra.mxu0 %v593
        %616 = vmatprep.subr.bf16.mxu0 0
        %617 = vmatpush2.bf16.msra.mxu0 0
        %618 = vmatprep.subr.bf16.mxu0 0
        %619 = vmatpush2.bf16.msra.mxu0 0
        %620 = vmatprep.subr.bf16.mxu0 0
        %621 = vmatpush2.bf16.msra.mxu0 0
        %622 = vmatprep.subr.bf16.mxu0 0
        %623 = vmatpush2.bf16.msra.mxu0 0
        %624 = vmatprep.subr.bf16.mxu0 0
        %625 = vmatpush2.bf16.msra.mxu0 0
        %626 = vmatprep.subr.bf16.mxu0 0
        %627 = vmatpush2.bf16.msra.mxu0 0
        %628 = vmatprep.subr.bf16.mxu0 0
        %629 = vmatpush2.bf16.msra.mxu0 0
        %630 = vmatprep.subr.bf16.mxu0 0
        %631 = vmatpush2.bf16.msra.mxu0 0
        %632 = vmatprep.mubr.bf16.mxu0 0
        %633 = vmatmul.mubr.bf16.gmra.mxu0 %v598
        %v634 = vpop.f32.mrf.mxu0
        %v635 = vadd.f32 %v583, %v634
        %v636 = vpop.f32.mrf.mxu0
        %v637 = vpop.f32.mrf.mxu0
        %v638 = vpop.f32.mrf.mxu0
        %639 = vdwg.mxu0
        %641 = vrot.lane.b32.xlu0 %v635, 120
        %v642 = vpop.permute.xlu0 %641
        %644 = vrot.lane.b32.xlu0 %v635, 112
        %v645 = vpop.permute.xlu0 %644
        %647 = vrot.lane.b32.xlu0 %v635, 104
        %v648 = vpop.permute.xlu0 %647
        %v650 = vpack.c.bf16 %v635, %v635
        %v651 = vpack.c.bf16 %v642, %v642
        %v652 = vpack.c.bf16 %v645, %v645
        %v653 = vpack.c.bf16 %v648, %v648
        %v654 = vlaneseq
        %v655 = vshrl.u32 %v654, 7
        %v656 = vsub.s32 0, %v655
        %v657 = vrot.slane %v541, %v656
        %659 = vrot.lane.b32.xlu0 %v650, 96
        %v660 = vpop.permute.xlu0 %659
        %vm661 = vcmask 64512
        %v663 = vsel %vm661, %v650, 0
        %v666 = vsel %vm661, %v660, 0
        %668 = vmatprep.subr.bf16.mxu0 0
        %669 = vmatpush1.bf16.xpose.msra.mxu0 0
        %670 = vmatprep.subr.bf16.mxu0 0
        %671 = vmatpush1.bf16.xpose.msra.mxu0 0
        %672 = vmatprep.subr.bf16.mxu0 0
        %673 = vmatpush1.bf16.xpose.msra.mxu0 0
        %674 = vmatprep.subr.bf16.mxu0 0
        %675 = vmatpush1.bf16.xpose.msra.mxu0 0
        %676 = vmatprep.subr.bf16.mxu0 0
        %677 = vmatpush1.bf16.xpose.msra.mxu0 0
        %678 = vmatprep.subr.bf16.mxu0 0
        %679 = vmatpush1.bf16.xpose.msra.mxu0 0
        %680 = vmatprep.subr.bf16.mxu0 0
        %681 = vmatpush1.bf16.xpose.msra.mxu0 0
        %682 = vmatprep.subr.bf16.mxu0 0
        %683 = vmatpush1.bf16.xpose.msra.mxu0 %v666
        %684 = vmatprep.subr.bf16.mxu0 0
        %685 = vmatpush2.bf16.xpose.msra.mxu0 0
        %686 = vmatprep.subr.bf16.mxu0 0
        %687 = vmatpush2.bf16.xpose.msra.mxu0 0
        %688 = vmatprep.subr.bf16.mxu0 0
        %689 = vmatpush2.bf16.xpose.msra.mxu0 0
        %690 = vmatprep.subr.bf16.mxu0 0
        %691 = vmatpush2.bf16.xpose.msra.mxu0 0
        %692 = vmatprep.subr.bf16.mxu0 0
        %693 = vmatpush2.bf16.xpose.msra.mxu0 0
        %694 = vmatprep.subr.bf16.mxu0 0
        %695 = vmatpush2.bf16.xpose.msra.mxu0 0
        %696 = vmatprep.subr.bf16.mxu0 0
        %697 = vmatpush2.bf16.xpose.msra.mxu0 0
        %698 = vmatprep.subr.bf16.mxu0 0
        %699 = vmatpush2.bf16.xpose.msra.mxu0 0
        %700 = vmatprep.mubr.bf16.mxu0 0
        %701 = vmatmul.mubr.bf16.gmra.mxu0 %v663
        %v702 = vpop.f32.mrf.mxu0
        %v703 = vadd.f32 %v657, %v702
        %v704 = vpop.f32.mrf.mxu0
        %v705 = vpop.f32.mrf.mxu0
        %v706 = vpop.f32.mrf.mxu0
        %707 = vdwg.mxu0
        %709 = vrot.lane.b32.xlu0 %v651, 96
        %v710 = vpop.permute.xlu0 %709
        %v712 = vsel %vm661, %v651, 0
        %v715 = vsel %vm661, %v710, 0
        %717 = vmatprep.subr.bf16.mxu0 0
        %718 = vmatpush1.bf16.xpose.msra.mxu0 0
        %719 = vmatprep.subr.bf16.mxu0 0
        %720 = vmatpush1.bf16.xpose.msra.mxu0 0
        %721 = vmatprep.subr.bf16.mxu0 0
        %722 = vmatpush1.bf16.xpose.msra.mxu0 0
        %723 = vmatprep.subr.bf16.mxu0 0
        %724 = vmatpush1.bf16.xpose.msra.mxu0 0
        %725 = vmatprep.subr.bf16.mxu0 0
        %726 = vmatpush1.bf16.xpose.msra.mxu0 0
        %727 = vmatprep.subr.bf16.mxu0 0
        %728 = vmatpush1.bf16.xpose.msra.mxu0 0
        %729 = vmatprep.subr.bf16.mxu0 0
        %730 = vmatpush1.bf16.xpose.msra.mxu0 0
        %731 = vmatprep.subr.bf16.mxu0 0
        %732 = vmatpush1.bf16.xpose.msra.mxu0 %v715
        %733 = vmatprep.subr.bf16.mxu0 0
        %734 = vmatpush2.bf16.xpose.msra.mxu0 0
        %735 = vmatprep.subr.bf16.mxu0 0
        %736 = vmatpush2.bf16.xpose.msra.mxu0 0
        %737 = vmatprep.subr.bf16.mxu0 0
        %738 = vmatpush2.bf16.xpose.msra.mxu0 0
        %739 = vmatprep.subr.bf16.mxu0 0
        %740 = vmatpush2.bf16.xpose.msra.mxu0 0
        %741 = vmatprep.subr.bf16.mxu0 0
        %742 = vmatpush2.bf16.xpose.msra.mxu0 0
        %743 = vmatprep.subr.bf16.mxu0 0
        %744 = vmatpush2.bf16.xpose.msra.mxu0 0
        %745 = vmatprep.subr.bf16.mxu0 0
        %746 = vmatpush2.bf16.xpose.msra.mxu0 0
        %747 = vmatprep.subr.bf16.mxu0 0
        %748 = vmatpush2.bf16.xpose.msra.mxu0 0
        %749 = vmatprep.mubr.bf16.mxu0 0
        %750 = vmatmul.mubr.bf16.gmra.mxu0 %v712
        %v751 = vpop.f32.mrf.mxu0
        %v752 = vadd.f32 %v657, %v751
        %v753 = vpop.f32.mrf.mxu0
        %v754 = vpop.f32.mrf.mxu0
        %v755 = vpop.f32.mrf.mxu0
        %756 = vdwg.mxu0
        %758 = vrot.lane.b32.xlu0 %v652, 96
        %v759 = vpop.permute.xlu0 %758
        %v761 = vsel %vm661, %v652, 0
        %v764 = vsel %vm661, %v759, 0
        %766 = vmatprep.subr.bf16.mxu0 0
        %767 = vmatpush1.bf16.xpose.msra.mxu0 0
        %768 = vmatprep.subr.bf16.mxu0 0
        %769 = vmatpush1.bf16.xpose.msra.mxu0 0
        %770 = vmatprep.subr.bf16.mxu0 0
        %771 = vmatpush1.bf16.xpose.msra.mxu0 0
        %772 = vmatprep.subr.bf16.mxu0 0
        %773 = vmatpush1.bf16.xpose.msra.mxu0 0
        %774 = vmatprep.subr.bf16.mxu0 0
        %775 = vmatpush1.bf16.xpose.msra.mxu0 0
        %776 = vmatprep.subr.bf16.mxu0 0
        %777 = vmatpush1.bf16.xpose.msra.mxu0 0
        %778 = vmatprep.subr.bf16.mxu0 0
        %779 = vmatpush1.bf16.xpose.msra.mxu0 0
        %780 = vmatprep.subr.bf16.mxu0 0
        %781 = vmatpush1.bf16.xpose.msra.mxu0 %v764
        %782 = vmatprep.subr.bf16.mxu0 0
        %783 = vmatpush2.bf16.xpose.msra.mxu0 0
        %784 = vmatprep.subr.bf16.mxu0 0
        %785 = vmatpush2.bf16.xpose.msra.mxu0 0
        %786 = vmatprep.subr.bf16.mxu0 0
        %787 = vmatpush2.bf16.xpose.msra.mxu0 0
        %788 = vmatprep.subr.bf16.mxu0 0
        %789 = vmatpush2.bf16.xpose.msra.mxu0 0
        %790 = vmatprep.subr.bf16.mxu0 0
        %791 = vmatpush2.bf16.xpose.msra.mxu0 0
        %792 = vmatprep.subr.bf16.mxu0 0
        %793 = vmatpush2.bf16.xpose.msra.mxu0 0
        %794 = vmatprep.subr.bf16.mxu0 0
        %795 = vmatpush2.bf16.xpose.msra.mxu0 0
        %796 = vmatprep.subr.bf16.mxu0 0
        %797 = vmatpush2.bf16.xpose.msra.mxu0 0
        %798 = vmatprep.mubr.bf16.mxu0 0
        %799 = vmatmul.mubr.bf16.gmra.mxu0 %v761
        %v800 = vpop.f32.mrf.mxu0
        %v801 = vadd.f32 %v657, %v800
        %v802 = vpop.f32.mrf.mxu0
        %v803 = vpop.f32.mrf.mxu0
        %v804 = vpop.f32.mrf.mxu0
        %805 = vdwg.mxu0
        %807 = vrot.lane.b32.xlu0 %v653, 96
        %v808 = vpop.permute.xlu0 %807
        %v810 = vsel %vm661, %v653, 0
        %v813 = vsel %vm661, %v808, 0
        %815 = vmatprep.subr.bf16.mxu0 0
        %816 = vmatpush1.bf16.xpose.msra.mxu0 0
        %817 = vmatprep.subr.bf16.mxu0 0
        %818 = vmatpush1.bf16.xpose.msra.mxu0 0
        %819 = vmatprep.subr.bf16.mxu0 0
        %820 = vmatpush1.bf16.xpose.msra.mxu0 0
        %821 = vmatprep.subr.bf16.mxu0 0
        %822 = vmatpush1.bf16.xpose.msra.mxu0 0
        %823 = vmatprep.subr.bf16.mxu0 0
        %824 = vmatpush1.bf16.xpose.msra.mxu0 0
        %825 = vmatprep.subr.bf16.mxu0 0
        %826 = vmatpush1.bf16.xpose.msra.mxu0 0
        %827 = vmatprep.subr.bf16.mxu0 0
        %828 = vmatpush1.bf16.xpose.msra.mxu0 0
        %829 = vmatprep.subr.bf16.mxu0 0
        %830 = vmatpush1.bf16.xpose.msra.mxu0 %v813
        %831 = vmatprep.subr.bf16.mxu0 0
        %832 = vmatpush2.bf16.xpose.msra.mxu0 0
        %833 = vmatprep.subr.bf16.mxu0 0
        %834 = vmatpush2.bf16.xpose.msra.mxu0 0
        %835 = vmatprep.subr.bf16.mxu0 0
        %836 = vmatpush2.bf16.xpose.msra.mxu0 0
        %837 = vmatprep.subr.bf16.mxu0 0
        %838 = vmatpush2.bf16.xpose.msra.mxu0 0
        %839 = vmatprep.subr.bf16.mxu0 0
        %840 = vmatpush2.bf16.xpose.msra.mxu0 0
        %841 = vmatprep.subr.bf16.mxu0 0
        %842 = vmatpush2.bf16.xpose.msra.mxu0 0
        %843 = vmatprep.subr.bf16.mxu0 0
        %844 = vmatpush2.bf16.xpose.msra.mxu0 0
        %845 = vmatprep.subr.bf16.mxu0 0
        %846 = vmatpush2.bf16.xpose.msra.mxu0 0
        %847 = vmatprep.mubr.bf16.mxu0 0
        %848 = vmatmul.mubr.bf16.gmra.mxu0 %v810
        %v849 = vpop.f32.mrf.mxu0
        %v850 = vadd.f32 %v657, %v849
        %v851 = vpop.f32.mrf.mxu0
        %v852 = vpop.f32.mrf.mxu0
        %v853 = vpop.f32.mrf.mxu0
        %854 = vdwg.mxu0
        %v855 = vsel %vm661, %v703, -inf
        %856 = vmax.xlane.f32.xlu0 %v855
        %v857 = vpop.xlane.xlu0 %856
        %v858 = vsel %vm661, %v752, -inf
        %859 = vmax.xlane.f32.xlu0 %v858
        %v860 = vpop.xlane.xlu0 %859
        %v861 = vsel %vm661, %v801, -inf
        %862 = vmax.xlane.f32.xlu0 %v861
        %v863 = vpop.xlane.xlu0 %862
        %v864 = vsel %vm661, %v850, -inf
        %865 = vmax.xlane.f32.xlu0 %v864
        %v866 = vpop.xlane.xlu0 %865
        %v867 = vsub.f32 %v703, %v857
        %v868 = vsub.f32 %v752, %v860
        %v869 = vsub.f32 %v801, %v863
        %v870 = vsub.f32 %v850, %v866
        %v871 = vmul.f32 %v867, 1.442695
        %v872 = vpow.pop %v871
        %v873 = vmul.f32 %v868, 1.442695
        %v874 = vpow.pop %v873
        %v875 = vmul.f32 %v869, 1.442695
        %v876 = vpow.pop %v875
        %v877 = vmul.f32 %v870, 1.442695
        %v878 = vpow.pop %v877
        %v879 = vsel %vm661, %v872, 0.0
        %880 = vadd.xlane.f32.xlu0 %v879
        %v881 = vpop.xlane.xlu0 %880
        %v882 = vsel %vm661, %v874, 0.0
        %883 = vadd.xlane.f32.xlu0 %v882
        %v884 = vpop.xlane.xlu0 %883
        %v885 = vsel %vm661, %v876, 0.0
        %886 = vadd.xlane.f32.xlu0 %v885
        %v887 = vpop.xlane.xlu0 %886
        %v888 = vsel %vm661, %v878, 0.0
        %889 = vadd.xlane.f32.xlu0 %v888
        %v890 = vpop.xlane.xlu0 %889
        %v891 = vrcp.pop %v881
        %v892 = vrcp.pop %v884
        %v893 = vrcp.pop %v887
        %v894 = vrcp.pop %v890
        %v895 = vmul.f32 %v872, %v891
        %v896 = vmul.f32 %v874, %v892
        %v897 = vmul.f32 %v876, %v893
        %v898 = vmul.f32 %v878, %v894
        %v899 = vpack.c.bf16 %v895, %v895
        %v900 = vpack.c.bf16 %v896, %v896
        %v901 = vpack.c.bf16 %v897, %v897
        %v902 = vpack.c.bf16 %v898, %v898
        %903 = vrot.lane.b32.xlu0 %v650, 64
        %v904 = vpop.permute.xlu0 %903
        %v906 = vsel %vm661, %v899, 0
        %vm908 = vcmask 1043456
        %v910 = vsel %vm908, %v904, 0
        %912 = vmatprep.subr.bf16.mxu0 0
        %913 = vmatpush1.bf16.msra.mxu0 0
        %914 = vmatprep.subr.bf16.mxu0 0
        %915 = vmatpush1.bf16.msra.mxu0 0
        %916 = vmatprep.subr.bf16.mxu0 0
        %917 = vmatpush1.bf16.msra.mxu0 0
        %918 = vmatprep.subr.bf16.mxu0 0
        %919 = vmatpush1.bf16.msra.mxu0 0
        %920 = vmatprep.subr.bf16.mxu0 0
        %921 = vmatpush1.bf16.msra.mxu0 0
        %922 = vmatprep.subr.bf16.mxu0 0
        %923 = vmatpush1.bf16.msra.mxu0 0
        %924 = vmatprep.subr.bf16.mxu0 0
        %925 = vmatpush1.bf16.msra.mxu0 0
        %926 = vmatprep.subr.bf16.mxu0 0
        %927 = vmatpush1.bf16.msra.mxu0 %v910
        %928 = vmatprep.subr.bf16.mxu0 0
        %929 = vmatpush2.bf16.msra.mxu0 0
        %930 = vmatprep.subr.bf16.mxu0 0
        %931 = vmatpush2.bf16.msra.mxu0 0
        %932 = vmatprep.subr.bf16.mxu0 0
        %933 = vmatpush2.bf16.msra.mxu0 0
        %934 = vmatprep.subr.bf16.mxu0 0
        %935 = vmatpush2.bf16.msra.mxu0 0
        %936 = vmatprep.subr.bf16.mxu0 0
        %937 = vmatpush2.bf16.msra.mxu0 0
        %938 = vmatprep.subr.bf16.mxu0 0
        %939 = vmatpush2.bf16.msra.mxu0 0
        %940 = vmatprep.subr.bf16.mxu0 0
        %941 = vmatpush2.bf16.msra.mxu0 0
        %942 = vmatprep.subr.bf16.mxu0 0
        %943 = vmatpush2.bf16.msra.mxu0 0
        %944 = vmatprep.mubr.bf16.mxu0 0
        %945 = vmatmul.mubr.bf16.gmra.mxu0 %v906
        %v946 = vpop.f32.mrf.mxu0
        %v947 = vadd.f32 0.0, %v946
        %v948 = vpop.f32.mrf.mxu0
        %v949 = vpop.f32.mrf.mxu0
        %v950 = vpop.f32.mrf.mxu0
        %951 = vdwg.mxu0
        %952 = vrot.lane.b32.xlu0 %v651, 64
        %v953 = vpop.permute.xlu0 %952
        %v955 = vsel %vm661, %v900, 0
        %v958 = vsel %vm908, %v953, 0
        %960 = vmatprep.subr.bf16.mxu0 0
        %961 = vmatpush1.bf16.msra.mxu0 0
        %962 = vmatprep.subr.bf16.mxu0 0
        %963 = vmatpush1.bf16.msra.mxu0 0
        %964 = vmatprep.subr.bf16.mxu0 0
        %965 = vmatpush1.bf16.msra.mxu0 0
        %966 = vmatprep.subr.bf16.mxu0 0
        %967 = vmatpush1.bf16.msra.mxu0 0
        %968 = vmatprep.subr.bf16.mxu0 0
        %969 = vmatpush1.bf16.msra.mxu0 0
        %970 = vmatprep.subr.bf16.mxu0 0
        %971 = vmatpush1.bf16.msra.mxu0 0
        %972 = vmatprep.subr.bf16.mxu0 0
        %973 = vmatpush1.bf16.msra.mxu0 0
        %974 = vmatprep.subr.bf16.mxu0 0
        %975 = vmatpush1.bf16.msra.mxu0 %v958
        %976 = vmatprep.subr.bf16.mxu0 0
        %977 = vmatpush2.bf16.msra.mxu0 0
        %978 = vmatprep.subr.bf16.mxu0 0
        %979 = vmatpush2.bf16.msra.mxu0 0
        %980 = vmatprep.subr.bf16.mxu0 0
        %981 = vmatpush2.bf16.msra.mxu0 0
        %982 = vmatprep.subr.bf16.mxu0 0
        %983 = vmatpush2.bf16.msra.mxu0 0
        %984 = vmatprep.subr.bf16.mxu0 0
        %985 = vmatpush2.bf16.msra.mxu0 0
        %986 = vmatprep.subr.bf16.mxu0 0
        %987 = vmatpush2.bf16.msra.mxu0 0
        %988 = vmatprep.subr.bf16.mxu0 0
        %989 = vmatpush2.bf16.msra.mxu0 0
        %990 = vmatprep.subr.bf16.mxu0 0
        %991 = vmatpush2.bf16.msra.mxu0 0
        %992 = vmatprep.mubr.bf16.mxu0 0
        %993 = vmatmul.mubr.bf16.gmra.mxu0 %v955
        %v994 = vpop.f32.mrf.mxu0
        %v995 = vadd.f32 0.0, %v994
        %v996 = vpop.f32.mrf.mxu0
        %v997 = vpop.f32.mrf.mxu0
        %v998 = vpop.f32.mrf.mxu0
        %999 = vdwg.mxu0
        %1000 = vrot.lane.b32.xlu0 %v652, 64
        %v1001 = vpop.permute.xlu0 %1000
        %v1003 = vsel %vm661, %v901, 0
        %v1006 = vsel %vm908, %v1001, 0
        %1008 = vmatprep.subr.bf16.mxu0 0
        %1009 = vmatpush1.bf16.msra.mxu0 0
        %1010 = vmatprep.subr.bf16.mxu0 0
        %1011 = vmatpush1.bf16.msra.mxu0 0
        %1012 = vmatprep.subr.bf16.mxu0 0
        %1013 = vmatpush1.bf16.msra.mxu0 0
        %1014 = vmatprep.subr.bf16.mxu0 0
        %1015 = vmatpush1.bf16.msra.mxu0 0
        %1016 = vmatprep.subr.bf16.mxu0 0
        %1017 = vmatpush1.bf16.msra.mxu0 0
        %1018 = vmatprep.subr.bf16.mxu0 0
        %1019 = vmatpush1.bf16.msra.mxu0 0
        %1020 = vmatprep.subr.bf16.mxu0 0
        %1021 = vmatpush1.bf16.msra.mxu0 0
        %1022 = vmatprep.subr.bf16.mxu0 0
        %1023 = vmatpush1.bf16.msra.mxu0 %v1006
        %1024 = vmatprep.subr.bf16.mxu0 0
        %1025 = vmatpush2.bf16.msra.mxu0 0
        %1026 = vmatprep.subr.bf16.mxu0 0
        %1027 = vmatpush2.bf16.msra.mxu0 0
        %1028 = vmatprep.subr.bf16.mxu0 0
        %1029 = vmatpush2.bf16.msra.mxu0 0
        %1030 = vmatprep.subr.bf16.mxu0 0
        %1031 = vmatpush2.bf16.msra.mxu0 0
        %1032 = vmatprep.subr.bf16.mxu0 0
        %1033 = vmatpush2.bf16.msra.mxu0 0
        %1034 = vmatprep.subr.bf16.mxu0 0
        %1035 = vmatpush2.bf16.msra.mxu0 0
        %1036 = vmatprep.subr.bf16.mxu0 0
        %1037 = vmatpush2.bf16.msra.mxu0 0
        %1038 = vmatprep.subr.bf16.mxu0 0
        %1039 = vmatpush2.bf16.msra.mxu0 0
        %1040 = vmatprep.mubr.bf16.mxu0 0
        %1041 = vmatmul.mubr.bf16.gmra.mxu0 %v1003
        %v1042 = vpop.f32.mrf.mxu0
        %v1043 = vadd.f32 0.0, %v1042
        %v1044 = vpop.f32.mrf.mxu0
        %v1045 = vpop.f32.mrf.mxu0
        %v1046 = vpop.f32.mrf.mxu0
        %1047 = vdwg.mxu0
        %1048 = vrot.lane.b32.xlu0 %v653, 64
        %v1049 = vpop.permute.xlu0 %1048
        %v1051 = vsel %vm661, %v902, 0
        %v1054 = vsel %vm908, %v1049, 0
        %1056 = vmatprep.subr.bf16.mxu0 0
        %1057 = vmatpush1.bf16.msra.mxu0 0
        %1058 = vmatprep.subr.bf16.mxu0 0
        %1059 = vmatpush1.bf16.msra.mxu0 0
        %1060 = vmatprep.subr.bf16.mxu0 0
        %1061 = vmatpush1.bf16.msra.mxu0 0
        %1062 = vmatprep.subr.bf16.mxu0 0
        %1063 = vmatpush1.bf16.msra.mxu0 0
        %1064 = vmatprep.subr.bf16.mxu0 0
        %1065 = vmatpush1.bf16.msra.mxu0 0
        %1066 = vmatprep.subr.bf16.mxu0 0
        %1067 = vmatpush1.bf16.msra.mxu0 0
        %1068 = vmatprep.subr.bf16.mxu0 0
        %1069 = vmatpush1.bf16.msra.mxu0 0
        %1070 = vmatprep.subr.bf16.mxu0 0
        %1071 = vmatpush1.bf16.msra.mxu0 %v1054
        %1072 = vmatprep.subr.bf16.mxu0 0
        %1073 = vmatpush2.bf16.msra.mxu0 0
        %1074 = vmatprep.subr.bf16.mxu0 0
        %1075 = vmatpush2.bf16.msra.mxu0 0
        %1076 = vmatprep.subr.bf16.mxu0 0
        %1077 = vmatpush2.bf16.msra.mxu0 0
        %1078 = vmatprep.subr.bf16.mxu0 0
        %1079 = vmatpush2.bf16.msra.mxu0 0
        %1080 = vmatprep.subr.bf16.mxu0 0
        %1081 = vmatpush2.bf16.msra.mxu0 0
        %1082 = vmatprep.subr.bf16.mxu0 0
        %1083 = vmatpush2.bf16.msra.mxu0 0
        %1084 = vmatprep.subr.bf16.mxu0 0
        %1085 = vmatpush2.bf16.msra.mxu0 0
        %1086 = vmatprep.subr.bf16.mxu0 0
        %1087 = vmatpush2.bf16.msra.mxu0 0
        %1088 = vmatprep.mubr.bf16.mxu0 0
        %1089 = vmatmul.mubr.bf16.gmra.mxu0 %v1051
        %v1090 = vpop.f32.mrf.mxu0
        %v1091 = vadd.f32 0.0, %v1090
        %v1092 = vpop.f32.mrf.mxu0
        %v1093 = vpop.f32.mrf.mxu0
        %v1094 = vpop.f32.mrf.mxu0
        %1095 = vdwg.mxu0
        %1097 = vrot.lane.b32.xlu0 %v995, 8
        %v1098 = vpop.permute.xlu0 %1097
        %1101 = vrot.lane.b32.xlu0 %v1043, 16
        %v1102 = vpop.permute.xlu0 %1101
        %1105 = vrot.lane.b32.xlu0 %v1091, 24
        %v1106 = vpop.permute.xlu0 %1105
        %v1108 = vsel %vm661, %v947, %v1098
        %vm1109 = vcmask 130048
        %v1110 = vsel %vm1109, %v1108, %v1102
        %vm1111 = vcmask 195584
        %v1112 = vsel %vm1111, %v1110, %v1106
        %v1113 = vpack.c.bf16 %v1112, %v1112
        %v1114 = vld [vmem:[%s6] sm:$0xf]
        %v1115 = vld [vmem:[%s6 + $0x4] sm:$0xf]
        %v1116 = vld [vmem:[%s6 + $0x8] sm:$0xf]
        %v1117 = vld [vmem:[%s6 + $0xc] sm:$0xf]
        %v1118 = vld [vmem:[#allocation7] sm:$0x1]
        %v1120 = vlaneseq
        %v1121 = vshrl.u32 %v1120, 7
        %v1122 = vsub.s32 0, %v1121
        %v1123 = vrot.slane %v1118, %v1122
        %v1129 = vunpack.c.l.b16 %v1114
        %v1130 = vunpack.c.l.b16 %v1115
        %v1131 = vunpack.c.l.b16 %v1116
        %v1132 = vunpack.c.l.b16 %v1117
        %v1133 = vpack.c.b16 %v1130, %v1129
        %v1134 = vpack.c.b16 %v1132, %v1131
        %v1138 = vsel %vm544, %v1113, 0
        %1140 = vmatprep.subr.bf16.mxu0 0
        %1141 = vmatpush1.bf16.msra.mxu0 0
        %1142 = vmatprep.subr.bf16.mxu0 0
        %1143 = vmatpush1.bf16.msra.mxu0 0
        %1144 = vmatprep.subr.bf16.mxu0 0
        %1145 = vmatpush1.bf16.msra.mxu0 0
        %1146 = vmatprep.subr.bf16.mxu0 0
        %1147 = vmatpush1.bf16.msra.mxu0 0
        %1148 = vmatprep.subr.bf16.mxu0 0
        %1149 = vmatpush1.bf16.msra.mxu0 0
        %1150 = vmatprep.subr.bf16.mxu0 0
        %1151 = vmatpush1.bf16.msra.mxu0 0
        %1152 = vmatprep.subr.bf16.mxu0 0
        %1153 = vmatpush1.bf16.msra.mxu0 %v1134
        %1154 = vmatprep.subr.bf16.mxu0 0
        %1155 = vmatpush1.bf16.msra.mxu0 %v1133
        %1156 = vmatprep.subr.bf16.mxu0 0
        %1157 = vmatpush2.bf16.msra.mxu0 0
        %1158 = vmatprep.subr.bf16.mxu0 0
        %1159 = vmatpush2.bf16.msra.mxu0 0
        %1160 = vmatprep.subr.bf16.mxu0 0
        %1161 = vmatpush2.bf16.msra.mxu0 0
        %1162 = vmatprep.subr.bf16.mxu0 0
        %1163 = vmatpush2.bf16.msra.mxu0 0
        %1164 = vmatprep.subr.bf16.mxu0 0
        %1165 = vmatpush2.bf16.msra.mxu0 0
        %1166 = vmatprep.subr.bf16.mxu0 0
        %1167 = vmatpush2.bf16.msra.mxu0 0
        %1168 = vmatprep.subr.bf16.mxu0 0
        %1169 = vmatpush2.bf16.msra.mxu0 0
        %1170 = vmatprep.subr.bf16.mxu0 0
        %1171 = vmatpush2.bf16.msra.mxu0 0
        %1172 = vmatprep.mubr.bf16.mxu0 0
        %1173 = vmatmul.mubr.bf16.gmra.mxu0 %v1138
        %v1174 = vpop.f32.mrf.mxu0
        %v1175 = vadd.f32 %v1123, %v1174
        %v1176 = vpop.f32.mrf.mxu0
        %v1177 = vpop.f32.mrf.mxu0
        %v1178 = vpop.f32.mrf.mxu0
        %1179 = vdwg.mxu0
        %v1180 = vadd.f32 %v529, %v1175
        %v1181 = vld [vmem:[#allocation8] sm:$0x1]
        %v1182 = vld [vmem:[%s9] sm:$0x1]
        %v1183 = vsel %vm544, %v1180, 0.0
        %1184 = vadd.xlane.f32.xlu0 %v1183
        %v1185 = vpop.xlane.xlu0 %1184
        %v1186 = vmul.f32 %v1185, %v548
        %v1187 = vsub.f32 %v1180, %v1186
        %v1188 = vmul.f32 %v1187, %v1187
        %v1189 = vsel %vm544, %v1188, 0.0
        %1190 = vadd.xlane.f32.xlu0 %v1189
        %v1191 = vpop.xlane.xlu0 %1190
        %v1192 = vmul.f32 %v1191, %v548
        %v1193 = vadd.f32 %v1192, 1e-05
        %v1194 = vrsqrt.pop %v1193
        %v1195 = vmul.f32 %v1187, %v1194
        %v1197 = vlaneseq
        %v1198 = vshrl.u32 %v1197, 7
        %v1199 = vsub.s32 0, %v1198
        %v1200 = vrot.slane %v1181, %v1199
        %v1202 = vmul.f32 %v1195, %v1200
        %v1204 = vlaneseq
        %v1205 = vshrl.u32 %v1204, 7
        %v1206 = vsub.s32 0, %v1205
        %v1207 = vrot.slane %v1182, %v1206
        %v1209 = vadd.f32 %v1202, %v1207
        %v1210 = vpack.c.bf16 %v1209, %v1209
        %v1211 = vld [vmem:[%s10] sm:$0xf]
        %v1212 = vld [vmem:[%s10 + $0x4] sm:$0xf]
        %v1213 = vld [vmem:[%s10 + $0x8] sm:$0xf]
        %v1214 = vld [vmem:[%s10 + $0xc] sm:$0xf]
        %v1215 = vld [vmem:[%s11] sm:$0x1]
        %v1217 = vlaneseq
        %v1218 = vshrl.u32 %v1217, 7
        %v1219 = vsub.s32 0, %v1218
        %v1220 = vrot.slane %v1215, %v1219
        %v1226 = vunpack.c.l.b16 %v1211
        %v1227 = vunpack.c.l.b16 %v1212
        %v1228 = vunpack.c.l.b16 %v1213
        %v1229 = vunpack.c.l.b16 %v1214
        %v1230 = vpack.c.b16 %v1227, %v1226
        %v1231 = vpack.c.b16 %v1229, %v1228
        %v1235 = vsel %vm544, %v1210, 0
        %1237 = vmatprep.subr.bf16.mxu0 0
        %1238 = vmatpush1.bf16.msra.mxu0 0
        %1239 = vmatprep.subr.bf16.mxu0 0
        %1240 = vmatpush1.bf16.msra.mxu0 0
        %1241 = vmatprep.subr.bf16.mxu0 0
        %1242 = vmatpush1.bf16.msra.mxu0 0
        %1243 = vmatprep.subr.bf16.mxu0 0
        %1244 = vmatpush1.bf16.msra.mxu0 0
        %1245 = vmatprep.subr.bf16.mxu0 0
        %1246 = vmatpush1.bf16.msra.mxu0 0
        %1247 = vmatprep.subr.bf16.mxu0 0
        %1248 = vmatpush1.bf16.msra.mxu0 0
        %1249 = vmatprep.subr.bf16.mxu0 0
        %1250 = vmatpush1.bf16.msra.mxu0 %v1231
        %1251 = vmatprep.subr.bf16.mxu0 0
        %1252 = vmatpush1.bf16.msra.mxu0 %v1230
        %1253 = vmatprep.subr.bf16.mxu0 0
        %1254 = vmatpush2.bf16.msra.mxu0 0
        %1255 = vmatprep.subr.bf16.mxu0 0
        %1256 = vmatpush2.bf16.msra.mxu0 0
        %1257 = vmatprep.subr.bf16.mxu0 0
        %1258 = vmatpush2.bf16.msra.mxu0 0
        %1259 = vmatprep.subr.bf16.mxu0 0
        %1260 = vmatpush2.bf16.msra.mxu0 0
        %1261 = vmatprep.subr.bf16.mxu0 0
        %1262 = vmatpush2.bf16.msra.mxu0 0
        %1263 = vmatprep.subr.bf16.mxu0 0
        %1264 = vmatpush2.bf16.msra.mxu0 0
        %1265 = vmatprep.subr.bf16.mxu0 0
        %1266 = vmatpush2.bf16.msra.mxu0 0
        %1267 = vmatprep.subr.bf16.mxu0 0
        %1268 = vmatpush2.bf16.msra.mxu0 0
        %1269 = vmatprep.mubr.bf16.mxu0 0
        %1270 = vmatmul.mubr.bf16.gmra.mxu0 %v1235
        %v1271 = vpop.f32.mrf.mxu0
        %v1272 = vadd.f32 %v1220, %v1271
        %v1273 = vpop.f32.mrf.mxu0
        %v1274 = vpop.f32.mrf.mxu0
        %v1275 = vpop.f32.mrf.mxu0
        %1276 = vdwg.mxu0
        %v1277 = vmax.f32 %v1272, 0.0
        %v1278 = vpack.c.bf16 %v1277, %v1277
        %v1279 = vld [vmem:[%s12] sm:$0xf]
        %v1280 = vld [vmem:[%s12 + $0x4] sm:$0xf]
        %v1281 = vld [vmem:[%s12 + $0x8] sm:$0xf]
        %v1282 = vld [vmem:[%s12 + $0xc] sm:$0xf]
        %v1283 = vld [vmem:[%s12 + $0x10] sm:$0xf]
        %v1284 = vld [vmem:[%s12 + $0x14] sm:$0xf]
        %v1285 = vld [vmem:[%s12 + $0x18] sm:$0xf]
        %v1286 = vld [vmem:[%s12 + $0x1c] sm:$0xf]
        %v1287 = vld [vmem:[%s13] sm:$0x1]
        %v1289 = vlaneseq
        %v1290 = vshrl.u32 %v1289, 7
        %v1291 = vsub.s32 0, %v1290
        %v1292 = vrot.slane %v1287, %v1291
        %v1302 = vunpack.c.l.b16 %v1279
        %v1303 = vunpack.c.l.b16 %v1280
        %v1304 = vunpack.c.l.b16 %v1281
        %v1305 = vunpack.c.l.b16 %v1282
        %v1306 = vunpack.c.l.b16 %v1283
        %v1307 = vunpack.c.l.b16 %v1284
        %v1308 = vunpack.c.l.b16 %v1285
        %v1309 = vunpack.c.l.b16 %v1286
        %v1310 = vpack.c.b16 %v1303, %v1302
        %v1311 = vpack.c.b16 %v1305, %v1304
        %v1312 = vpack.c.b16 %v1307, %v1306
        %v1313 = vpack.c.b16 %v1309, %v1308
        %vm1318 = vcmask 523264
        %v1320 = vsel %vm1318, %v1278, 0
        %1322 = vmatprep.subr.bf16.mxu0 0
        %1323 = vmatpush1.bf16.msra.mxu0 0
        %1324 = vmatprep.subr.bf16.mxu0 0
        %1325 = vmatpush1.bf16.msra.mxu0 0
        %1326 = vmatprep.subr.bf16.mxu0 0
        %1327 = vmatpush1.bf16.msra.mxu0 0
        %1328 = vmatprep.subr.bf16.mxu0 0
        %1329 = vmatpush1.bf16.msra.mxu0 0
        %1330 = vmatprep.subr.bf16.mxu0 0
        %1331 = vmatpush1.bf16.msra.mxu0 %v1313
        %1332 = vmatprep.subr.bf16.mxu0 0
        %1333 = vmatpush1.bf16.msra.mxu0 %v1312
        %1334 = vmatprep.subr.bf16.mxu0 0
        %1335 = vmatpush1.bf16.msra.mxu0 %v1311
        %1336 = vmatprep.subr.bf16.mxu0 0
        %1337 = vmatpush1.bf16.msra.mxu0 %v1310
        %1338 = vmatprep.subr.bf16.mxu0 0
        %1339 = vmatpush2.bf16.msra.mxu0 0
        %1340 = vmatprep.subr.bf16.mxu0 0
        %1341 = vmatpush2.bf16.msra.mxu0 0
        %1342 = vmatprep.subr.bf16.mxu0 0
        %1343 = vmatpush2.bf16.msra.mxu0 0
        %1344 = vmatprep.subr.bf16.mxu0 0
        %1345 = vmatpush2.bf16.msra.mxu0 0
        %1346 = vmatprep.subr.bf16.mxu0 0
        %1347 = vmatpush2.bf16.msra.mxu0 0
        %1348 = vmatprep.subr.bf16.mxu0 0
        %1349 = vmatpush2.bf16.msra.mxu0 0
        %1350 = vmatprep.subr.bf16.mxu0 0
        %1351 = vmatpush2.bf16.msra.mxu0 0
        %1352 = vmatprep.subr.bf16.mxu0 0
        %1353 = vmatpush2.bf16.msra.mxu0 0
        %1354 = vmatprep.mubr.bf16.mxu0 0
        %1355 = vmatmul.mubr.bf16.gmra.mxu0 %v1320
        %v1356 = vpop.f32.mrf.mxu0
        %v1357 = vadd.f32 %v1292, %v1356
        %v1358 = vpop.f32.mrf.mxu0
        %v1359 = vpop.f32.mrf.mxu0
        %v1360 = vpop.f32.mrf.mxu0
        %1361 = vdwg.mxu0
        %v1362 = vadd.f32 %v1180, %v1357
        %1363 = vst.msk [vmem:[%s520] sm:$0xff] %vm544, %v1362
        %s1364 = sand.u32 %s343, 1
        %s1365 = scalar_lea.sflag [#allocation4], %s1364
        %s1366 = sand.u32 %s343, 1
        %s1367 = smul.addr %s1366, 8
        %s1368 = scalar_lea.vmem [#allocation10], %s1367
        // Predicated region
        $region93: #{tpu_custom_call.1} parent=75 // pred_check
          %p1369 = pneg %p353
        $region94: #{tpu_custom_call.1} parent=75 // pred_check_branch
          %1371 = sbr.rel (%p1369) target = $region96
        $region95: #{tpu_custom_call.1} parent=75 // pred_region
          %s1373 = ssub.s32 128, 128
          %1374 = vsyncadd %s1365, %s1373
          %s1375 = smul.addr %s31, 128
          %s1376 = scalar_lea.hbm %s14, %s1375
          %s1378 = sshll.u32 %s1368, 4
          %s1379 = int_to_ptr.vmem [resolvable:$true] %s1378
          %1381 = dma.vmem_to_hbm [thread:$0]  %s1379, 128, %s1376, %s1365
        $region96: #{tpu_custom_call.1} parent=75 // pred_fallthru
          _
      $region76: #{tpu_custom_call.1} parent=5 // pred_fallthru
        _
      %p1382 = scmp.le.s32.totalorder 2, %s26
      // Predicated region
      $region97: #{tpu_custom_call.1} parent=5 // pred_check
        %p1383 = pneg %p1382
      $region98: #{tpu_custom_call.1} parent=5 // pred_check_branch
        %1385 = sbr.rel (%p1383) target = $region100
      $region99: #{tpu_custom_call.1} parent=5 // pred_region
        %s1386 = ssub.s32 %s26, 2
        // Predicated region
        $region101: #{tpu_custom_call.1} parent=99 // pred_check
          %p1387 = pneg %p359
        $region102: #{tpu_custom_call.1} parent=99 // pred_check_branch
          %1389 = sbr.rel (%p1387) target = $region104
        $region103: #{tpu_custom_call.1} parent=99 // pred_region
          %s1390 = sand.u32 %s344, 1
          %s1391 = scalar_lea.sflag [#allocation4], %s1390
          %s1392 = sand.u32 %s344, 1
          %s1393 = smul.addr %s1392, 8
          %s1394 = scalar_lea.vmem [#allocation10], %s1393
          %1395 = dma.done %s1391, 128
        $region104: #{tpu_custom_call.1} parent=99 // pred_fallthru
          _
      $region100: #{tpu_custom_call.1} parent=5 // pred_fallthru
        _
    $region6: #{tpu_custom_call.1} parent=1 // loop_footer
      %s30 = sadd.s32 1, %s26
    $region7: #{tpu_custom_call.1} parent=1 // loop_footer_branch
      %25 = sbr.rel target = $region3
    $region8: #{tpu_custom_call.1} parent=1 // loop_exit
      _
    %1396 = vsyncpa [#allocation3], 1
    %s1397 = scalar_lea.sflag [#allocation3], 1
    %1398 = vsyncpa %s1397, 1
    %1399 = vsyncpa [#allocation6], 1
    %1400 = vsyncpa [#allocation9], 1
    %1401 = vsyncpa [#allocation4], 1
    %s1402 = scalar_lea.sflag [#allocation4], 1
    %1403 = vsyncpa %s1402, 1

// kernel: tpu_custom_call.1
$region0: #{tpu_custom_call.1}
  #allocation0 [shape = 'u32[]', space=smem, size = 0x4, offset = 0x4, fixed_abs, tag = 'smem constant byte address 0x4 - core index']
  #allocation1 [shape = 'u32[144,128]{1,0:T(1,128)}', space=vmem, size = 0x12000, scoped, tag = 'internal scratch']
  %s0 = inlined_call_operand.vmem [shape: f32[2,8,32], index: 0, kind: input, shape index: {}]
  %s1 = inlined_call_operand.vmem [shape: s32[2,1,1], index: 1, kind: input, shape index: {}]
  %s2 = inlined_call_operand.vmem [shape: f32[1,32], index: 2, kind: input, shape index: {}]
  %s3 = inlined_call_operand.hbm [shape: f32[1,32], index: 3, kind: input, shape index: {}]
  %s4 = inlined_call_operand.vmem [shape: bf16[32,96], index: 4, kind: input, shape index: {}]
  %s5 = inlined_call_operand.hbm [shape: f32[1,96], index: 5, kind: input, shape index: {}]
  %s6 = inlined_call_operand.vmem [shape: bf16[32,32], index: 6, kind: input, shape index: {}]
  %s7 = inlined_call_operand.hbm [shape: f32[1,32], index: 7, kind: input, shape index: {}]
  %s8 = inlined_call_operand.hbm [shape: f32[1,32], index: 8, kind: input, shape index: {}]
  %s9 = inlined_call_operand.vmem [shape: f32[1,32], index: 9, kind: input, shape index: {}]
  %s10 = inlined_call_operand.vmem [shape: bf16[32,64], index: 10, kind: input, shape index: {}]
  %s11 = inlined_call_operand.vmem [shape: f32[1,64], index: 11, kind: input, shape index: {}]
  %s12 = inlined_call_operand.vmem [shape: bf16[64,32], index: 12, kind: input, shape index: {}]
  %s13 = inlined_call_operand.vmem [shape: f32[1,32], index: 13, kind: input, shape index: {}]
  %s14 = inlined_call_operand.hbm [shape: f32[2,8,32], index: 14, kind: output, shape index: {}]
  %s15 = sld [smem:[#allocation0]]
  $region105: #{tpu_custom_call.1} parent=0
    _
  %s17 = ssub.s32 1, %s15
  %s18 = scalar_select 0, %s17, %s15
  $region1: #{tpu_custom_call.1} parent=0
    #allocation2 [shape = 'u8[512]{0}', space=vmem, size = 0x400, scoped, tag = 'input window, operand 3, single buffered']
    #allocation3 [shape = 's32[2]{0}', space=sflag, size = 0x8, scoped, tag = 'scoped memory for tpu_custom_call.1']
    #allocation4 [shape = 's32[2]{0}', space=sflag, size = 0x8, scoped, tag = 'scoped memory for tpu_custom_call.1']
    #allocation5 [shape = 'u8[512]{0}', space=vmem, size = 0x400, scoped, tag = 'input window, operand 5, single buffered']
    #allocation6 [shape = 's32[1]{0}', space=sflag, size = 0x4, scoped, tag = 'scoped memory for tpu_custom_call.1']
    #allocation7 [shape = 'u8[512]{0}', space=vmem, size = 0x400, scoped, tag = 'input window, operand 7, single buffered']
    #allocation8 [shape = 'u8[512]{0}', space=vmem, size = 0x400, scoped, tag = 'input window, operand 8, single buffered']
    #allocation9 [shape = 's32[1]{0}', space=sflag, size = 0x4, scoped, tag = 'scoped memory for tpu_custom_call.1']
    #allocation10 [shape = 'u8[8192]{0}', space=vmem, size = 0x2000, scoped, tag = 'output window, operand 0']
    %19 = vsyncpa [#allocation3], 0
    %20 = vsyncpa [#allocation6], 0
    %21 = vsyncpa [#allocation9], 0
    %22 = vsyncpa [#allocation4], 0
    %s23 = scalar_lea.sflag [#allocation4], 1
    %24 = vsyncpa %s23, 0
    loop: start=0, step=1, limit=4
    $region2: #{tpu_custom_call.1} parent=1 // loop_pre_header
      _
    $region3: #{tpu_custom_call.1} parent=1 // loop_header
      %s26 = sphi 0, %s30
      %p27 = scmp.ge.s32.totalorder %s26, 4
      %s36 = sphi 0, %s38
      %s39 = sphi 0, %s36
      %s40 = sphi 0, %s39
      %s56 = sphi 0, %s40
      %s62 = sphi 0, %s64
      %s65 = sphi 0, %s62
      %s66 = sphi 0, %s65
      %s82 = sphi 0, %s66
      %s86 = sphi 0, %s86
      %s88 = sphi 0, %s86
      %s89 = sphi 0, %s88
      %s103 = sphi 0, %s89
      %s107 = sphi 0, %s107
      %s109 = sphi 0, %s107
      %s110 = sphi 0, %s109
      %s124 = sphi 0, %s110
      %s128 = sphi 0, %s128
      %s130 = sphi 0, %s128
      %s131 = sphi 0, %s130
      %s145 = sphi 0, %s131
      %s149 = sphi 0, %s149
      %s151 = sphi 0, %s149
      %s152 = sphi 0, %s151
      %s166 = sphi 0, %s152
      %s170 = sphi 0, %s170
      %s172 = sphi 0, %s170
      %s173 = sphi 0, %s172
      %s187 = sphi 0, %s173
      %s191 = sphi 0, %s191
      %s193 = sphi 0, %s191
      %s194 = sphi 0, %s193
      %s208 = sphi 0, %s194
      %s212 = sphi 0, %s212
      %s214 = sphi 0, %s212
      %s215 = sphi 0, %s214
      %s229 = sphi 0, %s215
      %s233 = sphi 0, %s233
      %s235 = sphi 0, %s233
      %s236 = sphi 0, %s235
      %s250 = sphi 0, %s236
      %s254 = sphi 0, %s254
      %s256 = sphi 0, %s254
      %s257 = sphi 0, %s256
      %s271 = sphi 0, %s257
      %s275 = sphi 0, %s275
      %s277 = sphi 0, %s275
      %s278 = sphi 0, %s277
      %s292 = sphi 0, %s278
      %s296 = sphi 0, %s296
      %s298 = sphi 0, %s296
      %s299 = sphi 0, %s298
      %s313 = sphi 0, %s299
      %s317 = sphi 0, %s317
      %s319 = sphi 0, %s317
      %s320 = sphi 0, %s319
      %s334 = sphi 0, %s320
      %s340 = sphi 0, %s342
      %s343 = sphi 0, %s340
      %s344 = sphi 0, %s343
      %s360 = sphi 0, %s344
    $region4: #{tpu_custom_call.1} parent=1 // loop_header_branch
      %29 = sbr.rel (%p27) target = $region8
    $region5: #{tpu_custom_call.1} parent=1 // loop_body
      %s31 = ssub.s32 %s26, 1
      %s32 = ssub.s32 %s26, 2
      %s33 = sadd.s32 %s26, 1
      %s34 = ssub.s32 %s26, %s33
      %p35 = scmp.eq.s32.totalorder %s34, 0
      %s37 = sadd.s32 %s36, 1
      %s38 = scalar_select %p35, %s36, %s37
      %p41 = pneg %p35
      %p42 = scmp.eq.s32.totalorder %s26, 1
      %p43 = por %p41, %p42
      %p44 = scmp.ne.s32.totalorder %s36, %s39
      %p45 = scmp.eq.s32.totalorder %s26, 0
      %p46 = por %p44, %p45
      %p47 = scmp.ne.s32.totalorder %s36, %s39
      %p48 = scmp.eq.s32.totalorder %s31, 1
      %p49 = por %p47, %p48
      %p50 = scmp.ne.s32.totalorder %s39, %s40
      %p51 = scmp.eq.s32.totalorder %s31, 0
      %p52 = por %p50, %p51
      %p53 = scmp.ne.s32.totalorder %s39, %s40
      %p54 = scmp.eq.s32.totalorder %s32, 1
      %p55 = por %p53, %p54
      %p57 = scmp.ne.s32.totalorder %s40, %s56
      %p58 = scmp.eq.s32.totalorder %s32, 0
      %p59 = por %p57, %p58
      %s60 = ssub.s32 %s26, %s33
      %p61 = scmp.eq.s32.totalorder %s60, 0
      %s63 = sadd.s32 %s62, 1
      %s64 = scalar_select %p61, %s62, %s63
      %p67 = pneg %p61
      %p68 = scmp.eq.s32.totalorder %s26, 1
      %p69 = por %p67, %p68
      %p70 = scmp.ne.s32.totalorder %s62, %s65
      %p71 = scmp.eq.s32.totalorder %s26, 0
      %p72 = por %p70, %p71
      %p73 = scmp.ne.s32.totalorder %s62, %s65
      %p74 = scmp.eq.s32.totalorder %s31, 1
      %p75 = por %p73, %p74
      %p76 = scmp.ne.s32.totalorder %s65, %s66
      %p77 = scmp.eq.s32.totalorder %s31, 0
      %p78 = por %p76, %p77
      %p79 = scmp.ne.s32.totalorder %s65, %s66
      %p80 = scmp.eq.s32.totalorder %s32, 1
      %p81 = por %p79, %p80
      %p83 = scmp.ne.s32.totalorder %s66, %s82
      %p84 = scmp.eq.s32.totalorder %s32, 0
      %p85 = por %p83, %p84
      %s87 = sadd.s32 %s86, 1
      %p90 = scmp.eq.s32.totalorder %s26, 1
      %p91 = scmp.ne.s32.totalorder %s86, %s88
      %p92 = scmp.eq.s32.totalorder %s26, 0
      %p93 = por %p91, %p92
      %p94 = scmp.ne.s32.totalorder %s86, %s88
      %p95 = scmp.eq.s32.totalorder %s31, 1
      %p96 = por %p94, %p95
      %p97 = scmp.ne.s32.totalorder %s88, %s89
      %p98 = scmp.eq.s32.totalorder %s31, 0
      %p99 = por %p97, %p98
      %p100 = scmp.ne.s32.totalorder %s88, %s89
      %p101 = scmp.eq.s32.totalorder %s32, 1
      %p102 = por %p100, %p101
      %p104 = scmp.ne.s32.totalorder %s89, %s103
      %p105 = scmp.eq.s32.totalorder %s32, 0
      %p106 = por %p104, %p105
      %s108 = sadd.s32 %s107, 1
      %p111 = scmp.eq.s32.totalorder %s26, 1
      %p112 = scmp.ne.s32.totalorder %s107, %s109
      %p113 = scmp.eq.s32.totalorder %s26, 0
      %p114 = por %p112, %p113
      %p115 = scmp.ne.s32.totalorder %s107, %s109
      %p116 = scmp.eq.s32.totalorder %s31, 1
      %p117 = por %p115, %p116
      %p118 = scmp.ne.s32.totalorder %s109, %s110
      %p119 = scmp.eq.s32.totalorder %s31, 0
      %p120 = por %p118, %p119
      %p121 = scmp.ne.s32.totalorder %s109, %s110
      %p122 = scmp.eq.s32.totalorder %s32, 1
      %p123 = por %p121, %p122
      %p125 = scmp.ne.s32.totalorder %s110, %s124
      %p126 = scmp.eq.s32.totalorder %s32, 0
      %p127 = por %p125, %p126
      %s129 = sadd.s32 %s128, 1
      %p132 = scmp.eq.s32.totalorder %s26, 1
      %p133 = scmp.ne.s32.totalorder %s128, %s130
      %p134 = scmp.eq.s32.totalorder %s26, 0
      %p135 = por %p133, %p134
      %p136 = scmp.ne.s32.totalorder %s128, %s130
      %p137 = scmp.eq.s32.totalorder %s31, 1
      %p138 = por %p136, %p137
      %p139 = scmp.ne.s32.totalorder %s130, %s131
      %p140 = scmp.eq.s32.totalorder %s31, 0
      %p141 = por %p139, %p140
      %p142 = scmp.ne.s32.totalorder %s130, %s131
      %p143 = scmp.eq.s32.totalorder %s32, 1
      %p144 = por %p142, %p143
      %p146 = scmp.ne.s32.totalorder %s131, %s145
      %p147 = scmp.eq.s32.totalorder %s32, 0
      %p148 = por %p146, %p147
      %s150 = sadd.s32 %s149, 1
      %p153 = scmp.eq.s32.totalorder %s26, 1
      %p154 = scmp.ne.s32.totalorder %s149, %s151
      %p155 = scmp.eq.s32.totalorder %s26, 0
      %p156 = por %p154, %p155
      %p157 = scmp.ne.s32.totalorder %s149, %s151
      %p158 = scmp.eq.s32.totalorder %s31, 1
      %p159 = por %p157, %p158
      %p160 = scmp.ne.s32.totalorder %s151, %s152
      %p161 = scmp.eq.s32.totalorder %s31, 0
      %p162 = por %p160, %p161
      %p163 = scmp.ne.s32.totalorder %s151, %s152
      %p164 = scmp.eq.s32.totalorder %s32, 1
      %p165 = por %p163, %p164
      %p167 = scmp.ne.s32.totalorder %s152, %s166
      %p168 = scmp.eq.s32.totalorder %s32, 0
      %p169 = por %p167, %p168
      %s171 = sadd.s32 %s170, 1
      %p174 = scmp.eq.s32.totalorder %s26, 1
      %p175 = scmp.ne.s32.totalorder %s170, %s172
      %p176 = scmp.eq.s32.totalorder %s26, 0
      %p177 = por %p175, %p176
      %p178 = scmp.ne.s32.totalorder %s170, %s172
      %p179 = scmp.eq.s32.totalorder %s31, 1
      %p180 = por %p178, %p179
      %p181 = scmp.ne.s32.totalorder %s172, %s173
      %p182 = scmp.eq.s32.totalorder %s31, 0
      %p183 = por %p181, %p182
      %p184 = scmp.ne.s32.totalorder %s172, %s173
      %p185 = scmp.eq.s32.totalorder %s32, 1
      %p186 = por %p184, %p185
      %p188 = scmp.ne.s32.totalorder %s173, %s187
      %p189 = scmp.eq.s32.totalorder %s32, 0
      %p190 = por %p188, %p189
      %s192 = sadd.s32 %s191, 1
      %p195 = scmp.eq.s32.totalorder %s26, 1
      %p196 = scmp.ne.s32.totalorder %s191, %s193
      %p197 = scmp.eq.s32.totalorder %s26, 0
      %p198 = por %p196, %p197
      %p199 = scmp.ne.s32.totalorder %s191, %s193
      %p200 = scmp.eq.s32.totalorder %s31, 1
      %p201 = por %p199, %p200
      %p202 = scmp.ne.s32.totalorder %s193, %s194
      %p203 = scmp.eq.s32.totalorder %s31, 0
      %p204 = por %p202, %p203
      %p205 = scmp.ne.s32.totalorder %s193, %s194
      %p206 = scmp.eq.s32.totalorder %s32, 1
      %p207 = por %p205, %p206
      %p209 = scmp.ne.s32.totalorder %s194, %s208
      %p210 = scmp.eq.s32.totalorder %s32, 0
      %p211 = por %p209, %p210
      %s213 = sadd.s32 %s212, 1
      %p216 = scmp.eq.s32.totalorder %s26, 1
      %p217 = scmp.ne.s32.totalorder %s212, %s214
      %p218 = scmp.eq.s32.totalorder %s26, 0
      %p219 = por %p217, %p218
      %p220 = scmp.ne.s32.totalorder %s212, %s214
      %p221 = scmp.eq.s32.totalorder %s31, 1
      %p222 = por %p220, %p221
      %p223 = scmp.ne.s32.totalorder %s214, %s215
      %p224 = scmp.eq.s32.totalorder %s31, 0
      %p225 = por %p223, %p224
      %p226 = scmp.ne.s32.totalorder %s214, %s215
      %p227 = scmp.eq.s32.totalorder %s32, 1
      %p228 = por %p226, %p227
      %p230 = scmp.ne.s32.totalorder %s215, %s229
      %p231 = scmp.eq.s32.totalorder %s32, 0
      %p232 = por %p230, %p231
      %s234 = sadd.s32 %s233, 1
      %p237 = scmp.eq.s32.totalorder %s26, 1
      %p238 = scmp.ne.s32.totalorder %s233, %s235
      %p239 = scmp.eq.s32.totalorder %s26, 0
      %p240 = por %p238, %p239
      %p241 = scmp.ne.s32.totalorder %s233, %s235
      %p242 = scmp.eq.s32.totalorder %s31, 1
      %p243 = por %p241, %p242
      %p244 = scmp.ne.s32.totalorder %s235, %s236
      %p245 = scmp.eq.s32.totalorder %s31, 0
      %p246 = por %p244, %p245
      %p247 = scmp.ne.s32.totalorder %s235, %s236
      %p248 = scmp.eq.s32.totalorder %s32, 1
      %p249 = por %p247, %p248
      %p251 = scmp.ne.s32.totalorder %s236, %s250
      %p252 = scmp.eq.s32.totalorder %s32, 0
      %p253 = por %p251, %p252
      %s255 = sadd.s32 %s254, 1
      %p258 = scmp.eq.s32.totalorder %s26, 1
      %p259 = scmp.ne.s32.totalorder %s254, %s256
      %p260 = scmp.eq.s32.totalorder %s26, 0
      %p261 = por %p259, %p260
      %p262 = scmp.ne.s32.totalorder %s254, %s256
      %p263 = scmp.eq.s32.totalorder %s31, 1
      %p264 = por %p262, %p263
      %p265 = scmp.ne.s32.totalorder %s256, %s257
      %p266 = scmp.eq.s32.totalorder %s31, 0
      %p267 = por %p265, %p266
      %p268 = scmp.ne.s32.totalorder %s256, %s257
      %p269 = scmp.eq.s32.totalorder %s32, 1
      %p270 = por %p268, %p269
      %p272 = scmp.ne.s32.totalorder %s257, %s271
      %p273 = scmp.eq.s32.totalorder %s32, 0
      %p274 = por %p272, %p273
      %s276 = sadd.s32 %s275, 1
      %p279 = scmp.eq.s32.totalorder %s26, 1
      %p280 = scmp.ne.s32.totalorder %s275, %s277
      %p281 = scmp.eq.s32.totalorder %s26, 0
      %p282 = por %p280, %p281
      %p283 = scmp.ne.s32.totalorder %s275, %s277
      %p284 = scmp.eq.s32.totalorder %s31, 1
      %p285 = por %p283, %p284
      %p286 = scmp.ne.s32.totalorder %s277, %s278
      %p287 = scmp.eq.s32.totalorder %s31, 0
      %p288 = por %p286, %p287
      %p289 = scmp.ne.s32.totalorder %s277, %s278
      %p290 = scmp.eq.s32.totalorder %s32, 1
      %p291 = por %p289, %p290
      %p293 = scmp.ne.s32.totalorder %s278, %s292
      %p294 = scmp.eq.s32.totalorder %s32, 0
      %p295 = por %p293, %p294
      %s297 = sadd.s32 %s296, 1
      %p300 = scmp.eq.s32.totalorder %s26, 1
      %p301 = scmp.ne.s32.totalorder %s296, %s298
      %p302 = scmp.eq.s32.totalorder %s26, 0
      %p303 = por %p301, %p302
      %p304 = scmp.ne.s32.totalorder %s296, %s298
      %p305 = scmp.eq.s32.totalorder %s31, 1
      %p306 = por %p304, %p305
      %p307 = scmp.ne.s32.totalorder %s298, %s299
      %p308 = scmp.eq.s32.totalorder %s31, 0
      %p309 = por %p307, %p308
      %p310 = scmp.ne.s32.totalorder %s298, %s299
      %p311 = scmp.eq.s32.totalorder %s32, 1
      %p312 = por %p310, %p311
      %p314 = scmp.ne.s32.totalorder %s299, %s313
      %p315 = scmp.eq.s32.totalorder %s32, 0
      %p316 = por %p314, %p315
      %s318 = sadd.s32 %s317, 1
      %p321 = scmp.eq.s32.totalorder %s26, 1
      %p322 = scmp.ne.s32.totalorder %s317, %s319
      %p323 = scmp.eq.s32.totalorder %s26, 0
      %p324 = por %p322, %p323
      %p325 = scmp.ne.s32.totalorder %s317, %s319
      %p326 = scmp.eq.s32.totalorder %s31, 1
      %p327 = por %p325, %p326
      %p328 = scmp.ne.s32.totalorder %s319, %s320
      %p329 = scmp.eq.s32.totalorder %s31, 0
      %p330 = por %p328, %p329
      %p331 = scmp.ne.s32.totalorder %s319, %s320
      %p332 = scmp.eq.s32.totalorder %s32, 1
      %p333 = por %p331, %p332
      %p335 = scmp.ne.s32.totalorder %s320, %s334
      %p336 = scmp.eq.s32.totalorder %s32, 0
      %p337 = por %p335, %p336
      %s338 = ssub.s32 %s26, %s33
      %p339 = scmp.eq.s32.totalorder %s338, 0
      %s341 = sadd.s32 %s340, 1
      %s342 = scalar_select %p339, %s340, %s341
      %p345 = pneg %p339
      %p346 = scmp.eq.s32.totalorder %s26, 1
      %p347 = por %p345, %p346
      %p348 = scmp.ne.s32.totalorder %s340, %s343
      %p349 = scmp.eq.s32.totalorder %s26, 0
      %p350 = por %p348, %p349
      %p351 = scmp.ne.s32.totalorder %s340, %s343
      %p352 = scmp.eq.s32.totalorder %s31, 1
      %p353 = por %p351, %p352
      %p354 = scmp.ne.s32.totalorder %s343, %s344
      %p355 = scmp.eq.s32.totalorder %s31, 0
      %p356 = por %p354, %p355
      %p357 = scmp.ne.s32.totalorder %s343, %s344
      %p358 = scmp.eq.s32.totalorder %s32, 1
      %p359 = por %p357, %p358
      %p361 = scmp.ne.s32.totalorder %s344, %s360
      %p362 = scmp.eq.s32.totalorder %s32, 0
      %p363 = por %p361, %p362
      %p364 = scmp.le.s32.totalorder 1, %s26
      %p365 = scmp.lt.s32.totalorder %s26, 3
      %p366 = pnand %p364, %p365
      %p367 = pneg %p366
      // Predicated region
      $region9: #{tpu_custom_call.1} parent=5 // pred_check
        _
      $region10: #{tpu_custom_call.1} parent=5 // pred_check_branch
        %369 = sbr.rel (%p366) target = $region12
      $region11: #{tpu_custom_call.1} parent=5 // pred_region
        %s370 = ssub.s32 %s26, 1
        // Predicated region
        $region13: #{tpu_custom_call.1} parent=11 // pred_check
          %p371 = pneg %p99
        $region14: #{tpu_custom_call.1} parent=11 // pred_check_branch
          %373 = sbr.rel (%p371) target = $region16
        $region15: #{tpu_custom_call.1} parent=11 // pred_region
          _
        $region16: #{tpu_custom_call.1} parent=11 // pred_fallthru
          _
        // Predicated region
        $region17: #{tpu_custom_call.1} parent=11 // pred_check
          %p374 = pneg %p120
        $region18: #{tpu_custom_call.1} parent=11 // pred_check_branch
          %376 = sbr.rel (%p374) target = $region20
        $region19: #{tpu_custom_call.1} parent=11 // pred_region
          %s378 = ssub.s32 16, 16
          %379 = vsyncadd [#allocation3], %s378
          %s381 = sshll.u32 [#allocation2], 4
          %s382 = int_to_ptr.vmem [resolvable:$true] %s381
          %384 = dma.hbm_to_vmem [thread:$0]  %s3, 16, %s382, [#allocation3]
        $region20: #{tpu_custom_call.1} parent=11 // pred_fallthru
          _
        // Predicated region
        $region21: #{tpu_custom_call.1} parent=11 // pred_check
          %p385 = pneg %p141
        $region22: #{tpu_custom_call.1} parent=11 // pred_check_branch
          %387 = sbr.rel (%p385) target = $region24
        $region23: #{tpu_custom_call.1} parent=11 // pred_region
          _
        $region24: #{tpu_custom_call.1} parent=11 // pred_fallthru
          _
        // Predicated region
        $region25: #{tpu_custom_call.1} parent=11 // pred_check
          %p388 = pneg %p162
        $region26: #{tpu_custom_call.1} parent=11 // pred_check_branch
          %390 = sbr.rel (%p388) target = $region28
        $region27: #{tpu_custom_call.1} parent=11 // pred_region
          %s392 = ssub.s32 16, 16
          %393 = vsyncadd [#allocation6], %s392
          %s395 = sshll.u32 [#allocation5], 4
          %s396 = int_to_ptr.vmem [resolvable:$true] %s395
          %398 = dma.hbm_to_vmem [thread:$0]  %s5, 16, %s396, [#allocation6]
        $region28: #{tpu_custom_call.1} parent=11 // pred_fallthru
          _
        // Predicated region
        $region29: #{tpu_custom_call.1} parent=11 // pred_check
          %p399 = pneg %p183
        $region30: #{tpu_custom_call.1} parent=11 // pred_check_branch
          %401 = sbr.rel (%p399) target = $region32
        $region31: #{tpu_custom_call.1} parent=11 // pred_region
          _
        $region32: #{tpu_custom_call.1} parent=11 // pred_fallthru
          _
        // Predicated region
        $region33: #{tpu_custom_call.1} parent=11 // pred_check
          %p402 = pneg %p204
        $region34: #{tpu_custom_call.1} parent=11 // pred_check_branch
          %404 = sbr.rel (%p402) target = $region36
        $region35: #{tpu_custom_call.1} parent=11 // pred_region
          %s406 = ssub.s32 16, 16
          %407 = vsyncadd [#allocation6], %s406
          %s409 = sshll.u32 [#allocation7], 4
          %s410 = int_to_ptr.vmem [resolvable:$true] %s409
          %412 = dma.hbm_to_vmem [thread:$0]  %s7, 16, %s410, [#allocation6]
        $region36: #{tpu_custom_call.1} parent=11 // pred_fallthru
          _
        // Predicated region
        $region37: #{tpu_custom_call.1} parent=11 // pred_check
          %p413 = pneg %p225
        $region38: #{tpu_custom_call.1} parent=11 // pred_check_branch
          %415 = sbr.rel (%p413) target = $region40
        $region39: #{tpu_custom_call.1} parent=11 // pred_region
          %s417 = ssub.s32 16, 16
          %418 = vsyncadd [#allocation9], %s417
          %s420 = sshll.u32 [#allocation8], 4
          %s421 = int_to_ptr.vmem [resolvable:$true] %s420
          %423 = dma.hbm_to_vmem [thread:$0]  %s8, 16, %s421, [#allocation9]
        $region40: #{tpu_custom_call.1} parent=11 // pred_fallthru
          _
        // Predicated region
        $region41: #{tpu_custom_call.1} parent=11 // pred_check
          %p424 = pneg %p246
        $region42: #{tpu_custom_call.1} parent=11 // pred_check_branch
          %426 = sbr.rel (%p424) target = $region44
        $region43: #{tpu_custom_call.1} parent=11 // pred_region
          _
        $region44: #{tpu_custom_call.1} parent=11 // pred_fallthru
          _
        // Predicated region
        $region45: #{tpu_custom_call.1} parent=11 // pred_check
          %p427 = pneg %p267
        $region46: #{tpu_custom_call.1} parent=11 // pred_check_branch
          %429 = sbr.rel (%p427) target = $region48
        $region47: #{tpu_custom_call.1} parent=11 // pred_region
          _
        $region48: #{tpu_custom_call.1} parent=11 // pred_fallthru
          _
        // Predicated region
        $region49: #{tpu_custom_call.1} parent=11 // pred_check
          %p430 = pneg %p288
        $region50: #{tpu_custom_call.1} parent=11 // pred_check_branch
          %432 = sbr.rel (%p430) target = $region52
        $region51: #{tpu_custom_call.1} parent=11 // pred_region
          _
        $region52: #{tpu_custom_call.1} parent=11 // pred_fallthru
          _
        // Predicated region
        $region53: #{tpu_custom_call.1} parent=11 // pred_check
          %p433 = pneg %p309
        $region54: #{tpu_custom_call.1} parent=11 // pred_check_branch
          %435 = sbr.rel (%p433) target = $region56
        $region55: #{tpu_custom_call.1} parent=11 // pred_region
          _
        $region56: #{tpu_custom_call.1} parent=11 // pred_fallthru
          _
        // Predicated region
        $region57: #{tpu_custom_call.1} parent=11 // pred_check
          %p436 = pneg %p330
        $region58: #{tpu_custom_call.1} parent=11 // pred_check_branch
          %438 = sbr.rel (%p436) target = $region60
        $region59: #{tpu_custom_call.1} parent=11 // pred_region
          _
        $region60: #{tpu_custom_call.1} parent=11 // pred_fallthru
          _
      $region12: #{tpu_custom_call.1} parent=5 // pred_fallthru
        _
      %p439 = scmp.lt.s32.totalorder %s26, 2
      // Predicated region
      $region61: #{tpu_custom_call.1} parent=5 // pred_check
        %p440 = pneg %p439
      $region62: #{tpu_custom_call.1} parent=5 // pred_check_branch
        %442 = sbr.rel (%p440) target = $region64
      $region63: #{tpu_custom_call.1} parent=5 // pred_region
        // Predicated region
        $region65: #{tpu_custom_call.1} parent=63 // pred_check
          %p443 = pneg %p46
        $region66: #{tpu_custom_call.1} parent=63 // pred_check_branch
          %445 = sbr.rel (%p443) target = $region68
        $region67: #{tpu_custom_call.1} parent=63 // pred_region
          %p446 = scmp.lt.s32.totalorder %s26, 1
          %s447 = scalar_select %p446, %s26, 1
          %s448 = smul.addr %s447, 8
          %s449 = scalar_lea.vmem %s0, %s448
        $region68: #{tpu_custom_call.1} parent=63 // pred_fallthru
          _
        // Predicated region
        $region69: #{tpu_custom_call.1} parent=63 // pred_check
          %p450 = pneg %p72
        $region70: #{tpu_custom_call.1} parent=63 // pred_check_branch
          %452 = sbr.rel (%p450) target = $region72
        $region71: #{tpu_custom_call.1} parent=63 // pred_region
          %p453 = scmp.lt.s32.totalorder %s26, 1
          %s454 = scalar_select %p453, %s26, 1
          %s455 = scalar_lea.vmem %s1, %s454
        $region72: #{tpu_custom_call.1} parent=63 // pred_fallthru
          _
      $region64: #{tpu_custom_call.1} parent=5 // pred_fallthru
        _
      %p456 = scmp.le.s32.totalorder 1, %s26
      %p457 = scmp.lt.s32.totalorder %s26, 3
      %p458 = pnand %p456, %p457
      %p459 = pneg %p458
      // Predicated region
      $region73: #{tpu_custom_call.1} parent=5 // pred_check
        _
      $region74: #{tpu_custom_call.1} parent=5 // pred_check_branch
        %461 = sbr.rel (%p458) target = $region76
      $region75: #{tpu_custom_call.1} parent=5 // pred_region
        %s462 = ssub.s32 %s26, 1
        // Predicated region
        $region77: #{tpu_custom_call.1} parent=75 // pred_check
          %p463 = pneg %p120
        $region78: #{tpu_custom_call.1} parent=75 // pred_check_branch
          %465 = sbr.rel (%p463) target = $region80
        $region79: #{tpu_custom_call.1} parent=75 // pred_region
          %466 = dma.done [#allocation3], 16
        $region80: #{tpu_custom_call.1} parent=75 // pred_fallthru
          _
        // Predicated region
        $region81: #{tpu_custom_call.1} parent=75 // pred_check
          %p467 = pneg %p162
        $region82: #{tpu_custom_call.1} parent=75 // pred_check_branch
          %469 = sbr.rel (%p467) target = $region84
        $region83: #{tpu_custom_call.1} parent=75 // pred_region
          %470 = dma.done [#allocation6], 16
        $region84: #{tpu_custom_call.1} parent=75 // pred_fallthru
          _
        // Predicated region
        $region85: #{tpu_custom_call.1} parent=75 // pred_check
          %p471 = pneg %p204
        $region86: #{tpu_custom_call.1} parent=75 // pred_check_branch
          %473 = sbr.rel (%p471) target = $region88
        $region87: #{tpu_custom_call.1} parent=75 // pred_region
          %474 = dma.done [#allocation6], 16
        $region88: #{tpu_custom_call.1} parent=75 // pred_fallthru
          _
        // Predicated region
        $region89: #{tpu_custom_call.1} parent=75 // pred_check
          %p475 = pneg %p225
        $region90: #{tpu_custom_call.1} parent=75 // pred_check_branch
          %477 = sbr.rel (%p475) target = $region92
        $region91: #{tpu_custom_call.1} parent=75 // pred_region
          %478 = dma.done [#allocation9], 16
        $region92: #{tpu_custom_call.1} parent=75 // pred_fallthru
          _
        %p479 = scmp.lt.s32.totalorder %s31, 1
        %s480 = scalar_select %p479, %s31, 1
        %s481 = smul.addr %s480, 8
        %s482 = scalar_lea.vmem %s0, %s481
        %p483 = pneg %p52
        %p484 = pneg %p49
        %p485 = scmp.lt.s32.totalorder %s31, 1
        %s486 = scalar_select %p485, %s31, 1
        %s487 = scalar_lea.vmem %s1, %s486
        %p488 = pneg %p78
        %p489 = pneg %p75
        %p490 = pneg %p99
        %p491 = pneg %p96
        %p492 = pneg %p120
        %p493 = pneg %p117
        %p494 = pneg %p141
        %p495 = pneg %p138
        %p496 = pneg %p162
        %p497 = pneg %p159
        %p498 = pneg %p183
        %p499 = pneg %p180
        %p500 = pneg %p204
        %p501 = pneg %p201
        %p502 = pneg %p225
        %p503 = pneg %p222
        %p504 = pneg %p246
        %p505 = pneg %p243
        %p506 = pneg %p267
        %p507 = pneg %p264
        %p508 = pneg %p288
        %p509 = pneg %p285
        %p510 = pneg %p309
        %p511 = pneg %p306
        %p512 = pneg %p330
        %p513 = pneg %p327
        %p514 = pneg %p356
        %p515 = pneg %p353
        %s516 = sand.u32 %s343, 1
        %s517 = scalar_lea.sflag [#allocation4], %s516
        %s518 = sand.u32 %s343, 1
        %s519 = smul.addr %s518, 8
        %s520 = scalar_lea.vmem [#allocation10], %s519
        %p521 = scmp.lt.s32.totalorder %s31, 1
        %s522 = scalar_select %p521, %s31, 1
        %s523 = smul.addr %s522, 8
        %s524 = scalar_lea.vmem %s0, %s523
        %p525 = scmp.lt.s32.totalorder %s31, 1
        %s526 = scalar_select %p525, %s31, 1
        %s527 = scalar_lea.vmem %s1, %s526
        %v529 = vld [vmem:[%s524] sm:$0xff]
        %v530 = vlaneseq
        %v531 = vand.u32 %v530, 127
        %v532 = vld [vmem:[%s527] sm:$0x1]
        %533 = vset.pattern.permute.xlu0 0
        %534 = vperm.xlu0 %533, %v532
        %v535 = vpop.permute.xlu0 %534
        %v536 = vlaneseq
        %v537 = vshrl.u32 %v536, 7
        %v538 = vsub.s32 0, %v537
        %v539 = vrot.slane %v535, %v538
        %vm540 = vcmp.lt.s32.totalorder %v531, %v539
        %v541 = vsel %vm540, 0.0, -1e+30
        %v542 = vld [vmem:[%s2] sm:$0x1]
        %v543 = vld [vmem:[#allocation2] sm:$0x1]
        %vm544 = vcmask 261120
        %v545 = vsel %vm544, %v529, 0.0
        %546 = vadd.xlane.f32.xlu0 %v545
        %v547 = vpop.xlane.xlu0 %546
        %v548 = vrcp.pop 32.0
        %v549 = vmul.f32 %v547, %v548
        %v550 = vsub.f32 %v529, %v549
        %v551 = vmul.f32 %v550, %v550
        %v552 = vsel %vm544, %v551, 0.0
        %553 = vadd.xlane.f32.xlu0 %v552
        %v554 = vpop.xlane.xlu0 %553
        %v555 = vmul.f32 %v554, %v548
        %v556 = vadd.f32 %v555, 1e-05
        %v557 = vrsqrt.pop %v556
        %v558 = vmul.f32 %v550, %v557
        %v560 = vlaneseq
        %v561 = vshrl.u32 %v560, 7
        %v562 = vsub.s32 0, %v561
        %v563 = vrot.slane %v542, %v562
        %v565 = vmul.f32 %v558, %v563
        %v567 = vlaneseq
        %v568 = vshrl.u32 %v567, 7
        %v569 = vsub.s32 0, %v568
        %v570 = vrot.slane %v543, %v569
        %v572 = vadd.f32 %v565, %v570
        %v573 = vpack.c.bf16 %v572, %v572
        %v574 = vld [vmem:[%s4] sm:$0xf]
        %v575 = vld [vmem:[%s4 + $0x4] sm:$0xf]
        %v576 = vld [vmem:[%s4 + $0x8] sm:$0xf]
        %v577 = vld [vmem:[%s4 + $0xc] sm:$0xf]
        %v578 = vld [vmem:[#allocation5] sm:$0x1]
        %v580 = vlaneseq
        %v581 = vshrl.u32 %v580, 7
        %v582 = vsub.s32 0, %v581
        %v583 = vrot.slane %v578, %v582
        %v589 = vunpack.c.l.b16 %v574
        %v590 = vunpack.c.l.b16 %v575
        %v591 = vunpack.c.l.b16 %v576
        %v592 = vunpack.c.l.b16 %v577
        %v593 = vpack.c.b16 %v590, %v589
        %v594 = vpack.c.b16 %v592, %v591
        %v598 = vsel %vm544, %v573, 0
        %600 = vmatprep.subr.bf16.mxu0 0
        %601 = vmatpush1.bf16.msra.mxu0 0
        %602 = vmatprep.subr.bf16.mxu0 0
        %603 = vmatpush1.bf16.msra.mxu0 0
        %604 = vmatprep.subr.bf16.mxu0 0
        %605 = vmatpush1.bf16.msra.mxu0 0
        %606 = vmatprep.subr.bf16.mxu0 0
        %607 = vmatpush1.bf16.msra.mxu0 0
        %608 = vmatprep.subr.bf16.mxu0 0
        %609 = vmatpush1.bf16.msra.mxu0 0
        %610 = vmatprep.subr.bf16.mxu0 0
        %611 = vmatpush1.bf16.msra.mxu0 0
        %612 = vmatprep.subr.bf16.mxu0 0
        %613 = vmatpush1.bf16.msra.mxu0 %v594
        %614 = vmatprep.subr.bf16.mxu0 0
        %615 = vmatpush1.bf16.msra.mxu0 %v593
        %616 = vmatprep.subr.bf16.mxu0 0
        %617 = vmatpush2.bf16.msra.mxu0 0
        %618 = vmatprep.subr.bf16.mxu0 0
        %619 = vmatpush2.bf16.msra.mxu0 0
        %620 = vmatprep.subr.bf16.mxu0 0
        %621 = vmatpush2.bf16.msra.mxu0 0
        %622 = vmatprep.subr.bf16.mxu0 0
        %623 = vmatpush2.bf16.msra.mxu0 0
        %624 = vmatprep.subr.bf16.mxu0 0
        %625 = vmatpush2.bf16.msra.mxu0 0
        %626 = vmatprep.subr.bf16.mxu0 0
        %627 = vmatpush2.bf16.msra.mxu0 0
        %628 = vmatprep.subr.bf16.mxu0 0
        %629 = vmatpush2.bf16.msra.mxu0 0
        %630 = vmatprep.subr.bf16.mxu0 0
        %631 = vmatpush2.bf16.msra.mxu0 0
        %632 = vmatprep.mubr.bf16.mxu0 0
        %633 = vmatmul.mubr.bf16.gmra.mxu0 %v598
        %v634 = vpop.f32.mrf.mxu0
        %v635 = vadd.f32 %v583, %v634
        %v636 = vpop.f32.mrf.mxu0
        %v637 = vpop.f32.mrf.mxu0
        %v638 = vpop.f32.mrf.mxu0
        %639 = vdwg.mxu0
        %641 = vrot.lane.b32.xlu0 %v635, 120
        %v642 = vpop.permute.xlu0 %641
        %644 = vrot.lane.b32.xlu0 %v635, 112
        %v645 = vpop.permute.xlu0 %644
        %647 = vrot.lane.b32.xlu0 %v635, 104
        %v648 = vpop.permute.xlu0 %647
        %v650 = vpack.c.bf16 %v635, %v635
        %v651 = vpack.c.bf16 %v642, %v642
        %v652 = vpack.c.bf16 %v645, %v645
        %v653 = vpack.c.bf16 %v648, %v648
        %v654 = vlaneseq
        %v655 = vshrl.u32 %v654, 7
        %v656 = vsub.s32 0, %v655
        %v657 = vrot.slane %v541, %v656
        %659 = vrot.lane.b32.xlu0 %v650, 96
        %v660 = vpop.permute.xlu0 %659
        %vm661 = vcmask 64512
        %v663 = vsel %vm661, %v650, 0
        %v666 = vsel %vm661, %v660, 0
        %668 = vmatprep.subr.bf16.mxu0 0
        %669 = vmatpush1.bf16.xpose.msra.mxu0 0
        %670 = vmatprep.subr.bf16.mxu0 0
        %671 = vmatpush1.bf16.xpose.msra.mxu0 0
        %672 = vmatprep.subr.bf16.mxu0 0
        %673 = vmatpush1.bf16.xpose.msra.mxu0 0
        %674 = vmatprep.subr.bf16.mxu0 0
        %675 = vmatpush1.bf16.xpose.msra.mxu0 0
        %676 = vmatprep.subr.bf16.mxu0 0
        %677 = vmatpush1.bf16.xpose.msra.mxu0 0
        %678 = vmatprep.subr.bf16.mxu0 0
        %679 = vmatpush1.bf16.xpose.msra.mxu0 0
        %680 = vmatprep.subr.bf16.mxu0 0
        %681 = vmatpush1.bf16.xpose.msra.mxu0 0
        %682 = vmatprep.subr.bf16.mxu0 0
        %683 = vmatpush1.bf16.xpose.msra.mxu0 %v666
        %684 = vmatprep.subr.bf16.mxu0 0
        %685 = vmatpush2.bf16.xpose.msra.mxu0 0
        %686 = vmatprep.subr.bf16.mxu0 0
        %687 = vmatpush2.bf16.xpose.msra.mxu0 0
        %688 = vmatprep.subr.bf16.mxu0 0
        %689 = vmatpush2.bf16.xpose.msra.mxu0 0
        %690 = vmatprep.subr.bf16.mxu0 0
        %691 = vmatpush2.bf16.xpose.msra.mxu0 0
        %692 = vmatprep.subr.bf16.mxu0 0
        %693 = vmatpush2.bf16.xpose.msra.mxu0 0
        %694 = vmatprep.subr.bf16.mxu0 0
        %695 = vmatpush2.bf16.xpose.msra.mxu0 0
        %696 = vmatprep.subr.bf16.mxu0 0
        %697 = vmatpush2.bf16.xpose.msra.mxu0 0
        %698 = vmatprep.subr.bf16.mxu0 0
        %699 = vmatpush2.bf16.xpose.msra.mxu0 0
        %700 = vmatprep.mubr.bf16.mxu0 0
        %701 = vmatmul.mubr.bf16.gmra.mxu0 %v663
        %v702 = vpop.f32.mrf.mxu0
        %v703 = vadd.f32 %v657, %v702
        %v704 = vpop.f32.mrf.mxu0
        %v705 = vpop.f32.mrf.mxu0
        %v706 = vpop.f32.mrf.mxu0
        %707 = vdwg.mxu0
        %709 = vrot.lane.b32.xlu0 %v651, 96
        %v710 = vpop.permute.xlu0 %709
        %v712 = vsel %vm661, %v651, 0
        %v715 = vsel %vm661, %v710, 0
        %717 = vmatprep.subr.bf16.mxu0 0
        %718 = vmatpush1.bf16.xpose.msra.mxu0 0
        %719 = vmatprep.subr.bf16.mxu0 0
        %720 = vmatpush1.bf16.xpose.msra.mxu0 0
        %721 = vmatprep.subr.bf16.mxu0 0
        %722 = vmatpush1.bf16.xpose.msra.mxu0 0
        %723 = vmatprep.subr.bf16.mxu0 0
        %724 = vmatpush1.bf16.xpose.msra.mxu0 0
        %725 = vmatprep.subr.bf16.mxu0 0
        %726 = vmatpush1.bf16.xpose.msra.mxu0 0
        %727 = vmatprep.subr.bf16.mxu0 0
        %728 = vmatpush1.bf16.xpose.msra.mxu0 0
        %729 = vmatprep.subr.bf16.mxu0 0
        %730 = vmatpush1.bf16.xpose.msra.mxu0 0
        %731 = vmatprep.subr.bf16.mxu0 0
        %732 = vmatpush1.bf16.xpose.msra.mxu0 %v715
        %733 = vmatprep.subr.bf16.mxu0 0
        %734 = vmatpush2.bf16.xpose.msra.mxu0 0
        %735 = vmatprep.subr.bf16.mxu0 0
        %736 = vmatpush2.bf16.xpose.msra.mxu0 0
        %737 = vmatprep.subr.bf16.mxu0 0
        %738 = vmatpush2.bf16.xpose.msra.mxu0 0
        %739 = vmatprep.subr.bf16.mxu0 0
        %740 = vmatpush2.bf16.xpose.msra.mxu0 0
        %741 = vmatprep.subr.bf16.mxu0 0
        %742 = vmatpush2.bf16.xpose.msra.mxu0 0
        %743 = vmatprep.subr.bf16.mxu0 0
        %744 = vmatpush2.bf16.xpose.msra.mxu0 0
        %745 = vmatprep.subr.bf16.mxu0 0
        %746 = vmatpush2.bf16.xpose.msra.mxu0 0
        %747 = vmatprep.subr.bf16.mxu0 0
        %748 = vmatpush2.bf16.xpose.msra.mxu0 0
        %749 = vmatprep.mubr.bf16.mxu0 0
        %750 = vmatmul.mubr.bf16.gmra.mxu0 %v712
        %v751 = vpop.f32.mrf.mxu0
        %v752 = vadd.f32 %v657, %v751
        %v753 = vpop.f32.mrf.mxu0
        %v754 = vpop.f32.mrf.mxu0
        %v755 = vpop.f32.mrf.mxu0
        %756 = vdwg.mxu0
        %758 = vrot.lane.b32.xlu0 %v652, 96
        %v759 = vpop.permute.xlu0 %758
        %v761 = vsel %vm661, %v652, 0
        %v764 = vsel %vm661, %v759, 0
        %766 = vmatprep.subr.bf16.mxu0 0
        %767 = vmatpush1.bf16.xpose.msra.mxu0 0
        %768 = vmatprep.subr.bf16.mxu0 0
        %769 = vmatpush1.bf16.xpose.msra.mxu0 0
        %770 = vmatprep.subr.bf16.mxu0 0
        %771 = vmatpush1.bf16.xpose.msra.mxu0 0
        %772 = vmatprep.subr.bf16.mxu0 0
        %773 = vmatpush1.bf16.xpose.msra.mxu0 0
        %774 = vmatprep.subr.bf16.mxu0 0
        %775 = vmatpush1.bf16.xpose.msra.mxu0 0
        %776 = vmatprep.subr.bf16.mxu0 0
        %777 = vmatpush1.bf16.xpose.msra.mxu0 0
        %778 = vmatprep.subr.bf16.mxu0 0
        %779 = vmatpush1.bf16.xpose.msra.mxu0 0
        %780 = vmatprep.subr.bf16.mxu0 0
        %781 = vmatpush1.bf16.xpose.msra.mxu0 %v764
        %782 = vmatprep.subr.bf16.mxu0 0
        %783 = vmatpush2.bf16.xpose.msra.mxu0 0
        %784 = vmatprep.subr.bf16.mxu0 0
        %785 = vmatpush2.bf16.xpose.msra.mxu0 0
        %786 = vmatprep.subr.bf16.mxu0 0
        %787 = vmatpush2.bf16.xpose.msra.mxu0 0
        %788 = vmatprep.subr.bf16.mxu0 0
        %789 = vmatpush2.bf16.xpose.msra.mxu0 0
        %790 = vmatprep.subr.bf16.mxu0 0
        %791 = vmatpush2.bf16.xpose.msra.mxu0 0
        %792 = vmatprep.subr.bf16.mxu0 0
        %793 = vmatpush2.bf16.xpose.msra.mxu0 0
        %794 = vmatprep.subr.bf16.mxu0 0
        %795 = vmatpush2.bf16.xpose.msra.mxu0 0
        %796 = vmatprep.subr.bf16.mxu0 0
        %797 = vmatpush2.bf16.xpose.msra.mxu0 0
        %798 = vmatprep.mubr.bf16.mxu0 0
        %799 = vmatmul.mubr.bf16.gmra.mxu0 %v761
        %v800 = vpop.f32.mrf.mxu0
        %v801 = vadd.f32 %v657, %v800
        %v802 = vpop.f32.mrf.mxu0
        %v803 = vpop.f32.mrf.mxu0
        %v804 = vpop.f32.mrf.mxu0
        %805 = vdwg.mxu0
        %807 = vrot.lane.b32.xlu0 %v653, 96
        %v808 = vpop.permute.xlu0 %807
        %v810 = vsel %vm661, %v653, 0
        %v813 = vsel %vm661, %v808, 0
        %815 = vmatprep.subr.bf16.mxu0 0
        %816 = vmatpush1.bf16.xpose.msra.mxu0 0
        %817 = vmatprep.subr.bf16.mxu0 0
        %818 = vmatpush1.bf16.xpose.msra.mxu0 0
        %819 = vmatprep.subr.bf16.mxu0 0
        %820 = vmatpush1.bf16.xpose.msra.mxu0 0
        %821 = vmatprep.subr.bf16.mxu0 0
        %822 = vmatpush1.bf16.xpose.msra.mxu0 0
        %823 = vmatprep.subr.bf16.mxu0 0
        %824 = vmatpush1.bf16.xpose.msra.mxu0 0
        %825 = vmatprep.subr.bf16.mxu0 0
        %826 = vmatpush1.bf16.xpose.msra.mxu0 0
        %827 = vmatprep.subr.bf16.mxu0 0
        %828 = vmatpush1.bf16.xpose.msra.mxu0 0
        %829 = vmatprep.subr.bf16.mxu0 0
        %830 = vmatpush1.bf16.xpose.msra.mxu0 %v813
        %831 = vmatprep.subr.bf16.mxu0 0
        %832 = vmatpush2.bf16.xpose.msra.mxu0 0
        %833 = vmatprep.subr.bf16.mxu0 0
        %834 = vmatpush2.bf16.xpose.msra.mxu0 0
        %835 = vmatprep.subr.bf16.mxu0 0
        %836 = vmatpush2.bf16.xpose.msra.mxu0 0
        %837 = vmatprep.subr.bf16.mxu0 0
        %838 = vmatpush2.bf16.xpose.msra.mxu0 0
        %839 = vmatprep.subr.bf16.mxu0 0
        %840 = vmatpush2.bf16.xpose.msra.mxu0 0
        %841 = vmatprep.subr.bf16.mxu0 0
        %842 = vmatpush2.bf16.xpose.msra.mxu0 0
        %843 = vmatprep.subr.bf16.mxu0 0
        %844 = vmatpush2.bf16.xpose.msra.mxu0 0
        %845 = vmatprep.subr.bf16.mxu0 0
        %846 = vmatpush2.bf16.xpose.msra.mxu0 0
        %847 = vmatprep.mubr.bf16.mxu0 0
        %848 = vmatmul.mubr.bf16.gmra.mxu0 %v810
        %v849 = vpop.f32.mrf.mxu0
        %v850 = vadd.f32 %v657, %v849
        %v851 = vpop.f32.mrf.mxu0
        %v852 = vpop.f32.mrf.mxu0
        %v853 = vpop.f32.mrf.mxu0
        %854 = vdwg.mxu0
        %v855 = vsel %vm661, %v703, -inf
        %856 = vmax.xlane.f32.xlu0 %v855
        %v857 = vpop.xlane.xlu0 %856
        %v858 = vsel %vm661, %v752, -inf
        %859 = vmax.xlane.f32.xlu0 %v858
        %v860 = vpop.xlane.xlu0 %859
        %v861 = vsel %vm661, %v801, -inf
        %862 = vmax.xlane.f32.xlu0 %v861
        %v863 = vpop.xlane.xlu0 %862
        %v864 = vsel %vm661, %v850, -inf
        %865 = vmax.xlane.f32.xlu0 %v864
        %v866 = vpop.xlane.xlu0 %865
        %v867 = vsub.f32 %v703, %v857
        %v868 = vsub.f32 %v752, %v860
        %v869 = vsub.f32 %v801, %v863
        %v870 = vsub.f32 %v850, %v866
        %v871 = vmul.f32 %v867, 1.442695
        %v872 = vpow.pop %v871
        %v873 = vmul.f32 %v868, 1.442695
        %v874 = vpow.pop %v873
        %v875 = vmul.f32 %v869, 1.442695
        %v876 = vpow.pop %v875
        %v877 = vmul.f32 %v870, 1.442695
        %v878 = vpow.pop %v877
        %v879 = vsel %vm661, %v872, 0.0
        %880 = vadd.xlane.f32.xlu0 %v879
        %v881 = vpop.xlane.xlu0 %880
        %v882 = vsel %vm661, %v874, 0.0
        %883 = vadd.xlane.f32.xlu0 %v882
        %v884 = vpop.xlane.xlu0 %883
        %v885 = vsel %vm661, %v876, 0.0
        %886 = vadd.xlane.f32.xlu0 %v885
        %v887 = vpop.xlane.xlu0 %886
        %v888 = vsel %vm661, %v878, 0.0
        %889 = vadd.xlane.f32.xlu0 %v888
        %v890 = vpop.xlane.xlu0 %889
        %v891 = vrcp.pop %v881
        %v892 = vrcp.pop %v884
        %v893 = vrcp.pop %v887
        %v894 = vrcp.pop %v890
        %v895 = vmul.f32 %v872, %v891
        %v896 = vmul.f32 %v874, %v892
        %v897 = vmul.f32 %v876, %v893
        %v898 = vmul.f32 %v878, %v894
        %v899 = vpack.c.bf16 %v895, %v895
        %v900 = vpack.c.bf16 %v896, %v896
        %v901 = vpack.c.bf16 %v897, %v897
        %v902 = vpack.c.bf16 %v898, %v898
        %903 = vrot.lane.b32.xlu0 %v650, 64
        %v904 = vpop.permute.xlu0 %903
        %v906 = vsel %vm661, %v899, 0
        %vm908 = vcmask 1043456
        %v910 = vsel %vm908, %v904, 0
        %912 = vmatprep.subr.bf16.mxu0 0
        %913 = vmatpush1.bf16.msra.mxu0 0
        %914 = vmatprep.subr.bf16.mxu0 0
        %915 = vmatpush1.bf16.msra.mxu0 0
        %916 = vmatprep.subr.bf16.mxu0 0
        %917 = vmatpush1.bf16.msra.mxu0 0
        %918 = vmatprep.subr.bf16.mxu0 0
        %919 = vmatpush1.bf16.msra.mxu0 0
        %920 = vmatprep.subr.bf16.mxu0 0
        %921 = vmatpush1.bf16.msra.mxu0 0
        %922 = vmatprep.subr.bf16.mxu0 0
        %923 = vmatpush1.bf16.msra.mxu0 0
        %924 = vmatprep.subr.bf16.mxu0 0
        %925 = vmatpush1.bf16.msra.mxu0 0
        %926 = vmatprep.subr.bf16.mxu0 0
        %927 = vmatpush1.bf16.msra.mxu0 %v910
        %928 = vmatprep.subr.bf16.mxu0 0
        %929 = vmatpush2.bf16.msra.mxu0 0
        %930 = vmatprep.subr.bf16.mxu0 0
        %931 = vmatpush2.bf16.msra.mxu0 0
        %932 = vmatprep.subr.bf16.mxu0 0
        %933 = vmatpush2.bf16.msra.mxu0 0
        %934 = vmatprep.subr.bf16.mxu0 0
        %935 = vmatpush2.bf16.msra.mxu0 0
        %936 = vmatprep.subr.bf16.mxu0 0
        %937 = vmatpush2.bf16.msra.mxu0 0
        %938 = vmatprep.subr.bf16.mxu0 0
        %939 = vmatpush2.bf16.msra.mxu0 0
        %940 = vmatprep.subr.bf16.mxu0 0
        %941 = vmatpush2.bf16.msra.mxu0 0
        %942 = vmatprep.subr.bf16.mxu0 0
        %943 = vmatpush2.bf16.msra.mxu0 0
        %944 = vmatprep.mubr.bf16.mxu0 0
        %945 = vmatmul.mubr.bf16.gmra.mxu0 %v906
        %v946 = vpop.f32.mrf.mxu0
        %v947 = vadd.f32 0.0, %v946
        %v948 = vpop.f32.mrf.mxu0
        %v949 = vpop.f32.mrf.mxu0
        %v950 = vpop.f32.mrf.mxu0
        %951 = vdwg.mxu0
        %952 = vrot.lane.b32.xlu0 %v651, 64
        %v953 = vpop.permute.xlu0 %952
        %v955 = vsel %vm661, %v900, 0
        %v958 = vsel %vm908, %v953, 0
        %960 = vmatprep.subr.bf16.mxu0 0
        %961 = vmatpush1.bf16.msra.mxu0 0
        %962 = vmatprep.subr.bf16.mxu0 0
        %963 = vmatpush1.bf16.msra.mxu0 0
        %964 = vmatprep.subr.bf16.mxu0 0
        %965 = vmatpush1.bf16.msra.mxu0 0
        %966 = vmatprep.subr.bf16.mxu0 0
        %967 = vmatpush1.bf16.msra.mxu0 0
        %968 = vmatprep.subr.bf16.mxu0 0
        %969 = vmatpush1.bf16.msra.mxu0 0
        %970 = vmatprep.subr.bf16.mxu0 0
        %971 = vmatpush1.bf16.msra.mxu0 0
        %972 = vmatprep.subr.bf16.mxu0 0
        %973 = vmatpush1.bf16.msra.mxu0 0
        %974 = vmatprep.subr.bf16.mxu0 0
        %975 = vmatpush1.bf16.msra.mxu0 %v958
        %976 = vmatprep.subr.bf16.mxu0 0
        %977 = vmatpush2.bf16.msra.mxu0 0
        %978 = vmatprep.subr.bf16.mxu0 0
        %979 = vmatpush2.bf16.msra.mxu0 0
        %980 = vmatprep.subr.bf16.mxu0 0
        %981 = vmatpush2.bf16.msra.mxu0 0
        %982 = vmatprep.subr.bf16.mxu0 0
        %983 = vmatpush2.bf16.msra.mxu0 0
        %984 = vmatprep.subr.bf16.mxu0 0
        %985 = vmatpush2.bf16.msra.mxu0 0
        %986 = vmatprep.subr.bf16.mxu0 0
        %987 = vmatpush2.bf16.msra.mxu0 0
        %988 = vmatprep.subr.bf16.mxu0 0
        %989 = vmatpush2.bf16.msra.mxu0 0
        %990 = vmatprep.subr.bf16.mxu0 0
        %991 = vmatpush2.bf16.msra.mxu0 0
        %992 = vmatprep.mubr.bf16.mxu0 0
        %993 = vmatmul.mubr.bf16.gmra.mxu0 %v955
        %v994 = vpop.f32.mrf.mxu0
        %v995 = vadd.f32 0.0, %v994
        %v996 = vpop.f32.mrf.mxu0
        %v997 = vpop.f32.mrf.mxu0
        %v998 = vpop.f32.mrf.mxu0
        %999 = vdwg.mxu0
        %1000 = vrot.lane.b32.xlu0 %v652, 64
        %v1001 = vpop.permute.xlu0 %1000
        %v1003 = vsel %vm661, %v901, 0
        %v1006 = vsel %vm908, %v1001, 0
        %1008 = vmatprep.subr.bf16.mxu0 0
        %1009 = vmatpush1.bf16.msra.mxu0 0
        %1010 = vmatprep.subr.bf16.mxu0 0
        %1011 = vmatpush1.bf16.msra.mxu0 0
        %1012 = vmatprep.subr.bf16.mxu0 0
        %1013 = vmatpush1.bf16.msra.mxu0 0
        %1014 = vmatprep.subr.bf16.mxu0 0
        %1015 = vmatpush1.bf16.msra.mxu0 0
        %1016 = vmatprep.subr.bf16.mxu0 0
        %1017 = vmatpush1.bf16.msra.mxu0 0
        %1018 = vmatprep.subr.bf16.mxu0 0
        %1019 = vmatpush1.bf16.msra.mxu0 0
        %1020 = vmatprep.subr.bf16.mxu0 0
        %1021 = vmatpush1.bf16.msra.mxu0 0
        %1022 = vmatprep.subr.bf16.mxu0 0
        %1023 = vmatpush1.bf16.msra.mxu0 %v1006
        %1024 = vmatprep.subr.bf16.mxu0 0
        %1025 = vmatpush2.bf16.msra.mxu0 0
        %1026 = vmatprep.subr.bf16.mxu0 0
        %1027 = vmatpush2.bf16.msra.mxu0 0
        %1028 = vmatprep.subr.bf16.mxu0 0
        %1029 = vmatpush2.bf16.msra.mxu0 0
        %1030 = vmatprep.subr.bf16.mxu0 0
        %1031 = vmatpush2.bf16.msra.mxu0 0
        %1032 = vmatprep.subr.bf16.mxu0 0
        %1033 = vmatpush2.bf16.msra.mxu0 0
        %1034 = vmatprep.subr.bf16.mxu0 0
        %1035 = vmatpush2.bf16.msra.mxu0 0
        %1036 = vmatprep.subr.bf16.mxu0 0
        %1037 = vmatpush2.bf16.msra.mxu0 0
        %1038 = vmatprep.subr.bf16.mxu0 0
        %1039 = vmatpush2.bf16.msra.mxu0 0
        %1040 = vmatprep.mubr.bf16.mxu0 0
        %1041 = vmatmul.mubr.bf16.gmra.mxu0 %v1003
        %v1042 = vpop.f32.mrf.mxu0
        %v1043 = vadd.f32 0.0, %v1042
        %v1044 = vpop.f32.mrf.mxu0
        %v1045 = vpop.f32.mrf.mxu0
        %v1046 = vpop.f32.mrf.mxu0
        %1047 = vdwg.mxu0
        %1048 = vrot.lane.b32.xlu0 %v653, 64
        %v1049 = vpop.permute.xlu0 %1048
        %v1051 = vsel %vm661, %v902, 0
        %v1054 = vsel %vm908, %v1049, 0
        %1056 = vmatprep.subr.bf16.mxu0 0
        %1057 = vmatpush1.bf16.msra.mxu0 0
        %1058 = vmatprep.subr.bf16.mxu0 0
        %1059 = vmatpush1.bf16.msra.mxu0 0
        %1060 = vmatprep.subr.bf16.mxu0 0
        %1061 = vmatpush1.bf16.msra.mxu0 0
        %1062 = vmatprep.subr.bf16.mxu0 0
        %1063 = vmatpush1.bf16.msra.mxu0 0
        %1064 = vmatprep.subr.bf16.mxu0 0
        %1065 = vmatpush1.bf16.msra.mxu0 0
        %1066 = vmatprep.subr.bf16.mxu0 0
        %1067 = vmatpush1.bf16.msra.mxu0 0
        %1068 = vmatprep.subr.bf16.mxu0 0
        %1069 = vmatpush1.bf16.msra.mxu0 0
        %1070 = vmatprep.subr.bf16.mxu0 0
        %1071 = vmatpush1.bf16.msra.mxu0 %v1054
        %1072 = vmatprep.subr.bf16.mxu0 0
        %1073 = vmatpush2.bf16.msra.mxu0 0
        %1074 = vmatprep.subr.bf16.mxu0 0
        %1075 = vmatpush2.bf16.msra.mxu0 0
        %1076 = vmatprep.subr.bf16.mxu0 0
        %1077 = vmatpush2.bf16.msra.mxu0 0
        %1078 = vmatprep.subr.bf16.mxu0 0
        %1079 = vmatpush2.bf16.msra.mxu0 0
        %1080 = vmatprep.subr.bf16.mxu0 0
        %1081 = vmatpush2.bf16.msra.mxu0 0
        %1082 = vmatprep.subr.bf16.mxu0 0
        %1083 = vmatpush2.bf16.msra.mxu0 0
        %1084 = vmatprep.subr.bf16.mxu0 0
        %1085 = vmatpush2.bf16.msra.mxu0 0
        %1086 = vmatprep.subr.bf16.mxu0 0
        %1087 = vmatpush2.bf16.msra.mxu0 0
        %1088 = vmatprep.mubr.bf16.mxu0 0
        %1089 = vmatmul.mubr.bf16.gmra.mxu0 %v1051
        %v1090 = vpop.f32.mrf.mxu0
        %v1091 = vadd.f32 0.0, %v1090
        %v1092 = vpop.f32.mrf.mxu0
        %v1093 = vpop.f32.mrf.mxu0
        %v1094 = vpop.f32.mrf.mxu0
        %1095 = vdwg.mxu0
        %1097 = vrot.lane.b32.xlu0 %v995, 8
        %v1098 = vpop.permute.xlu0 %1097
        %1101 = vrot.lane.b32.xlu0 %v1043, 16
        %v1102 = vpop.permute.xlu0 %1101
        %1105 = vrot.lane.b32.xlu0 %v1091, 24
        %v1106 = vpop.permute.xlu0 %1105
        %v1108 = vsel %vm661, %v947, %v1098
        %vm1109 = vcmask 130048
        %v1110 = vsel %vm1109, %v1108, %v1102
        %vm1111 = vcmask 195584
        %v1112 = vsel %vm1111, %v1110, %v1106
        %v1113 = vpack.c.bf16 %v1112, %v1112
        %v1114 = vld [vmem:[%s6] sm:$0xf]
        %v1115 = vld [vmem:[%s6 + $0x4] sm:$0xf]
        %v1116 = vld [vmem:[%s6 + $0x8] sm:$0xf]
        %v1117 = vld [vmem:[%s6 + $0xc] sm:$0xf]
        %v1118 = vld [vmem:[#allocation7] sm:$0x1]
        %v1120 = vlaneseq
        %v1121 = vshrl.u32 %v1120, 7
        %v1122 = vsub.s32 0, %v1121
        %v1123 = vrot.slane %v1118, %v1122
        %v1129 = vunpack.c.l.b16 %v1114
        %v1130 = vunpack.c.l.b16 %v1115
        %v1131 = vunpack.c.l.b16 %v1116
        %v1132 = vunpack.c.l.b16 %v1117
        %v1133 = vpack.c.b16 %v1130, %v1129
        %v1134 = vpack.c.b16 %v1132, %v1131
        %v1138 = vsel %vm544, %v1113, 0
        %1140 = vmatprep.subr.bf16.mxu0 0
        %1141 = vmatpush1.bf16.msra.mxu0 0
        %1142 = vmatprep.subr.bf16.mxu0 0
        %1143 = vmatpush1.bf16.msra.mxu0 0
        %1144 = vmatprep.subr.bf16.mxu0 0
        %1145 = vmatpush1.bf16.msra.mxu0 0
        %1146 = vmatprep.subr.bf16.mxu0 0
        %1147 = vmatpush1.bf16.msra.mxu0 0
        %1148 = vmatprep.subr.bf16.mxu0 0
        %1149 = vmatpush1.bf16.msra.mxu0 0
        %1150 = vmatprep.subr.bf16.mxu0 0
        %1151 = vmatpush1.bf16.msra.mxu0 0
        %1152 = vmatprep.subr.bf16.mxu0 0
        %1153 = vmatpush1.bf16.msra.mxu0 %v1134
        %1154 = vmatprep.subr.bf16.mxu0 0
        %1155 = vmatpush1.bf16.msra.mxu0 %v1133
        %1156 = vmatprep.subr.bf16.mxu0 0
        %1157 = vmatpush2.bf16.msra.mxu0 0
        %1158 = vmatprep.subr.bf16.mxu0 0
        %1159 = vmatpush2.bf16.msra.mxu0 0
        %1160 = vmatprep.subr.bf16.mxu0 0
        %1161 = vmatpush2.bf16.msra.mxu0 0
        %1162 = vmatprep.subr.bf16.mxu0 0
        %1163 = vmatpush2.bf16.msra.mxu0 0
        %1164 = vmatprep.subr.bf16.mxu0 0
        %1165 = vmatpush2.bf16.msra.mxu0 0
        %1166 = vmatprep.subr.bf16.mxu0 0
        %1167 = vmatpush2.bf16.msra.mxu0 0
        %1168 = vmatprep.subr.bf16.mxu0 0
        %1169 = vmatpush2.bf16.msra.mxu0 0
        %1170 = vmatprep.subr.bf16.mxu0 0
        %1171 = vmatpush2.bf16.msra.mxu0 0
        %1172 = vmatprep.mubr.bf16.mxu0 0
        %1173 = vmatmul.mubr.bf16.gmra.mxu0 %v1138
        %v1174 = vpop.f32.mrf.mxu0
        %v1175 = vadd.f32 %v1123, %v1174
        %v1176 = vpop.f32.mrf.mxu0
        %v1177 = vpop.f32.mrf.mxu0
        %v1178 = vpop.f32.mrf.mxu0
        %1179 = vdwg.mxu0
        %v1180 = vadd.f32 %v529, %v1175
        %v1181 = vld [vmem:[#allocation8] sm:$0x1]
        %v1182 = vld [vmem:[%s9] sm:$0x1]
        %v1183 = vsel %vm544, %v1180, 0.0
        %1184 = vadd.xlane.f32.xlu0 %v1183
        %v1185 = vpop.xlane.xlu0 %1184
        %v1186 = vmul.f32 %v1185, %v548
        %v1187 = vsub.f32 %v1180, %v1186
        %v1188 = vmul.f32 %v1187, %v1187
        %v1189 = vsel %vm544, %v1188, 0.0
        %1190 = vadd.xlane.f32.xlu0 %v1189
        %v1191 = vpop.xlane.xlu0 %1190
        %v1192 = vmul.f32 %v1191, %v548
        %v1193 = vadd.f32 %v1192, 1e-05
        %v1194 = vrsqrt.pop %v1193
        %v1195 = vmul.f32 %v1187, %v1194
        %v1197 = vlaneseq
        %v1198 = vshrl.u32 %v1197, 7
        %v1199 = vsub.s32 0, %v1198
        %v1200 = vrot.slane %v1181, %v1199
        %v1202 = vmul.f32 %v1195, %v1200
        %v1204 = vlaneseq
        %v1205 = vshrl.u32 %v1204, 7
        %v1206 = vsub.s32 0, %v1205
        %v1207 = vrot.slane %v1182, %v1206
        %v1209 = vadd.f32 %v1202, %v1207
        %v1210 = vpack.c.bf16 %v1209, %v1209
        %v1211 = vld [vmem:[%s10] sm:$0xf]
        %v1212 = vld [vmem:[%s10 + $0x4] sm:$0xf]
        %v1213 = vld [vmem:[%s10 + $0x8] sm:$0xf]
        %v1214 = vld [vmem:[%s10 + $0xc] sm:$0xf]
        %v1215 = vld [vmem:[%s11] sm:$0x1]
        %v1217 = vlaneseq
        %v1218 = vshrl.u32 %v1217, 7
        %v1219 = vsub.s32 0, %v1218
        %v1220 = vrot.slane %v1215, %v1219
        %v1226 = vunpack.c.l.b16 %v1211
        %v1227 = vunpack.c.l.b16 %v1212
        %v1228 = vunpack.c.l.b16 %v1213
        %v1229 = vunpack.c.l.b16 %v1214
        %v1230 = vpack.c.b16 %v1227, %v1226
        %v1231 = vpack.c.b16 %v1229, %v1228
        %v1235 = vsel %vm544, %v1210, 0
        %1237 = vmatprep.subr.bf16.mxu0 0
        %1238 = vmatpush1.bf16.msra.mxu0 0
        %1239 = vmatprep.subr.bf16.mxu0 0
        %1240 = vmatpush1.bf16.msra.mxu0 0
        %1241 = vmatprep.subr.bf16.mxu0 0
        %1242 = vmatpush1.bf16.msra.mxu0 0
        %1243 = vmatprep.subr.bf16.mxu0 0
        %1244 = vmatpush1.bf16.msra.mxu0 0
        %1245 = vmatprep.subr.bf16.mxu0 0
        %1246 = vmatpush1.bf16.msra.mxu0 0
        %1247 = vmatprep.subr.bf16.mxu0 0
        %1248 = vmatpush1.bf16.msra.mxu0 0
        %1249 = vmatprep.subr.bf16.mxu0 0
        %1250 = vmatpush1.bf16.msra.mxu0 %v1231
        %1251 = vmatprep.subr.bf16.mxu0 0
        %1252 = vmatpush1.bf16.msra.mxu0 %v1230
        %1253 = vmatprep.subr.bf16.mxu0 0
        %1254 = vmatpush2.bf16.msra.mxu0 0
        %1255 = vmatprep.subr.bf16.mxu0 0
        %1256 = vmatpush2.bf16.msra.mxu0 0
        %1257 = vmatprep.subr.bf16.mxu0 0
        %1258 = vmatpush2.bf16.msra.mxu0 0
        %1259 = vmatprep.subr.bf16.mxu0 0
        %1260 = vmatpush2.bf16.msra.mxu0 0
        %1261 = vmatprep.subr.bf16.mxu0 0
        %1262 = vmatpush2.bf16.msra.mxu0 0
        %1263 = vmatprep.subr.bf16.mxu0 0
        %1264 = vmatpush2.bf16.msra.mxu0 0
        %1265 = vmatprep.subr.bf16.mxu0 0
        %1266 = vmatpush2.bf16.msra.mxu0 0
        %1267 = vmatprep.subr.bf16.mxu0 0
        %1268 = vmatpush2.bf16.msra.mxu0 0
        %1269 = vmatprep.mubr.bf16.mxu0 0
        %1270 = vmatmul.mubr.bf16.gmra.mxu0 %v1235
        %v1271 = vpop.f32.mrf.mxu0
        %v1272 = vadd.f32 %v1220, %v1271
        %v1273 = vpop.f32.mrf.mxu0
        %v1274 = vpop.f32.mrf.mxu0
        %v1275 = vpop.f32.mrf.mxu0
        %1276 = vdwg.mxu0
        %v1277 = vmax.f32 %v1272, 0.0
        %v1278 = vpack.c.bf16 %v1277, %v1277
        %v1279 = vld [vmem:[%s12] sm:$0xf]
        %v1280 = vld [vmem:[%s12 + $0x4] sm:$0xf]
        %v1281 = vld [vmem:[%s12 + $0x8] sm:$0xf]
        %v1282 = vld [vmem:[%s12 + $0xc] sm:$0xf]
        %v1283 = vld [vmem:[%s12 + $0x10] sm:$0xf]
        %v1284 = vld [vmem:[%s12 + $0x14] sm:$0xf]
        %v1285 = vld [vmem:[%s12 + $0x18] sm:$0xf]
        %v1286 = vld [vmem:[%s12 + $0x1c] sm:$0xf]
        %v1287 = vld [vmem:[%s13] sm:$0x1]
        %v1289 = vlaneseq
        %v1290 = vshrl.u32 %v1289, 7
        %v1291 = vsub.s32 0, %v1290
        %v1292 = vrot.slane %v1287, %v1291
        %v1302 = vunpack.c.l.b16 %v1279
        %v1303 = vunpack.c.l.b16 %v1280
        %v1304 = vunpack.c.l.b16 %v1281
        %v1305 = vunpack.c.l.b16 %v1282
        %v1306 = vunpack.c.l.b16 %v1283
        %v1307 = vunpack.c.l.b16 %v1284
        %v1308 = vunpack.c.l.b16 %v1285
        %v1309 = vunpack.c.l.b16 %v1286
        %v1310 = vpack.c.b16 %v1303, %v1302
        %v1311 = vpack.c.b16 %v1305, %v1304
        %v1312 = vpack.c.b16 %v1307, %v1306
        %v1313 = vpack.c.b16 %v1309, %v1308
        %vm1318 = vcmask 523264
        %v1320 = vsel %vm1318, %v1278, 0
        %1322 = vmatprep.subr.bf16.mxu0 0
        %1323 = vmatpush1.bf16.msra.mxu0 0
        %1324 = vmatprep.subr.bf16.mxu0 0
        %1325 = vmatpush1.bf16.msra.mxu0 0
        %1326 = vmatprep.subr.bf16.mxu0 0
        %1327 = vmatpush1.bf16.msra.mxu0 0
        %1328 = vmatprep.subr.bf16.mxu0 0
        %1329 = vmatpush1.bf16.msra.mxu0 0
        %1330 = vmatprep.subr.bf16.mxu0 0
        %1331 = vmatpush1.bf16.msra.mxu0 %v1313
        %1332 = vmatprep.subr.bf16.mxu0 0
        %1333 = vmatpush1.bf16.msra.mxu0 %v1312
        %1334 = vmatprep.subr.bf16.mxu0 0
        %1335 = vmatpush1.bf16.msra.mxu0 %v1311
        %1336 = vmatprep.subr.bf16.mxu0 0
        %1337 = vmatpush1.bf16.msra.mxu0 %v1310
        %1338 = vmatprep.subr.bf16.mxu0 0
        %1339 = vmatpush2.bf16.msra.mxu0 0
        %1340 = vmatprep.subr.bf16.mxu0 0
        %1341 = vmatpush2.bf16.msra.mxu0 0
        %1342 = vmatprep.subr.bf16.mxu0 0
        %1343 = vmatpush2.bf16.msra.mxu0 0
        %1344 = vmatprep.subr.bf16.mxu0 0
        %1345 = vmatpush2.bf16.msra.mxu0 0
        %1346 = vmatprep.subr.bf16.mxu0 0
        %1347 = vmatpush2.bf16.msra.mxu0 0
        %1348 = vmatprep.subr.bf16.mxu0 0
        %1349 = vmatpush2.bf16.msra.mxu0 0
        %1350 = vmatprep.subr.bf16.mxu0 0
        %1351 = vmatpush2.bf16.msra.mxu0 0
        %1352 = vmatprep.subr.bf16.mxu0 0
        %1353 = vmatpush2.bf16.msra.mxu0 0
        %1354 = vmatprep.mubr.bf16.mxu0 0
        %1355 = vmatmul.mubr.bf16.gmra.mxu0 %v1320
        %v1356 = vpop.f32.mrf.mxu0
        %v1357 = vadd.f32 %v1292, %v1356
        %v1358 = vpop.f32.mrf.mxu0
        %v1359 = vpop.f32.mrf.mxu0
        %v1360 = vpop.f32.mrf.mxu0
        %1361 = vdwg.mxu0
        %v1362 = vadd.f32 %v1180, %v1357
        %1363 = vst.msk [vmem:[%s520] sm:$0xff] %vm544, %v1362
        %s1364 = sand.u32 %s343, 1
        %s1365 = scalar_lea.sflag [#allocation4], %s1364
        %s1366 = sand.u32 %s343, 1
        %s1367 = smul.addr %s1366, 8
        %s1368 = scalar_lea.vmem [#allocation10], %s1367
        // Predicated region
        $region93: #{tpu_custom_call.1} parent=75 // pred_check
          %p1369 = pneg %p353
        $region94: #{tpu_custom_call.1} parent=75 // pred_check_branch
          %1371 = sbr.rel (%p1369) target = $region96
        $region95: #{tpu_custom_call.1} parent=75 // pred_region
          %s1373 = ssub.s32 128, 128
          %1374 = vsyncadd %s1365, %s1373
          %s1375 = smul.addr %s31, 128
          %s1376 = scalar_lea.hbm %s14, %s1375
          %s1378 = sshll.u32 %s1368, 4
          %s1379 = int_to_ptr.vmem [resolvable:$true] %s1378
          %1381 = dma.vmem_to_hbm [thread:$0]  %s1379, 128, %s1376, %s1365
        $region96: #{tpu_custom_call.1} parent=75 // pred_fallthru
          _
      $region76: #{tpu_custom_call.1} parent=5 // pred_fallthru
        _
      %p1382 = scmp.le.s32.totalorder 2, %s26
      // Predicated region
      $region97: #{tpu_custom_call.1} parent=5 // pred_check
        %p1383 = pneg %p1382
      $region98: #{tpu_custom_call.1} parent=5 // pred_check_branch
        %1385 = sbr.rel (%p1383) target = $region100
      $region99: #{tpu_custom_call.1} parent=5 // pred_region
        %s1386 = ssub.s32 %s26, 2
        // Predicated region
        $region101: #{tpu_custom_call.1} parent=99 // pred_check
          %p1387 = pneg %p359
        $region102: #{tpu_custom_call.1} parent=99 // pred_check_branch
          %1389 = sbr.rel (%p1387) target = $region104
        $region103: #{tpu_custom_call.1} parent=99 // pred_region
          %s1390 = sand.u32 %s344, 1
          %s1391 = scalar_lea.sflag [#allocation4], %s1390
          %s1392 = sand.u32 %s344, 1
          %s1393 = smul.addr %s1392, 8
          %s1394 = scalar_lea.vmem [#allocation10], %s1393
          %1395 = dma.done %s1391, 128
        $region104: #{tpu_custom_call.1} parent=99 // pred_fallthru
          _
      $region100: #{tpu_custom_call.1} parent=5 // pred_fallthru
        _
    $region6: #{tpu_custom_call.1} parent=1 // loop_footer
      %s30 = sadd.s32 1, %s26
    $region7: #{tpu_custom_call.1} parent=1 // loop_footer_branch
      %25 = sbr.rel target = $region3
    $region8: #{tpu_custom_call.1} parent=1 // loop_exit
      _
    %1396 = vsyncpa [#allocation3], 1
    %s1397 = scalar_lea.sflag [#allocation3], 1
    %1398 = vsyncpa %s1397, 1
    %1399 = vsyncpa [#allocation6], 1
    %1400 = vsyncpa [#allocation9], 1
    %1401 = vsyncpa [#allocation4], 1
    %s1402 = scalar_lea.sflag [#allocation4], 1
    %1403 = vsyncpa %s1402, 1

</llo_original>
